<compile_context>
chip_gen: v6e
topology: v6e:2x2x1
jax: 0.10.0
libtpu: 0.0.40
codegen_flags: <defaults>
</compile_context>

<pallas_src>
import functools

import jax
import jax.numpy as jnp
from jax.experimental import pallas as pl
from jax.experimental.pallas import tpu as pltpu


# -----------------------------------------------------------------------------
# TT-matrix parameter construction (glue, plain JAX)
# -----------------------------------------------------------------------------
def make_tt_cores(key, in_shape, out_shape, max_rank, dtype=jnp.float32):
    """Deterministically build TT-matrix cores (r_{k-1}, m_k, n_k, r_k)."""
    d = len(in_shape)
    ranks = [1] + [max_rank] * (d - 1) + [1]
    cores = []
    keys = jax.random.split(key, d)
    for k in range(d):
        shape = (ranks[k], in_shape[k], out_shape[k], ranks[k + 1])
        std = 1.0 / (in_shape[k] * max(1, ranks[k])) ** 0.5
        cores.append(std * jax.random.normal(keys[k], shape, dtype=dtype))
    return cores


def tt_to_dense(cores, in_shape, out_shape):
    """Contract TT-matrix cores into a dense (prod(in), prod(out)) matrix."""
    d = len(cores)
    res = cores[0][0]  # (m0, n0, r1)
    m_acc, n_acc = in_shape[0], out_shape[0]
    for k in range(1, d):
        core = cores[k]
        res = jnp.tensordot(res, core, axes=([-1], [0]))
        res = res.reshape(m_acc, n_acc, in_shape[k], out_shape[k], core.shape[-1])
        res = jnp.transpose(res, (0, 2, 1, 3, 4))
        m_acc *= in_shape[k]
        n_acc *= out_shape[k]
        res = res.reshape(m_acc, n_acc, core.shape[-1])
    return res.reshape(m_acc, n_acc)  # trailing rank is 1


# -----------------------------------------------------------------------------
# One-time weight preparation (outside the per-call forward)
# -----------------------------------------------------------------------------
NP_CLASSES = 128  # lane-dense padded class dim


def prepare_weights(w1, w2, num_classes=10):
    """Cast/pad weights once; returns (w1_bf16, w2_padded_bf16, class_mask)."""
    w1_b = w1.astype(jnp.bfloat16)                               # (784, 1024)
    w2_p = jnp.zeros((w2.shape[0], NP_CLASSES), jnp.bfloat16)
    w2_p = w2_p.at[:, :num_classes].set(w2.astype(jnp.bfloat16))  # (1024, 128)
    # Additive mask: 0 on real class lanes, -1e30 on padded lanes (load-bearing:
    # padded W2 columns produce logits == 0 otherwise).
    lane = jnp.arange(NP_CLASSES)
    mask = jnp.where(lane < num_classes, 0.0, -1e30).astype(jnp.float32)
    return w1_b, w2_p, mask.reshape(1, NP_CLASSES)


# -----------------------------------------------------------------------------
# Pallas kernel: fc1 -> relu -> (dropout=id, eval) -> fc2 -> log_softmax
#   x tile   : (TB, 784) f32   (cast to bf16 in-kernel)
#   W1       : (784, 1024) bf16 (VMEM-resident, constant index map)
#   W2       : (1024, 128) bf16 (VMEM-resident, class-lane padded)
#   mask     : (1, 128) f32 additive class mask (VMEM-resident)
#   out tile : (TB, 128) f32 lane-dense store
# -----------------------------------------------------------------------------
def ortho_tonn_kernel(x_ref, w1_ref, w2_ref, mask_ref, out_ref):
    x = x_ref[...].astype(w1_ref.dtype)                      # f32 -> bf16 cast (VPU)
    h = jnp.dot(x, w1_ref[...],
                preferred_element_type=jnp.float32)          # (TB, 1024) f32 (MXU)
    h = jnp.maximum(h, 0.0)                                  # ReLU in f32
    # TODO(synk): training-mode dropout (random mask) intentionally omitted;
    # eval-mode nn.Dropout is the identity.
    logits = jnp.dot(h.astype(w2_ref.dtype), w2_ref[...],
                     preferred_element_type=jnp.float32)     # (TB, 128) f32 (MXU)
    logits = logits + mask_ref[...]                          # broadcast add mask
    m = jnp.max(logits, axis=-1, keepdims=True)
    shifted = logits - m
    lse = jnp.log(jnp.sum(jnp.exp(shifted), axis=-1, keepdims=True))
    out_ref[...] = (shifted - lse).astype(out_ref.dtype)     # lane-dense store


@functools.partial(jax.jit, static_argnames=("num_classes", "block_b"))
def ortho_tonn_forward(x_nchw, w1_b, w2_p, class_mask, num_classes=10,
                       block_b=512):
    B = x_nchw.shape[0]
    x_flat = x_nchw.reshape(B, -1).astype(jnp.float32)        # torch.flatten(x, 1)
    K = x_flat.shape[1]                                       # 784 (= full dim)
    N1 = w1_b.shape[1]                                        # 1024
    Np = w2_p.shape[1]                                        # 128

    # Tile the batch: >= 2 grid steps when the batch allows (v7x megacore),
    # tiles rounded to a multiple of 16 (bf16 sublane packing).
    def round_up(a, m):
        return ((a + m - 1) // m) * m

    num_tiles = pl.cdiv(B, block_b)
    if num_tiles < 2 and B >= 32:
        num_tiles = 2
    TB = round_up(pl.cdiv(B, num_tiles), 16)
    Bp = TB * num_tiles

    if Bp == B:
        x_p = x_flat
    else:
        x_p = jnp.zeros((Bp, K), jnp.float32).at[:B, :].set(x_flat)

    out_padded = pl.pallas_call(
        ortho_tonn_kernel,
        out_shape=jax.ShapeDtypeStruct((Bp, Np), jnp.float32),
        grid_spec=pltpu.PrefetchScalarGridSpec(
            num_scalar_prefetch=0,
            grid=(num_tiles,),
            in_specs=[
                pl.BlockSpec((TB, K), lambda i: (i, 0)),      # x: batch-tiled f32
                pl.BlockSpec((K, N1), lambda i: (0, 0)),      # W1: VMEM-resident
                pl.BlockSpec((N1, Np), lambda i: (0, 0)),     # W2: VMEM-resident
                pl.BlockSpec((1, Np), lambda i: (0, 0)),      # class mask
            ],
            out_specs=pl.BlockSpec((TB, Np), lambda i: (i, 0)),
        ),
        compiler_params=pltpu.CompilerParams(
            dimension_semantics=("parallel",),                # megacore on v7x
            vmem_limit_bytes=32 << 20,                        # v7x-safe ceiling
        ),
    )(x_p, w1_b, w2_p, class_mask)

    return out_padded[:B, :num_classes]


# -----------------------------------------------------------------------------
# References for correctness checks
# -----------------------------------------------------------------------------
def ortho_tonn_ref_bf16(x_nchw, w1, w2):
    """Mirrors the kernel's bf16-input / f32-accumulate arithmetic."""
    x = x_nchw.reshape(x_nchw.shape[0], -1).astype(jnp.bfloat16)
    h = jnp.maximum(jnp.dot(x, w1.astype(jnp.bfloat16),
                            preferred_element_type=jnp.float32), 0.0)
    logits = jnp.dot(h.astype(jnp.bfloat16), w2.astype(jnp.bfloat16),
                     preferred_element_type=jnp.float32)
    return jax.nn.log_softmax(logits, axis=1)


def ortho_tonn_ref_f32(x_nchw, w1, w2):
    x = x_nchw.reshape(x_nchw.shape[0], -1)
    h = jnp.maximum(x @ w1, 0.0)
    logits = h @ w2
    return jax.nn.log_softmax(logits, axis=1)


if __name__ == "__main__":
    key = jax.random.PRNGKey(0)
    k_x, k_w1, k_w2 = jax.random.split(key, 3)

    # OrthoTONN module configuration
    shape1 = [[4, 7, 7, 4], [4, 8, 8, 4]]   # 784 -> 1024
    shape2 = [[4, 8, 8, 4], [1, 5, 2, 1]]   # 1024 -> 10
    max_rank = 8
    num_classes = 10

    # Deterministic TT-core parameters, reconstructed to dense weights (glue).
    cores1 = make_tt_cores(k_w1, shape1[0], shape1[1], max_rank)
    cores2 = make_tt_cores(k_w2, shape2[0], shape2[1], max_rank)
    w1 = tt_to_dense(cores1, shape1[0], shape1[1])   # (784, 1024)
    w2 = tt_to_dense(cores2, shape2[0], shape2[1])   # (1024, 10)

    # One-time weight prep (hoisted out of the per-call forward).
    w1_b, w2_p, class_mask = prepare_weights(w1, w2, num_classes)
    w1_b, w2_p, class_mask = jax.block_until_ready((w1_b, w2_p, class_mask))

    # Small MNIST-like input: batch=2, NCHW (1, 28, 28) so flatten gives 784.
    x = jax.random.normal(k_x, (2, 1, 28, 28), dtype=jnp.float32)

    out = ortho_tonn_forward(x, w1_b, w2_p, class_mask, num_classes=num_classes)
    out = jax.block_until_ready(out)

    assert out.shape == (2, 10), out.shape

    # Tight check against a reference mirroring the kernel's bf16/f32 math.
    ref_bf16 = ortho_tonn_ref_bf16(x, w1, w2)
    err_bf16 = float(jnp.max(jnp.abs(out - ref_bf16)))
    assert err_bf16 < 2e-3, err_bf16

    # Loose sanity check against the full-f32 semantics of the module.
    ref_f32 = ortho_tonn_ref_f32(x, w1, w2)
    err_f32 = float(jnp.max(jnp.abs(out - ref_f32)))
    assert err_f32 < 5e-2, err_f32

    print("KERNEL_OK")
</pallas_src>

<mosaic_0001>
module attributes {stable_mosaic.version = 11 : i64} {
  func.func @ortho_tonn_kernel(%arg0: i32, %arg1: memref<16x784xf32, #tpu.memory_space<vmem>>, %arg2: memref<784x1024xbf16, #tpu.memory_space<vmem>>, %arg3: memref<1024x128xbf16, #tpu.memory_space<vmem>>, %arg4: memref<1x128xf32, #tpu.memory_space<vmem>>, %arg5: memref<16x128xf32, #tpu.memory_space<vmem>>) attributes {dimension_semantics = [#tpu.dimension_semantics<parallel>], iteration_bounds = array<i64: 1>, scalar_prefetch = 0 : i64, scratch_operands = 0 : i64, tpu.core_type = #tpu.core_type<tc>, window_params = [{transform_indices = @transform_0, window_bounds = array<i64: 16, 784>}, {pipeline_mode = #tpu.pipeline_mode<synchronous>, transform_indices = @transform_1, window_bounds = array<i64: 784, 1024>}, {pipeline_mode = #tpu.pipeline_mode<synchronous>, transform_indices = @transform_2, window_bounds = array<i64: 1024, 128>}, {pipeline_mode = #tpu.pipeline_mode<synchronous>, transform_indices = @transform_3, window_bounds = array<i64: 1, 128>}, {transform_indices = @transform_4, window_bounds = array<i64: 16, 128>}]} {
    %c0 = arith.constant 0 : index
    %c0_0 = arith.constant 0 : index
    %0 = vector.load %arg1[%c0, %c0_0] : memref<16x784xf32, #tpu.memory_space<vmem>>, vector<16x784xf32>
    %1 = arith.truncf %0 : vector<16x784xf32> to vector<16x784xbf16>
    %c0_1 = arith.constant 0 : index
    %c0_2 = arith.constant 0 : index
    %2 = vector.load %arg2[%c0_1, %c0_2] : memref<784x1024xbf16, #tpu.memory_space<vmem>>, vector<784x1024xbf16>
    %cst = arith.constant dense<0.000000e+00> : vector<16x1024xf32>
    %3 = tpu.matmul %1, %2, %cst {dimension_numbers = #tpu.dot_dimension_numbers<[1], [0], [0], [1], [0, 0, 1, 1], [], []>} : vector<16x784xbf16>, vector<784x1024xbf16>, vector<16x1024xf32> -> vector<16x1024xf32>
    %cst_3 = arith.constant 0.000000e+00 : f32
    %4 = vector.broadcast %cst_3 : f32 to vector<16x1024xf32>
    %5 = arith.maximumf %3, %4 : vector<16x1024xf32>
    %6 = arith.truncf %5 : vector<16x1024xf32> to vector<16x1024xbf16>
    %c0_4 = arith.constant 0 : index
    %c0_5 = arith.constant 0 : index
    %7 = vector.load %arg3[%c0_4, %c0_5] : memref<1024x128xbf16, #tpu.memory_space<vmem>>, vector<1024x128xbf16>
    %cst_6 = arith.constant dense<0.000000e+00> : vector<16x128xf32>
    %8 = tpu.matmul %6, %7, %cst_6 {dimension_numbers = #tpu.dot_dimension_numbers<[1], [0], [0], [1], [0, 0, 1, 1], [], []>} : vector<16x1024xbf16>, vector<1024x128xbf16>, vector<16x128xf32> -> vector<16x128xf32>
    %c0_7 = arith.constant 0 : index
    %c0_8 = arith.constant 0 : index
    %9 = vector.load %arg4[%c0_7, %c0_8] : memref<1x128xf32, #tpu.memory_space<vmem>>, vector<1x128xf32>
    %10 = vector.broadcast %9 : vector<1x128xf32> to vector<16x128xf32>
    %11 = arith.addf %8, %10 : vector<16x128xf32>
    %cst_9 = arith.constant dense<0xFF800000> : vector<16xf32>
    %12 = vector.multi_reduction <maximumf>, %11, %cst_9 [1] : vector<16x128xf32> to vector<16xf32>
    %13 = vector.shape_cast %12 : vector<16xf32> to vector<16x1xf32>
    %14 = vector.broadcast %13 : vector<16x1xf32> to vector<16x128xf32>
    %15 = arith.subf %11, %14 : vector<16x128xf32>
    %16 = math.exp %15 : vector<16x128xf32>
    %cst_10 = arith.constant dense<0.000000e+00> : vector<16xf32>
    %17 = vector.multi_reduction <add>, %16, %cst_10 [1] : vector<16x128xf32> to vector<16xf32>
    %18 = vector.shape_cast %17 : vector<16xf32> to vector<16x1xf32>
    %19 = math.log %18 : vector<16x1xf32>
    %20 = vector.broadcast %19 : vector<16x1xf32> to vector<16x128xf32>
    %21 = arith.subf %15, %20 : vector<16x128xf32>
    %c0_11 = arith.constant 0 : index
    %c0_12 = arith.constant 0 : index
    %22 = vector.load %arg5[%c0_11, %c0_12] : memref<16x128xf32, #tpu.memory_space<vmem>>, vector<16x128xf32>
    tpu.vector_store %arg5[%c0_11, %c0_12], %21 {strides = array<i32>} : memref<16x128xf32, #tpu.memory_space<vmem>>, vector<16x128xf32>,
    return
  }
  func.func @transform_0(%arg0: i32) -> (i32, i32) {
    %c0_i32 = arith.constant 0 : i32
    %c0_i32_0 = arith.constant 0 : i32
    return %arg0, %c0_i32 : i32, i32
  }
  func.func @transform_1(%arg0: i32) -> (i32, i32) {
    %c0_i32 = arith.constant 0 : i32
    %c0_i32_0 = arith.constant 0 : i32
    %c0_i32_1 = arith.constant 0 : i32
    return %c0_i32, %c0_i32_0 : i32, i32
  }
  func.func @transform_2(%arg0: i32) -> (i32, i32) {
    %c0_i32 = arith.constant 0 : i32
    %c0_i32_0 = arith.constant 0 : i32
    %c0_i32_1 = arith.constant 0 : i32
    return %c0_i32, %c0_i32_0 : i32, i32
  }
  func.func @transform_3(%arg0: i32) -> (i32, i32) {
    %c0_i32 = arith.constant 0 : i32
    %c0_i32_0 = arith.constant 0 : i32
    %c0_i32_1 = arith.constant 0 : i32
    return %c0_i32, %c0_i32_0 : i32, i32
  }
  func.func @transform_4(%arg0: i32) -> (i32, i32) {
    %c0_i32 = arith.constant 0 : i32
    %c0_i32_0 = arith.constant 0 : i32
    return %arg0, %c0_i32 : i32, i32
  }
}

</mosaic_0001>

<llo_original>
// kernel: ortho_tonn_forward.1
$region0: #{ortho_tonn_forward.1}
  #allocation0 [shape = 'u32[]', space=smem, size = 0x4, offset = 0x4, fixed_abs, tag = 'smem constant byte address 0x4 - core index']
  #allocation1 [shape = 'u32[144,128]{1,0:T(1,128)}', space=vmem, size = 0x12000, scoped, tag = 'internal scratch']
  %s0 = inlined_call_operand.vmem [shape: f32[16,784], index: 0, kind: input, shape index: {}]
  %s1 = inlined_call_operand.hbm [shape: bf16[784,1024], index: 1, kind: input, shape index: {}]
  %s2 = inlined_call_operand.hbm [shape: bf16[1024,128], index: 2, kind: input, shape index: {}]
  %s3 = inlined_call_operand.hbm [shape: f32[1,128], index: 3, kind: input, shape index: {}]
  %s4 = inlined_call_operand.vmem [shape: f32[16,128], index: 4, kind: output, shape index: {}]
  %s5 = sld [smem:[#allocation0]]
  $region38: #{ortho_tonn_forward.1} parent=0
    _
  %s7 = ssub.s32 1, %s5
  %s8 = scalar_select 0, %s7, %s5
  $region1: #{ortho_tonn_forward.1} parent=0
    #allocation2 [shape = 'u8[1605632]{0}', space=vmem, size = 0x188000, scoped, tag = 'input window, operand 1, single buffered']
    #allocation3 [shape = 's32[1]{0}', space=sflag, size = 0x4, scoped, tag = 'scoped memory for ortho_tonn_forward.1']
    #allocation4 [shape = 'u8[262144]{0}', space=vmem, size = 0x40000, scoped, tag = 'input window, operand 2, single buffered']
    #allocation5 [shape = 's32[1]{0}', space=sflag, size = 0x4, scoped, tag = 'scoped memory for ortho_tonn_forward.1']
    #allocation6 [shape = 'u8[512]{0}', space=vmem, size = 0x400, scoped, tag = 'input window, operand 3, single buffered']
    %9 = vsyncpa [#allocation3], 0
    %10 = vsyncpa [#allocation5], 0
    // Predicated region
    $region2: #{ortho_tonn_forward.1} parent=1 // pred_check
      _
    $region3: #{ortho_tonn_forward.1} parent=1 // pred_check_branch
      %12 = sbr.rel (0) target = $region5
    $region4: #{ortho_tonn_forward.1} parent=1 // pred_region
      _
    $region5: #{ortho_tonn_forward.1} parent=1 // pred_fallthru
      _
    // Predicated region
    $region6: #{ortho_tonn_forward.1} parent=1 // pred_check
      _
    $region7: #{ortho_tonn_forward.1} parent=1 // pred_check_branch
      %14 = sbr.rel (0) target = $region9
    $region8: #{ortho_tonn_forward.1} parent=1 // pred_region
      %s16 = ssub.s32 50176, 50176
      %17 = vsyncadd [#allocation3], %s16
      %s18 = sshll.u32 [#allocation2], 4
      %s19 = int_to_ptr.vmem [resolvable:$true] %s18
      %24 = dma.hbm_to_vmem [thread:$0]  %s1, 50176, %s19, [#allocation3], 512, 512, 32
    $region9: #{ortho_tonn_forward.1} parent=1 // pred_fallthru
      _
    // Predicated region
    $region10: #{ortho_tonn_forward.1} parent=1 // pred_check
      _
    $region11: #{ortho_tonn_forward.1} parent=1 // pred_check_branch
      %26 = sbr.rel (0) target = $region13
    $region12: #{ortho_tonn_forward.1} parent=1 // pred_region
      %s28 = ssub.s32 8192, 8192
      %29 = vsyncadd [#allocation5], %s28
      %s30 = sshll.u32 [#allocation4], 4
      %s31 = int_to_ptr.vmem [resolvable:$true] %s30
      %36 = dma.hbm_to_vmem [thread:$0]  %s2, 8192, %s31, [#allocation5], 64, 64, 4
    $region13: #{ortho_tonn_forward.1} parent=1 // pred_fallthru
      _
    // Predicated region
    $region14: #{ortho_tonn_forward.1} parent=1 // pred_check
      _
    $region15: #{ortho_tonn_forward.1} parent=1 // pred_check_branch
      %38 = sbr.rel (0) target = $region17
    $region16: #{ortho_tonn_forward.1} parent=1 // pred_region
      %s40 = ssub.s32 16, 16
      %41 = vsyncadd [#allocation5], %s40
      %s43 = sshll.u32 [#allocation6], 4
      %s44 = int_to_ptr.vmem [resolvable:$true] %s43
      %46 = dma.hbm_to_vmem [thread:$0]  %s3, 16, %s44, [#allocation5]
    $region17: #{ortho_tonn_forward.1} parent=1 // pred_fallthru
      _
    // Predicated region
    $region18: #{ortho_tonn_forward.1} parent=1 // pred_check
      _
    $region19: #{ortho_tonn_forward.1} parent=1 // pred_check_branch
      %48 = sbr.rel (0) target = $region21
    $region20: #{ortho_tonn_forward.1} parent=1 // pred_region
      %49 = dma.done [#allocation3], 50176
    $region21: #{ortho_tonn_forward.1} parent=1 // pred_fallthru
      _
    // Predicated region
    $region22: #{ortho_tonn_forward.1} parent=1 // pred_check
      _
    $region23: #{ortho_tonn_forward.1} parent=1 // pred_check_branch
      %51 = sbr.rel (0) target = $region25
    $region24: #{ortho_tonn_forward.1} parent=1 // pred_region
      %52 = dma.done [#allocation5], 8192
    $region25: #{ortho_tonn_forward.1} parent=1 // pred_fallthru
      _
    // Predicated region
    $region26: #{ortho_tonn_forward.1} parent=1 // pred_check
      _
    $region27: #{ortho_tonn_forward.1} parent=1 // pred_check_branch
      %54 = sbr.rel (0) target = $region29
    $region28: #{ortho_tonn_forward.1} parent=1 // pred_region
      %55 = dma.done [#allocation5], 16
    $region29: #{ortho_tonn_forward.1} parent=1 // pred_fallthru
      _
    %v57 = vld [vmem:[%s0] sm:$0xff]
    %v58 = vld [vmem:[%s0 + $0x8] sm:$0xff]
    %v59 = vld [vmem:[%s0 + $0x10] sm:$0xff]
    %v60 = vld [vmem:[%s0 + $0x18] sm:$0xff]
    %v61 = vld [vmem:[%s0 + $0x20] sm:$0xff]
    %v62 = vld [vmem:[%s0 + $0x28] sm:$0xff]
    %v63 = vld [vmem:[%s0 + $0x30] sm:$0xff]
    %v64 = vld [vmem:[%s0 + $0x38] sm:$0xff]
    %v65 = vld [vmem:[%s0 + $0x40] sm:$0xff]
    %v66 = vld [vmem:[%s0 + $0x48] sm:$0xff]
    %v67 = vld [vmem:[%s0 + $0x50] sm:$0xff]
    %v68 = vld [vmem:[%s0 + $0x58] sm:$0xff]
    %v69 = vld [vmem:[%s0 + $0x60] sm:$0xff]
    %v70 = vld [vmem:[%s0 + $0x68] sm:$0xff]
    %v71 = vpack.c.bf16 %v64, %v57
    %v72 = vpack.c.bf16 %v65, %v58
    %v73 = vpack.c.bf16 %v66, %v59
    %v74 = vpack.c.bf16 %v67, %v60
    %v75 = vpack.c.bf16 %v68, %v61
    %v76 = vpack.c.bf16 %v69, %v62
    %v77 = vpack.c.bf16 %v70, %v63
    %v78 = vld [vmem:[#allocation2] sm:$0xff]
    %v79 = vld [vmem:[#allocation2 + $0x8] sm:$0xff]
    %v80 = vld [vmem:[#allocation2 + $0x10] sm:$0xff]
    %v81 = vld [vmem:[#allocation2 + $0x18] sm:$0xff]
    %v82 = vld [vmem:[#allocation2 + $0x20] sm:$0xff]
    %v83 = vld [vmem:[#allocation2 + $0x28] sm:$0xff]
    %v84 = vld [vmem:[#allocation2 + $0x30] sm:$0xff]
    %v85 = vld [vmem:[#allocation2 + $0x38] sm:$0xff]
    %v86 = vld [vmem:[#allocation2 + $0x40] sm:$0xff]
    %v87 = vld [vmem:[#allocation2 + $0x48] sm:$0xff]
    %v88 = vld [vmem:[#allocation2 + $0x50] sm:$0xff]
    %v89 = vld [vmem:[#allocation2 + $0x58] sm:$0xff]
    %v90 = vld [vmem:[#allocation2 + $0x60] sm:$0xff]
    %v91 = vld [vmem:[#allocation2 + $0x68] sm:$0xff]
    %v92 = vld [vmem:[#allocation2 + $0x70] sm:$0xff]
    %v93 = vld [vmem:[#allocation2 + $0x78] sm:$0xff]
    %v94 = vld [vmem:[#allocation2 + $0x80] sm:$0xff]
    %v95 = vld [vmem:[#allocation2 + $0x88] sm:$0xff]
    %v96 = vld [vmem:[#allocation2 + $0x90] sm:$0xff]
    %v97 = vld [vmem:[#allocation2 + $0x98] sm:$0xff]
    %v98 = vld [vmem:[#allocation2 + $0xa0] sm:$0xff]
    %v99 = vld [vmem:[#allocation2 + $0xa8] sm:$0xff]
    %v100 = vld [vmem:[#allocation2 + $0xb0] sm:$0xff]
    %v101 = vld [vmem:[#allocation2 + $0xb8] sm:$0xff]
    %v102 = vld [vmem:[#allocation2 + $0xc0] sm:$0xff]
    %v103 = vld [vmem:[#allocation2 + $0xc8] sm:$0xff]
    %v104 = vld [vmem:[#allocation2 + $0xd0] sm:$0xff]
    %v105 = vld [vmem:[#allocation2 + $0xd8] sm:$0xff]
    %v106 = vld [vmem:[#allocation2 + $0xe0] sm:$0xff]
    %v107 = vld [vmem:[#allocation2 + $0xe8] sm:$0xff]
    %v108 = vld [vmem:[#allocation2 + $0xf0] sm:$0xff]
    %v109 = vld [vmem:[#allocation2 + $0xf8] sm:$0xff]
    %v110 = vld [vmem:[#allocation2 + $0x100] sm:$0xff]
    %v111 = vld [vmem:[#allocation2 + $0x108] sm:$0xff]
    %v112 = vld [vmem:[#allocation2 + $0x110] sm:$0xff]
    %v113 = vld [vmem:[#allocation2 + $0x118] sm:$0xff]
    %v114 = vld [vmem:[#allocation2 + $0x120] sm:$0xff]
    %v115 = vld [vmem:[#allocation2 + $0x128] sm:$0xff]
    %v116 = vld [vmem:[#allocation2 + $0x130] sm:$0xff]
    %v117 = vld [vmem:[#allocation2 + $0x138] sm:$0xff]
    %v118 = vld [vmem:[#allocation2 + $0x140] sm:$0xff]
    %v119 = vld [vmem:[#allocation2 + $0x148] sm:$0xff]
    %v120 = vld [vmem:[#allocation2 + $0x150] sm:$0xff]
    %v121 = vld [vmem:[#allocation2 + $0x158] sm:$0xff]
    %v122 = vld [vmem:[#allocation2 + $0x160] sm:$0xff]
    %v123 = vld [vmem:[#allocation2 + $0x168] sm:$0xff]
    %v124 = vld [vmem:[#allocation2 + $0x170] sm:$0xff]
    %v125 = vld [vmem:[#allocation2 + $0x178] sm:$0xff]
    %v126 = vld [vmem:[#allocation2 + $0x180] sm:$0xff]
    %v127 = vld [vmem:[#allocation2 + $0x188] sm:$0xff]
    %v128 = vld [vmem:[#allocation2 + $0x190] sm:$0xff]
    %v129 = vld [vmem:[#allocation2 + $0x198] sm:$0xff]
    %v130 = vld [vmem:[#allocation2 + $0x1a0] sm:$0xff]
    %v131 = vld [vmem:[#allocation2 + $0x1a8] sm:$0xff]
    %v132 = vld [vmem:[#allocation2 + $0x1b0] sm:$0xff]
    %v133 = vld [vmem:[#allocation2 + $0x1b8] sm:$0xff]
    %v134 = vld [vmem:[#allocation2 + $0x1c0] sm:$0xff]
    %v135 = vld [vmem:[#allocation2 + $0x1c8] sm:$0xff]
    %v136 = vld [vmem:[#allocation2 + $0x1d0] sm:$0xff]
    %v137 = vld [vmem:[#allocation2 + $0x1d8] sm:$0xff]
    %v138 = vld [vmem:[#allocation2 + $0x1e0] sm:$0xff]
    %v139 = vld [vmem:[#allocation2 + $0x1e8] sm:$0xff]
    %v140 = vld [vmem:[#allocation2 + $0x1f0] sm:$0xff]
    %v141 = vld [vmem:[#allocation2 + $0x1f8] sm:$0xff]
    %v142 = vld [vmem:[#allocation2 + $0x200] sm:$0xff]
    %v143 = vld [vmem:[#allocation2 + $0x208] sm:$0xff]
    %v144 = vld [vmem:[#allocation2 + $0x210] sm:$0xff]
    %v145 = vld [vmem:[#allocation2 + $0x218] sm:$0xff]
    %v146 = vld [vmem:[#allocation2 + $0x220] sm:$0xff]
    %v147 = vld [vmem:[#allocation2 + $0x228] sm:$0xff]
    %v148 = vld [vmem:[#allocation2 + $0x230] sm:$0xff]
    %v149 = vld [vmem:[#allocation2 + $0x238] sm:$0xff]
    %v150 = vld [vmem:[#allocation2 + $0x240] sm:$0xff]
    %v151 = vld [vmem:[#allocation2 + $0x248] sm:$0xff]
    %v152 = vld [vmem:[#allocation2 + $0x250] sm:$0xff]
    %v153 = vld [vmem:[#allocation2 + $0x258] sm:$0xff]
    %v154 = vld [vmem:[#allocation2 + $0x260] sm:$0xff]
    %v155 = vld [vmem:[#allocation2 + $0x268] sm:$0xff]
    %v156 = vld [vmem:[#allocation2 + $0x270] sm:$0xff]
    %v157 = vld [vmem:[#allocation2 + $0x278] sm:$0xff]
    %v158 = vld [vmem:[#allocation2 + $0x280] sm:$0xff]
    %v159 = vld [vmem:[#allocation2 + $0x288] sm:$0xff]
    %v160 = vld [vmem:[#allocation2 + $0x290] sm:$0xff]
    %v161 = vld [vmem:[#allocation2 + $0x298] sm:$0xff]
    %v162 = vld [vmem:[#allocation2 + $0x2a0] sm:$0xff]
    %v163 = vld [vmem:[#allocation2 + $0x2a8] sm:$0xff]
    %v164 = vld [vmem:[#allocation2 + $0x2b0] sm:$0xff]
    %v165 = vld [vmem:[#allocation2 + $0x2b8] sm:$0xff]
    %v166 = vld [vmem:[#allocation2 + $0x2c0] sm:$0xff]
    %v167 = vld [vmem:[#allocation2 + $0x2c8] sm:$0xff]
    %v168 = vld [vmem:[#allocation2 + $0x2d0] sm:$0xff]
    %v169 = vld [vmem:[#allocation2 + $0x2d8] sm:$0xff]
    %v170 = vld [vmem:[#allocation2 + $0x2e0] sm:$0xff]
    %v171 = vld [vmem:[#allocation2 + $0x2e8] sm:$0xff]
    %v172 = vld [vmem:[#allocation2 + $0x2f0] sm:$0xff]
    %v173 = vld [vmem:[#allocation2 + $0x2f8] sm:$0xff]
    %v174 = vld [vmem:[#allocation2 + $0x300] sm:$0xff]
    %v175 = vld [vmem:[#allocation2 + $0x308] sm:$0xff]
    %v176 = vld [vmem:[#allocation2 + $0x310] sm:$0xff]
    %v177 = vld [vmem:[#allocation2 + $0x318] sm:$0xff]
    %v178 = vld [vmem:[#allocation2 + $0x320] sm:$0xff]
    %v179 = vld [vmem:[#allocation2 + $0x328] sm:$0xff]
    %v180 = vld [vmem:[#allocation2 + $0x330] sm:$0xff]
    %v181 = vld [vmem:[#allocation2 + $0x338] sm:$0xff]
    %v182 = vld [vmem:[#allocation2 + $0x340] sm:$0xff]
    %v183 = vld [vmem:[#allocation2 + $0x348] sm:$0xff]
    %v184 = vld [vmem:[#allocation2 + $0x350] sm:$0xff]
    %v185 = vld [vmem:[#allocation2 + $0x358] sm:$0xff]
    %v186 = vld [vmem:[#allocation2 + $0x360] sm:$0xff]
    %v187 = vld [vmem:[#allocation2 + $0x368] sm:$0xff]
    %v188 = vld [vmem:[#allocation2 + $0x370] sm:$0xff]
    %v189 = vld [vmem:[#allocation2 + $0x378] sm:$0xff]
    %v190 = vld [vmem:[#allocation2 + $0x380] sm:$0xff]
    %v191 = vld [vmem:[#allocation2 + $0x388] sm:$0xff]
    %v192 = vld [vmem:[#allocation2 + $0x390] sm:$0xff]
    %v193 = vld [vmem:[#allocation2 + $0x398] sm:$0xff]
    %v194 = vld [vmem:[#allocation2 + $0x3a0] sm:$0xff]
    %v195 = vld [vmem:[#allocation2 + $0x3a8] sm:$0xff]
    %v196 = vld [vmem:[#allocation2 + $0x3b0] sm:$0xff]
    %v197 = vld [vmem:[#allocation2 + $0x3b8] sm:$0xff]
    %v198 = vld [vmem:[#allocation2 + $0x3c0] sm:$0xff]
    %v199 = vld [vmem:[#allocation2 + $0x3c8] sm:$0xff]
    %v200 = vld [vmem:[#allocation2 + $0x3d0] sm:$0xff]
    %v201 = vld [vmem:[#allocation2 + $0x3d8] sm:$0xff]
    %v202 = vld [vmem:[#allocation2 + $0x3e0] sm:$0xff]
    %v203 = vld [vmem:[#allocation2 + $0x3e8] sm:$0xff]
    %v204 = vld [vmem:[#allocation2 + $0x3f0] sm:$0xff]
    %v205 = vld [vmem:[#allocation2 + $0x3f8] sm:$0xff]
    %v206 = vld [vmem:[#allocation2 + $0x400] sm:$0xff]
    %v207 = vld [vmem:[#allocation2 + $0x408] sm:$0xff]
    %v208 = vld [vmem:[#allocation2 + $0x410] sm:$0xff]
    %v209 = vld [vmem:[#allocation2 + $0x418] sm:$0xff]
    %v210 = vld [vmem:[#allocation2 + $0x420] sm:$0xff]
    %v211 = vld [vmem:[#allocation2 + $0x428] sm:$0xff]
    %v212 = vld [vmem:[#allocation2 + $0x430] sm:$0xff]
    %v213 = vld [vmem:[#allocation2 + $0x438] sm:$0xff]
    %v214 = vld [vmem:[#allocation2 + $0x440] sm:$0xff]
    %v215 = vld [vmem:[#allocation2 + $0x448] sm:$0xff]
    %v216 = vld [vmem:[#allocation2 + $0x450] sm:$0xff]
    %v217 = vld [vmem:[#allocation2 + $0x458] sm:$0xff]
    %v218 = vld [vmem:[#allocation2 + $0x460] sm:$0xff]
    %v219 = vld [vmem:[#allocation2 + $0x468] sm:$0xff]
    %v220 = vld [vmem:[#allocation2 + $0x470] sm:$0xff]
    %v221 = vld [vmem:[#allocation2 + $0x478] sm:$0xff]
    %v222 = vld [vmem:[#allocation2 + $0x480] sm:$0xff]
    %v223 = vld [vmem:[#allocation2 + $0x488] sm:$0xff]
    %v224 = vld [vmem:[#allocation2 + $0x490] sm:$0xff]
    %v225 = vld [vmem:[#allocation2 + $0x498] sm:$0xff]
    %v226 = vld [vmem:[#allocation2 + $0x4a0] sm:$0xff]
    %v227 = vld [vmem:[#allocation2 + $0x4a8] sm:$0xff]
    %v228 = vld [vmem:[#allocation2 + $0x4b0] sm:$0xff]
    %v229 = vld [vmem:[#allocation2 + $0x4b8] sm:$0xff]
    %v230 = vld [vmem:[#allocation2 + $0x4c0] sm:$0xff]
    %v231 = vld [vmem:[#allocation2 + $0x4c8] sm:$0xff]
    %v232 = vld [vmem:[#allocation2 + $0x4d0] sm:$0xff]
    %v233 = vld [vmem:[#allocation2 + $0x4d8] sm:$0xff]
    %v234 = vld [vmem:[#allocation2 + $0x4e0] sm:$0xff]
    %v235 = vld [vmem:[#allocation2 + $0x4e8] sm:$0xff]
    %v236 = vld [vmem:[#allocation2 + $0x4f0] sm:$0xff]
    %v237 = vld [vmem:[#allocation2 + $0x4f8] sm:$0xff]
    %v238 = vld [vmem:[#allocation2 + $0x500] sm:$0xff]
    %v239 = vld [vmem:[#allocation2 + $0x508] sm:$0xff]
    %v240 = vld [vmem:[#allocation2 + $0x510] sm:$0xff]
    %v241 = vld [vmem:[#allocation2 + $0x518] sm:$0xff]
    %v242 = vld [vmem:[#allocation2 + $0x520] sm:$0xff]
    %v243 = vld [vmem:[#allocation2 + $0x528] sm:$0xff]
    %v244 = vld [vmem:[#allocation2 + $0x530] sm:$0xff]
    %v245 = vld [vmem:[#allocation2 + $0x538] sm:$0xff]
    %v246 = vld [vmem:[#allocation2 + $0x540] sm:$0xff]
    %v247 = vld [vmem:[#allocation2 + $0x548] sm:$0xff]
    %v248 = vld [vmem:[#allocation2 + $0x550] sm:$0xff]
    %v249 = vld [vmem:[#allocation2 + $0x558] sm:$0xff]
    %v250 = vld [vmem:[#allocation2 + $0x560] sm:$0xff]
    %v251 = vld [vmem:[#allocation2 + $0x568] sm:$0xff]
    %v252 = vld [vmem:[#allocation2 + $0x570] sm:$0xff]
    %v253 = vld [vmem:[#allocation2 + $0x578] sm:$0xff]
    %v254 = vld [vmem:[#allocation2 + $0x580] sm:$0xff]
    %v255 = vld [vmem:[#allocation2 + $0x588] sm:$0xff]
    %v256 = vld [vmem:[#allocation2 + $0x590] sm:$0xff]
    %v257 = vld [vmem:[#allocation2 + $0x598] sm:$0xff]
    %v258 = vld [vmem:[#allocation2 + $0x5a0] sm:$0xff]
    %v259 = vld [vmem:[#allocation2 + $0x5a8] sm:$0xff]
    %v260 = vld [vmem:[#allocation2 + $0x5b0] sm:$0xff]
    %v261 = vld [vmem:[#allocation2 + $0x5b8] sm:$0xff]
    %v262 = vld [vmem:[#allocation2 + $0x5c0] sm:$0xff]
    %v263 = vld [vmem:[#allocation2 + $0x5c8] sm:$0xff]
    %v264 = vld [vmem:[#allocation2 + $0x5d0] sm:$0xff]
    %v265 = vld [vmem:[#allocation2 + $0x5d8] sm:$0xff]
    %v266 = vld [vmem:[#allocation2 + $0x5e0] sm:$0xff]
    %v267 = vld [vmem:[#allocation2 + $0x5e8] sm:$0xff]
    %v268 = vld [vmem:[#allocation2 + $0x5f0] sm:$0xff]
    %v269 = vld [vmem:[#allocation2 + $0x5f8] sm:$0xff]
    %v270 = vld [vmem:[#allocation2 + $0x600] sm:$0xff]
    %v271 = vld [vmem:[#allocation2 + $0x608] sm:$0xff]
    %v272 = vld [vmem:[#allocation2 + $0x610] sm:$0xff]
    %v273 = vld [vmem:[#allocation2 + $0x618] sm:$0xff]
    %v274 = vld [vmem:[#allocation2 + $0x620] sm:$0xff]
    %v275 = vld [vmem:[#allocation2 + $0x628] sm:$0xff]
    %v276 = vld [vmem:[#allocation2 + $0x630] sm:$0xff]
    %v277 = vld [vmem:[#allocation2 + $0x638] sm:$0xff]
    %v278 = vld [vmem:[#allocation2 + $0x640] sm:$0xff]
    %v279 = vld [vmem:[#allocation2 + $0x648] sm:$0xff]
    %v280 = vld [vmem:[#allocation2 + $0x650] sm:$0xff]
    %v281 = vld [vmem:[#allocation2 + $0x658] sm:$0xff]
    %v282 = vld [vmem:[#allocation2 + $0x660] sm:$0xff]
    %v283 = vld [vmem:[#allocation2 + $0x668] sm:$0xff]
    %v284 = vld [vmem:[#allocation2 + $0x670] sm:$0xff]
    %v285 = vld [vmem:[#allocation2 + $0x678] sm:$0xff]
    %v286 = vld [vmem:[#allocation2 + $0x680] sm:$0xff]
    %v287 = vld [vmem:[#allocation2 + $0x688] sm:$0xff]
    %v288 = vld [vmem:[#allocation2 + $0x690] sm:$0xff]
    %v289 = vld [vmem:[#allocation2 + $0x698] sm:$0xff]
    %v290 = vld [vmem:[#allocation2 + $0x6a0] sm:$0xff]
    %v291 = vld [vmem:[#allocation2 + $0x6a8] sm:$0xff]
    %v292 = vld [vmem:[#allocation2 + $0x6b0] sm:$0xff]
    %v293 = vld [vmem:[#allocation2 + $0x6b8] sm:$0xff]
    %v294 = vld [vmem:[#allocation2 + $0x6c0] sm:$0xff]
    %v295 = vld [vmem:[#allocation2 + $0x6c8] sm:$0xff]
    %v296 = vld [vmem:[#allocation2 + $0x6d0] sm:$0xff]
    %v297 = vld [vmem:[#allocation2 + $0x6d8] sm:$0xff]
    %v298 = vld [vmem:[#allocation2 + $0x6e0] sm:$0xff]
    %v299 = vld [vmem:[#allocation2 + $0x6e8] sm:$0xff]
    %v300 = vld [vmem:[#allocation2 + $0x6f0] sm:$0xff]
    %v301 = vld [vmem:[#allocation2 + $0x6f8] sm:$0xff]
    %v302 = vld [vmem:[#allocation2 + $0x700] sm:$0xff]
    %v303 = vld [vmem:[#allocation2 + $0x708] sm:$0xff]
    %v304 = vld [vmem:[#allocation2 + $0x710] sm:$0xff]
    %v305 = vld [vmem:[#allocation2 + $0x718] sm:$0xff]
    %v306 = vld [vmem:[#allocation2 + $0x720] sm:$0xff]
    %v307 = vld [vmem:[#allocation2 + $0x728] sm:$0xff]
    %v308 = vld [vmem:[#allocation2 + $0x730] sm:$0xff]
    %v309 = vld [vmem:[#allocation2 + $0x738] sm:$0xff]
    %v310 = vld [vmem:[#allocation2 + $0x740] sm:$0xff]
    %v311 = vld [vmem:[#allocation2 + $0x748] sm:$0xff]
    %v312 = vld [vmem:[#allocation2 + $0x750] sm:$0xff]
    %v313 = vld [vmem:[#allocation2 + $0x758] sm:$0xff]
    %v314 = vld [vmem:[#allocation2 + $0x760] sm:$0xff]
    %v315 = vld [vmem:[#allocation2 + $0x768] sm:$0xff]
    %v316 = vld [vmem:[#allocation2 + $0x770] sm:$0xff]
    %v317 = vld [vmem:[#allocation2 + $0x778] sm:$0xff]
    %v318 = vld [vmem:[#allocation2 + $0x780] sm:$0xff]
    %v319 = vld [vmem:[#allocation2 + $0x788] sm:$0xff]
    %v320 = vld [vmem:[#allocation2 + $0x790] sm:$0xff]
    %v321 = vld [vmem:[#allocation2 + $0x798] sm:$0xff]
    %v322 = vld [vmem:[#allocation2 + $0x7a0] sm:$0xff]
    %v323 = vld [vmem:[#allocation2 + $0x7a8] sm:$0xff]
    %v324 = vld [vmem:[#allocation2 + $0x7b0] sm:$0xff]
    %v325 = vld [vmem:[#allocation2 + $0x7b8] sm:$0xff]
    %v326 = vld [vmem:[#allocation2 + $0x7c0] sm:$0xff]
    %v327 = vld [vmem:[#allocation2 + $0x7c8] sm:$0xff]
    %v328 = vld [vmem:[#allocation2 + $0x7d0] sm:$0xff]
    %v329 = vld [vmem:[#allocation2 + $0x7d8] sm:$0xff]
    %v330 = vld [vmem:[#allocation2 + $0x7e0] sm:$0xff]
    %v331 = vld [vmem:[#allocation2 + $0x7e8] sm:$0xff]
    %v332 = vld [vmem:[#allocation2 + $0x7f0] sm:$0xff]
    %v333 = vld [vmem:[#allocation2 + $0x7f8] sm:$0xff]
    %v334 = vld [vmem:[#allocation2 + $0x800] sm:$0xff]
    %v335 = vld [vmem:[#allocation2 + $0x808] sm:$0xff]
    %v336 = vld [vmem:[#allocation2 + $0x810] sm:$0xff]
    %v337 = vld [vmem:[#allocation2 + $0x818] sm:$0xff]
    %v338 = vld [vmem:[#allocation2 + $0x820] sm:$0xff]
    %v339 = vld [vmem:[#allocation2 + $0x828] sm:$0xff]
    %v340 = vld [vmem:[#allocation2 + $0x830] sm:$0xff]
    %v341 = vld [vmem:[#allocation2 + $0x838] sm:$0xff]
    %v342 = vld [vmem:[#allocation2 + $0x840] sm:$0xff]
    %v343 = vld [vmem:[#allocation2 + $0x848] sm:$0xff]
    %v344 = vld [vmem:[#allocation2 + $0x850] sm:$0xff]
    %v345 = vld [vmem:[#allocation2 + $0x858] sm:$0xff]
    %v346 = vld [vmem:[#allocation2 + $0x860] sm:$0xff]
    %v347 = vld [vmem:[#allocation2 + $0x868] sm:$0xff]
    %v348 = vld [vmem:[#allocation2 + $0x870] sm:$0xff]
    %v349 = vld [vmem:[#allocation2 + $0x878] sm:$0xff]
    %v350 = vld [vmem:[#allocation2 + $0x880] sm:$0xff]
    %v351 = vld [vmem:[#allocation2 + $0x888] sm:$0xff]
    %v352 = vld [vmem:[#allocation2 + $0x890] sm:$0xff]
    %v353 = vld [vmem:[#allocation2 + $0x898] sm:$0xff]
    %v354 = vld [vmem:[#allocation2 + $0x8a0] sm:$0xff]
    %v355 = vld [vmem:[#allocation2 + $0x8a8] sm:$0xff]
    %v356 = vld [vmem:[#allocation2 + $0x8b0] sm:$0xff]
    %v357 = vld [vmem:[#allocation2 + $0x8b8] sm:$0xff]
    %v358 = vld [vmem:[#allocation2 + $0x8c0] sm:$0xff]
    %v359 = vld [vmem:[#allocation2 + $0x8c8] sm:$0xff]
    %v360 = vld [vmem:[#allocation2 + $0x8d0] sm:$0xff]
    %v361 = vld [vmem:[#allocation2 + $0x8d8] sm:$0xff]
    %v362 = vld [vmem:[#allocation2 + $0x8e0] sm:$0xff]
    %v363 = vld [vmem:[#allocation2 + $0x8e8] sm:$0xff]
    %v364 = vld [vmem:[#allocation2 + $0x8f0] sm:$0xff]
    %v365 = vld [vmem:[#allocation2 + $0x8f8] sm:$0xff]
    %v366 = vld [vmem:[#allocation2 + $0x900] sm:$0xff]
    %v367 = vld [vmem:[#allocation2 + $0x908] sm:$0xff]
    %v368 = vld [vmem:[#allocation2 + $0x910] sm:$0xff]
    %v369 = vld [vmem:[#allocation2 + $0x918] sm:$0xff]
    %v370 = vld [vmem:[#allocation2 + $0x920] sm:$0xff]
    %v371 = vld [vmem:[#allocation2 + $0x928] sm:$0xff]
    %v372 = vld [vmem:[#allocation2 + $0x930] sm:$0xff]
    %v373 = vld [vmem:[#allocation2 + $0x938] sm:$0xff]
    %v374 = vld [vmem:[#allocation2 + $0x940] sm:$0xff]
    %v375 = vld [vmem:[#allocation2 + $0x948] sm:$0xff]
    %v376 = vld [vmem:[#allocation2 + $0x950] sm:$0xff]
    %v377 = vld [vmem:[#allocation2 + $0x958] sm:$0xff]
    %v378 = vld [vmem:[#allocation2 + $0x960] sm:$0xff]
    %v379 = vld [vmem:[#allocation2 + $0x968] sm:$0xff]
    %v380 = vld [vmem:[#allocation2 + $0x970] sm:$0xff]
    %v381 = vld [vmem:[#allocation2 + $0x978] sm:$0xff]
    %v382 = vld [vmem:[#allocation2 + $0x980] sm:$0xff]
    %v383 = vld [vmem:[#allocation2 + $0x988] sm:$0xff]
    %v384 = vld [vmem:[#allocation2 + $0x990] sm:$0xff]
    %v385 = vld [vmem:[#allocation2 + $0x998] sm:$0xff]
    %v386 = vld [vmem:[#allocation2 + $0x9a0] sm:$0xff]
    %v387 = vld [vmem:[#allocation2 + $0x9a8] sm:$0xff]
    %v388 = vld [vmem:[#allocation2 + $0x9b0] sm:$0xff]
    %v389 = vld [vmem:[#allocation2 + $0x9b8] sm:$0xff]
    %v390 = vld [vmem:[#allocation2 + $0x9c0] sm:$0xff]
    %v391 = vld [vmem:[#allocation2 + $0x9c8] sm:$0xff]
    %v392 = vld [vmem:[#allocation2 + $0x9d0] sm:$0xff]
    %v393 = vld [vmem:[#allocation2 + $0x9d8] sm:$0xff]
    %v394 = vld [vmem:[#allocation2 + $0x9e0] sm:$0xff]
    %v395 = vld [vmem:[#allocation2 + $0x9e8] sm:$0xff]
    %v396 = vld [vmem:[#allocation2 + $0x9f0] sm:$0xff]
    %v397 = vld [vmem:[#allocation2 + $0x9f8] sm:$0xff]
    %v398 = vld [vmem:[#allocation2 + $0xa00] sm:$0xff]
    %v399 = vld [vmem:[#allocation2 + $0xa08] sm:$0xff]
    %v400 = vld [vmem:[#allocation2 + $0xa10] sm:$0xff]
    %v401 = vld [vmem:[#allocation2 + $0xa18] sm:$0xff]
    %v402 = vld [vmem:[#allocation2 + $0xa20] sm:$0xff]
    %v403 = vld [vmem:[#allocation2 + $0xa28] sm:$0xff]
    %v404 = vld [vmem:[#allocation2 + $0xa30] sm:$0xff]
    %v405 = vld [vmem:[#allocation2 + $0xa38] sm:$0xff]
    %v406 = vld [vmem:[#allocation2 + $0xa40] sm:$0xff]
    %v407 = vld [vmem:[#allocation2 + $0xa48] sm:$0xff]
    %v408 = vld [vmem:[#allocation2 + $0xa50] sm:$0xff]
    %v409 = vld [vmem:[#allocation2 + $0xa58] sm:$0xff]
    %v410 = vld [vmem:[#allocation2 + $0xa60] sm:$0xff]
    %v411 = vld [vmem:[#allocation2 + $0xa68] sm:$0xff]
    %v412 = vld [vmem:[#allocation2 + $0xa70] sm:$0xff]
    %v413 = vld [vmem:[#allocation2 + $0xa78] sm:$0xff]
    %v414 = vld [vmem:[#allocation2 + $0xa80] sm:$0xff]
    %v415 = vld [vmem:[#allocation2 + $0xa88] sm:$0xff]
    %v416 = vld [vmem:[#allocation2 + $0xa90] sm:$0xff]
    %v417 = vld [vmem:[#allocation2 + $0xa98] sm:$0xff]
    %v418 = vld [vmem:[#allocation2 + $0xaa0] sm:$0xff]
    %v419 = vld [vmem:[#allocation2 + $0xaa8] sm:$0xff]
    %v420 = vld [vmem:[#allocation2 + $0xab0] sm:$0xff]
    %v421 = vld [vmem:[#allocation2 + $0xab8] sm:$0xff]
    %v422 = vld [vmem:[#allocation2 + $0xac0] sm:$0xff]
    %v423 = vld [vmem:[#allocation2 + $0xac8] sm:$0xff]
    %v424 = vld [vmem:[#allocation2 + $0xad0] sm:$0xff]
    %v425 = vld [vmem:[#allocation2 + $0xad8] sm:$0xff]
    %v426 = vld [vmem:[#allocation2 + $0xae0] sm:$0xff]
    %v427 = vld [vmem:[#allocation2 + $0xae8] sm:$0xff]
    %v428 = vld [vmem:[#allocation2 + $0xaf0] sm:$0xff]
    %v429 = vld [vmem:[#allocation2 + $0xaf8] sm:$0xff]
    %v430 = vld [vmem:[#allocation2 + $0xb00] sm:$0xff]
    %v431 = vld [vmem:[#allocation2 + $0xb08] sm:$0xff]
    %v432 = vld [vmem:[#allocation2 + $0xb10] sm:$0xff]
    %v433 = vld [vmem:[#allocation2 + $0xb18] sm:$0xff]
    %v434 = vld [vmem:[#allocation2 + $0xb20] sm:$0xff]
    %v435 = vld [vmem:[#allocation2 + $0xb28] sm:$0xff]
    %v436 = vld [vmem:[#allocation2 + $0xb30] sm:$0xff]
    %v437 = vld [vmem:[#allocation2 + $0xb38] sm:$0xff]
    %v438 = vld [vmem:[#allocation2 + $0xb40] sm:$0xff]
    %v439 = vld [vmem:[#allocation2 + $0xb48] sm:$0xff]
    %v440 = vld [vmem:[#allocation2 + $0xb50] sm:$0xff]
    %v441 = vld [vmem:[#allocation2 + $0xb58] sm:$0xff]
    %v442 = vld [vmem:[#allocation2 + $0xb60] sm:$0xff]
    %v443 = vld [vmem:[#allocation2 + $0xb68] sm:$0xff]
    %v444 = vld [vmem:[#allocation2 + $0xb70] sm:$0xff]
    %v445 = vld [vmem:[#allocation2 + $0xb78] sm:$0xff]
    %v446 = vld [vmem:[#allocation2 + $0xb80] sm:$0xff]
    %v447 = vld [vmem:[#allocation2 + $0xb88] sm:$0xff]
    %v448 = vld [vmem:[#allocation2 + $0xb90] sm:$0xff]
    %v449 = vld [vmem:[#allocation2 + $0xb98] sm:$0xff]
    %v450 = vld [vmem:[#allocation2 + $0xba0] sm:$0xff]
    %v451 = vld [vmem:[#allocation2 + $0xba8] sm:$0xff]
    %v452 = vld [vmem:[#allocation2 + $0xbb0] sm:$0xff]
    %v453 = vld [vmem:[#allocation2 + $0xbb8] sm:$0xff]
    %v454 = vld [vmem:[#allocation2 + $0xbc0] sm:$0xff]
    %v455 = vld [vmem:[#allocation2 + $0xbc8] sm:$0xff]
    %v456 = vld [vmem:[#allocation2 + $0xbd0] sm:$0xff]
    %v457 = vld [vmem:[#allocation2 + $0xbd8] sm:$0xff]
    %v458 = vld [vmem:[#allocation2 + $0xbe0] sm:$0xff]
    %v459 = vld [vmem:[#allocation2 + $0xbe8] sm:$0xff]
    %v460 = vld [vmem:[#allocation2 + $0xbf0] sm:$0xff]
    %v461 = vld [vmem:[#allocation2 + $0xbf8] sm:$0xff]
    %v462 = vld [vmem:[#allocation2 + $0xc00] sm:$0xff]
    %v463 = vld [vmem:[#allocation2 + $0xc08] sm:$0xff]
    %v464 = vld [vmem:[#allocation2 + $0xc10] sm:$0xff]
    %v465 = vld [vmem:[#allocation2 + $0xc18] sm:$0xff]
    %v466 = vld [vmem:[#allocation2 + $0xc20] sm:$0xff]
    %v467 = vld [vmem:[#allocation2 + $0xc28] sm:$0xff]
    %v468 = vld [vmem:[#allocation2 + $0xc30] sm:$0xff]
    %v469 = vld [vmem:[#allocation2 + $0xc38] sm:$0xff]
    %v862 = vunpack.c.l.b16 %v78
    %v863 = vunpack.c.h.b16 %v78
    %v864 = vunpack.c.l.b16 %v79
    %v865 = vunpack.c.h.b16 %v79
    %v866 = vunpack.c.l.b16 %v80
    %v867 = vunpack.c.h.b16 %v80
    %v868 = vunpack.c.l.b16 %v81
    %v869 = vunpack.c.h.b16 %v81
    %v870 = vunpack.c.l.b16 %v82
    %v871 = vunpack.c.h.b16 %v82
    %v872 = vunpack.c.l.b16 %v83
    %v873 = vunpack.c.h.b16 %v83
    %v874 = vunpack.c.l.b16 %v84
    %v875 = vunpack.c.h.b16 %v84
    %v876 = vunpack.c.l.b16 %v85
    %v877 = vunpack.c.h.b16 %v85
    %v878 = vunpack.c.l.b16 %v86
    %v879 = vunpack.c.h.b16 %v86
    %v880 = vunpack.c.l.b16 %v87
    %v881 = vunpack.c.h.b16 %v87
    %v882 = vunpack.c.l.b16 %v88
    %v883 = vunpack.c.h.b16 %v88
    %v884 = vunpack.c.l.b16 %v89
    %v885 = vunpack.c.h.b16 %v89
    %v886 = vunpack.c.l.b16 %v90
    %v887 = vunpack.c.h.b16 %v90
    %v888 = vunpack.c.l.b16 %v91
    %v889 = vunpack.c.h.b16 %v91
    %v890 = vunpack.c.l.b16 %v92
    %v891 = vunpack.c.h.b16 %v92
    %v892 = vunpack.c.l.b16 %v93
    %v893 = vunpack.c.h.b16 %v93
    %v894 = vunpack.c.l.b16 %v94
    %v895 = vunpack.c.h.b16 %v94
    %v896 = vunpack.c.l.b16 %v95
    %v897 = vunpack.c.h.b16 %v95
    %v898 = vunpack.c.l.b16 %v96
    %v899 = vunpack.c.h.b16 %v96
    %v900 = vunpack.c.l.b16 %v97
    %v901 = vunpack.c.h.b16 %v97
    %v902 = vunpack.c.l.b16 %v98
    %v903 = vunpack.c.h.b16 %v98
    %v904 = vunpack.c.l.b16 %v99
    %v905 = vunpack.c.h.b16 %v99
    %v906 = vunpack.c.l.b16 %v100
    %v907 = vunpack.c.h.b16 %v100
    %v908 = vunpack.c.l.b16 %v101
    %v909 = vunpack.c.h.b16 %v101
    %v910 = vunpack.c.l.b16 %v102
    %v911 = vunpack.c.h.b16 %v102
    %v912 = vunpack.c.l.b16 %v103
    %v913 = vunpack.c.h.b16 %v103
    %v914 = vunpack.c.l.b16 %v104
    %v915 = vunpack.c.h.b16 %v104
    %v916 = vunpack.c.l.b16 %v105
    %v917 = vunpack.c.h.b16 %v105
    %v918 = vunpack.c.l.b16 %v106
    %v919 = vunpack.c.h.b16 %v106
    %v920 = vunpack.c.l.b16 %v107
    %v921 = vunpack.c.h.b16 %v107
    %v922 = vunpack.c.l.b16 %v108
    %v923 = vunpack.c.h.b16 %v108
    %v924 = vunpack.c.l.b16 %v109
    %v925 = vunpack.c.h.b16 %v109
    %v926 = vunpack.c.l.b16 %v110
    %v927 = vunpack.c.h.b16 %v110
    %v928 = vunpack.c.l.b16 %v111
    %v929 = vunpack.c.h.b16 %v111
    %v930 = vunpack.c.l.b16 %v112
    %v931 = vunpack.c.h.b16 %v112
    %v932 = vunpack.c.l.b16 %v113
    %v933 = vunpack.c.h.b16 %v113
    %v934 = vunpack.c.l.b16 %v114
    %v935 = vunpack.c.h.b16 %v114
    %v936 = vunpack.c.l.b16 %v115
    %v937 = vunpack.c.h.b16 %v115
    %v938 = vunpack.c.l.b16 %v116
    %v939 = vunpack.c.h.b16 %v116
    %v940 = vunpack.c.l.b16 %v117
    %v941 = vunpack.c.h.b16 %v117
    %v942 = vunpack.c.l.b16 %v118
    %v943 = vunpack.c.h.b16 %v118
    %v944 = vunpack.c.l.b16 %v119
    %v945 = vunpack.c.h.b16 %v119
    %v946 = vunpack.c.l.b16 %v120
    %v947 = vunpack.c.h.b16 %v120
    %v948 = vunpack.c.l.b16 %v121
    %v949 = vunpack.c.h.b16 %v121
    %v950 = vunpack.c.l.b16 %v122
    %v951 = vunpack.c.h.b16 %v122
    %v952 = vunpack.c.l.b16 %v123
    %v953 = vunpack.c.h.b16 %v123
    %v954 = vunpack.c.l.b16 %v124
    %v955 = vunpack.c.h.b16 %v124
    %v956 = vunpack.c.l.b16 %v125
    %v957 = vunpack.c.h.b16 %v125
    %v958 = vunpack.c.l.b16 %v126
    %v959 = vunpack.c.h.b16 %v126
    %v960 = vunpack.c.l.b16 %v127
    %v961 = vunpack.c.h.b16 %v127
    %v962 = vunpack.c.l.b16 %v128
    %v963 = vunpack.c.h.b16 %v128
    %v964 = vunpack.c.l.b16 %v129
    %v965 = vunpack.c.h.b16 %v129
    %v966 = vunpack.c.l.b16 %v130
    %v967 = vunpack.c.h.b16 %v130
    %v968 = vunpack.c.l.b16 %v131
    %v969 = vunpack.c.h.b16 %v131
    %v970 = vunpack.c.l.b16 %v132
    %v971 = vunpack.c.h.b16 %v132
    %v972 = vunpack.c.l.b16 %v133
    %v973 = vunpack.c.h.b16 %v133
    %v974 = vunpack.c.l.b16 %v134
    %v975 = vunpack.c.h.b16 %v134
    %v976 = vunpack.c.l.b16 %v135
    %v977 = vunpack.c.h.b16 %v135
    %v978 = vunpack.c.l.b16 %v136
    %v979 = vunpack.c.h.b16 %v136
    %v980 = vunpack.c.l.b16 %v137
    %v981 = vunpack.c.h.b16 %v137
    %v982 = vunpack.c.l.b16 %v138
    %v983 = vunpack.c.h.b16 %v138
    %v984 = vunpack.c.l.b16 %v139
    %v985 = vunpack.c.h.b16 %v139
    %v986 = vunpack.c.l.b16 %v140
    %v987 = vunpack.c.h.b16 %v140
    %v988 = vunpack.c.l.b16 %v141
    %v989 = vunpack.c.h.b16 %v141
    %v990 = vunpack.c.l.b16 %v142
    %v991 = vunpack.c.h.b16 %v142
    %v992 = vunpack.c.l.b16 %v143
    %v993 = vunpack.c.h.b16 %v143
    %v994 = vunpack.c.l.b16 %v144
    %v995 = vunpack.c.h.b16 %v144
    %v996 = vunpack.c.l.b16 %v145
    %v997 = vunpack.c.h.b16 %v145
    %v998 = vunpack.c.l.b16 %v146
    %v999 = vunpack.c.h.b16 %v146
    %v1000 = vunpack.c.l.b16 %v147
    %v1001 = vunpack.c.h.b16 %v147
    %v1002 = vunpack.c.l.b16 %v148
    %v1003 = vunpack.c.h.b16 %v148
    %v1004 = vunpack.c.l.b16 %v149
    %v1005 = vunpack.c.h.b16 %v149
    %v1006 = vunpack.c.l.b16 %v150
    %v1007 = vunpack.c.h.b16 %v150
    %v1008 = vunpack.c.l.b16 %v151
    %v1009 = vunpack.c.h.b16 %v151
    %v1010 = vunpack.c.l.b16 %v152
    %v1011 = vunpack.c.h.b16 %v152
    %v1012 = vunpack.c.l.b16 %v153
    %v1013 = vunpack.c.h.b16 %v153
    %v1014 = vunpack.c.l.b16 %v154
    %v1015 = vunpack.c.h.b16 %v154
    %v1016 = vunpack.c.l.b16 %v155
    %v1017 = vunpack.c.h.b16 %v155
    %v1018 = vunpack.c.l.b16 %v156
    %v1019 = vunpack.c.h.b16 %v156
    %v1020 = vunpack.c.l.b16 %v157
    %v1021 = vunpack.c.h.b16 %v157
    %v1022 = vunpack.c.l.b16 %v158
    %v1023 = vunpack.c.h.b16 %v158
    %v1024 = vunpack.c.l.b16 %v159
    %v1025 = vunpack.c.h.b16 %v159
    %v1026 = vunpack.c.l.b16 %v160
    %v1027 = vunpack.c.h.b16 %v160
    %v1028 = vunpack.c.l.b16 %v161
    %v1029 = vunpack.c.h.b16 %v161
    %v1030 = vunpack.c.l.b16 %v162
    %v1031 = vunpack.c.h.b16 %v162
    %v1032 = vunpack.c.l.b16 %v163
    %v1033 = vunpack.c.h.b16 %v163
    %v1034 = vunpack.c.l.b16 %v164
    %v1035 = vunpack.c.h.b16 %v164
    %v1036 = vunpack.c.l.b16 %v165
    %v1037 = vunpack.c.h.b16 %v165
    %v1038 = vunpack.c.l.b16 %v166
    %v1039 = vunpack.c.h.b16 %v166
    %v1040 = vunpack.c.l.b16 %v167
    %v1041 = vunpack.c.h.b16 %v167
    %v1042 = vunpack.c.l.b16 %v168
    %v1043 = vunpack.c.h.b16 %v168
    %v1044 = vunpack.c.l.b16 %v169
    %v1045 = vunpack.c.h.b16 %v169
    %v1046 = vunpack.c.l.b16 %v170
    %v1047 = vunpack.c.h.b16 %v170
    %v1048 = vunpack.c.l.b16 %v171
    %v1049 = vunpack.c.h.b16 %v171
    %v1050 = vunpack.c.l.b16 %v172
    %v1051 = vunpack.c.h.b16 %v172
    %v1052 = vunpack.c.l.b16 %v173
    %v1053 = vunpack.c.h.b16 %v173
    %v1054 = vunpack.c.l.b16 %v174
    %v1055 = vunpack.c.h.b16 %v174
    %v1056 = vunpack.c.l.b16 %v175
    %v1057 = vunpack.c.h.b16 %v175
    %v1058 = vunpack.c.l.b16 %v176
    %v1059 = vunpack.c.h.b16 %v176
    %v1060 = vunpack.c.l.b16 %v177
    %v1061 = vunpack.c.h.b16 %v177
    %v1062 = vunpack.c.l.b16 %v178
    %v1063 = vunpack.c.h.b16 %v178
    %v1064 = vunpack.c.l.b16 %v179
    %v1065 = vunpack.c.h.b16 %v179
    %v1066 = vunpack.c.l.b16 %v180
    %v1067 = vunpack.c.h.b16 %v180
    %v1068 = vunpack.c.l.b16 %v181
    %v1069 = vunpack.c.h.b16 %v181
    %v1070 = vunpack.c.l.b16 %v182
    %v1071 = vunpack.c.h.b16 %v182
    %v1072 = vunpack.c.l.b16 %v183
    %v1073 = vunpack.c.h.b16 %v183
    %v1074 = vunpack.c.l.b16 %v184
    %v1075 = vunpack.c.h.b16 %v184
    %v1076 = vunpack.c.l.b16 %v185
    %v1077 = vunpack.c.h.b16 %v185
    %v1078 = vunpack.c.l.b16 %v186
    %v1079 = vunpack.c.h.b16 %v186
    %v1080 = vunpack.c.l.b16 %v187
    %v1081 = vunpack.c.h.b16 %v187
    %v1082 = vunpack.c.l.b16 %v188
    %v1083 = vunpack.c.h.b16 %v188
    %v1084 = vunpack.c.l.b16 %v189
    %v1085 = vunpack.c.h.b16 %v189
    %v1086 = vunpack.c.l.b16 %v190
    %v1087 = vunpack.c.h.b16 %v190
    %v1088 = vunpack.c.l.b16 %v191
    %v1089 = vunpack.c.h.b16 %v191
    %v1090 = vunpack.c.l.b16 %v192
    %v1091 = vunpack.c.h.b16 %v192
    %v1092 = vunpack.c.l.b16 %v193
    %v1093 = vunpack.c.h.b16 %v193
    %v1094 = vunpack.c.l.b16 %v194
    %v1095 = vunpack.c.h.b16 %v194
    %v1096 = vunpack.c.l.b16 %v195
    %v1097 = vunpack.c.h.b16 %v195
    %v1098 = vunpack.c.l.b16 %v196
    %v1099 = vunpack.c.h.b16 %v196
    %v1100 = vunpack.c.l.b16 %v197
    %v1101 = vunpack.c.h.b16 %v197
    %v1102 = vunpack.c.l.b16 %v198
    %v1103 = vunpack.c.h.b16 %v198
    %v1104 = vunpack.c.l.b16 %v199
    %v1105 = vunpack.c.h.b16 %v199
    %v1106 = vunpack.c.l.b16 %v200
    %v1107 = vunpack.c.h.b16 %v200
    %v1108 = vunpack.c.l.b16 %v201
    %v1109 = vunpack.c.h.b16 %v201
    %v1110 = vunpack.c.l.b16 %v202
    %v1111 = vunpack.c.h.b16 %v202
    %v1112 = vunpack.c.l.b16 %v203
    %v1113 = vunpack.c.h.b16 %v203
    %v1114 = vunpack.c.l.b16 %v204
    %v1115 = vunpack.c.h.b16 %v204
    %v1116 = vunpack.c.l.b16 %v205
    %v1117 = vunpack.c.h.b16 %v205
    %v1118 = vunpack.c.l.b16 %v206
    %v1119 = vunpack.c.h.b16 %v206
    %v1120 = vunpack.c.l.b16 %v207
    %v1121 = vunpack.c.h.b16 %v207
    %v1122 = vunpack.c.l.b16 %v208
    %v1123 = vunpack.c.h.b16 %v208
    %v1124 = vunpack.c.l.b16 %v209
    %v1125 = vunpack.c.h.b16 %v209
    %v1126 = vunpack.c.l.b16 %v210
    %v1127 = vunpack.c.h.b16 %v210
    %v1128 = vunpack.c.l.b16 %v211
    %v1129 = vunpack.c.h.b16 %v211
    %v1130 = vunpack.c.l.b16 %v212
    %v1131 = vunpack.c.h.b16 %v212
    %v1132 = vunpack.c.l.b16 %v213
    %v1133 = vunpack.c.h.b16 %v213
    %v1134 = vunpack.c.l.b16 %v214
    %v1135 = vunpack.c.h.b16 %v214
    %v1136 = vunpack.c.l.b16 %v215
    %v1137 = vunpack.c.h.b16 %v215
    %v1138 = vunpack.c.l.b16 %v216
    %v1139 = vunpack.c.h.b16 %v216
    %v1140 = vunpack.c.l.b16 %v217
    %v1141 = vunpack.c.h.b16 %v217
    %v1142 = vunpack.c.l.b16 %v218
    %v1143 = vunpack.c.h.b16 %v218
    %v1144 = vunpack.c.l.b16 %v219
    %v1145 = vunpack.c.h.b16 %v219
    %v1146 = vunpack.c.l.b16 %v220
    %v1147 = vunpack.c.h.b16 %v220
    %v1148 = vunpack.c.l.b16 %v221
    %v1149 = vunpack.c.h.b16 %v221
    %v1150 = vunpack.c.l.b16 %v222
    %v1151 = vunpack.c.h.b16 %v222
    %v1152 = vunpack.c.l.b16 %v223
    %v1153 = vunpack.c.h.b16 %v223
    %v1154 = vunpack.c.l.b16 %v224
    %v1155 = vunpack.c.h.b16 %v224
    %v1156 = vunpack.c.l.b16 %v225
    %v1157 = vunpack.c.h.b16 %v225
    %v1158 = vunpack.c.l.b16 %v226
    %v1159 = vunpack.c.h.b16 %v226
    %v1160 = vunpack.c.l.b16 %v227
    %v1161 = vunpack.c.h.b16 %v227
    %v1162 = vunpack.c.l.b16 %v228
    %v1163 = vunpack.c.h.b16 %v228
    %v1164 = vunpack.c.l.b16 %v229
    %v1165 = vunpack.c.h.b16 %v229
    %v1166 = vunpack.c.l.b16 %v230
    %v1167 = vunpack.c.h.b16 %v230
    %v1168 = vunpack.c.l.b16 %v231
    %v1169 = vunpack.c.h.b16 %v231
    %v1170 = vunpack.c.l.b16 %v232
    %v1171 = vunpack.c.h.b16 %v232
    %v1172 = vunpack.c.l.b16 %v233
    %v1173 = vunpack.c.h.b16 %v233
    %v1174 = vunpack.c.l.b16 %v234
    %v1175 = vunpack.c.h.b16 %v234
    %v1176 = vunpack.c.l.b16 %v235
    %v1177 = vunpack.c.h.b16 %v235
    %v1178 = vunpack.c.l.b16 %v236
    %v1179 = vunpack.c.h.b16 %v236
    %v1180 = vunpack.c.l.b16 %v237
    %v1181 = vunpack.c.h.b16 %v237
    %v1182 = vunpack.c.l.b16 %v238
    %v1183 = vunpack.c.h.b16 %v238
    %v1184 = vunpack.c.l.b16 %v239
    %v1185 = vunpack.c.h.b16 %v239
    %v1186 = vunpack.c.l.b16 %v240
    %v1187 = vunpack.c.h.b16 %v240
    %v1188 = vunpack.c.l.b16 %v241
    %v1189 = vunpack.c.h.b16 %v241
    %v1190 = vunpack.c.l.b16 %v242
    %v1191 = vunpack.c.h.b16 %v242
    %v1192 = vunpack.c.l.b16 %v243
    %v1193 = vunpack.c.h.b16 %v243
    %v1194 = vunpack.c.l.b16 %v244
    %v1195 = vunpack.c.h.b16 %v244
    %v1196 = vunpack.c.l.b16 %v245
    %v1197 = vunpack.c.h.b16 %v245
    %v1198 = vunpack.c.l.b16 %v246
    %v1199 = vunpack.c.h.b16 %v246
    %v1200 = vunpack.c.l.b16 %v247
    %v1201 = vunpack.c.h.b16 %v247
    %v1202 = vunpack.c.l.b16 %v248
    %v1203 = vunpack.c.h.b16 %v248
    %v1204 = vunpack.c.l.b16 %v249
    %v1205 = vunpack.c.h.b16 %v249
    %v1206 = vunpack.c.l.b16 %v250
    %v1207 = vunpack.c.h.b16 %v250
    %v1208 = vunpack.c.l.b16 %v251
    %v1209 = vunpack.c.h.b16 %v251
    %v1210 = vunpack.c.l.b16 %v252
    %v1211 = vunpack.c.h.b16 %v252
    %v1212 = vunpack.c.l.b16 %v253
    %v1213 = vunpack.c.h.b16 %v253
    %v1214 = vunpack.c.l.b16 %v254
    %v1215 = vunpack.c.h.b16 %v254
    %v1216 = vunpack.c.l.b16 %v255
    %v1217 = vunpack.c.h.b16 %v255
    %v1218 = vunpack.c.l.b16 %v256
    %v1219 = vunpack.c.h.b16 %v256
    %v1220 = vunpack.c.l.b16 %v257
    %v1221 = vunpack.c.h.b16 %v257
    %v1222 = vunpack.c.l.b16 %v258
    %v1223 = vunpack.c.h.b16 %v258
    %v1224 = vunpack.c.l.b16 %v259
    %v1225 = vunpack.c.h.b16 %v259
    %v1226 = vunpack.c.l.b16 %v260
    %v1227 = vunpack.c.h.b16 %v260
    %v1228 = vunpack.c.l.b16 %v261
    %v1229 = vunpack.c.h.b16 %v261
    %v1230 = vunpack.c.l.b16 %v262
    %v1231 = vunpack.c.h.b16 %v262
    %v1232 = vunpack.c.l.b16 %v263
    %v1233 = vunpack.c.h.b16 %v263
    %v1234 = vunpack.c.l.b16 %v264
    %v1235 = vunpack.c.h.b16 %v264
    %v1236 = vunpack.c.l.b16 %v265
    %v1237 = vunpack.c.h.b16 %v265
    %v1238 = vunpack.c.l.b16 %v266
    %v1239 = vunpack.c.h.b16 %v266
    %v1240 = vunpack.c.l.b16 %v267
    %v1241 = vunpack.c.h.b16 %v267
    %v1242 = vunpack.c.l.b16 %v268
    %v1243 = vunpack.c.h.b16 %v268
    %v1244 = vunpack.c.l.b16 %v269
    %v1245 = vunpack.c.h.b16 %v269
    %v1246 = vunpack.c.l.b16 %v270
    %v1247 = vunpack.c.h.b16 %v270
    %v1248 = vunpack.c.l.b16 %v271
    %v1249 = vunpack.c.h.b16 %v271
    %v1250 = vunpack.c.l.b16 %v272
    %v1251 = vunpack.c.h.b16 %v272
    %v1252 = vunpack.c.l.b16 %v273
    %v1253 = vunpack.c.h.b16 %v273
    %v1254 = vunpack.c.l.b16 %v274
    %v1255 = vunpack.c.h.b16 %v274
    %v1256 = vunpack.c.l.b16 %v275
    %v1257 = vunpack.c.h.b16 %v275
    %v1258 = vunpack.c.l.b16 %v276
    %v1259 = vunpack.c.h.b16 %v276
    %v1260 = vunpack.c.l.b16 %v277
    %v1261 = vunpack.c.h.b16 %v277
    %v1262 = vunpack.c.l.b16 %v278
    %v1263 = vunpack.c.h.b16 %v278
    %v1264 = vunpack.c.l.b16 %v279
    %v1265 = vunpack.c.h.b16 %v279
    %v1266 = vunpack.c.l.b16 %v280
    %v1267 = vunpack.c.h.b16 %v280
    %v1268 = vunpack.c.l.b16 %v281
    %v1269 = vunpack.c.h.b16 %v281
    %v1270 = vunpack.c.l.b16 %v282
    %v1271 = vunpack.c.h.b16 %v282
    %v1272 = vunpack.c.l.b16 %v283
    %v1273 = vunpack.c.h.b16 %v283
    %v1274 = vunpack.c.l.b16 %v284
    %v1275 = vunpack.c.h.b16 %v284
    %v1276 = vunpack.c.l.b16 %v285
    %v1277 = vunpack.c.h.b16 %v285
    %v1278 = vunpack.c.l.b16 %v286
    %v1279 = vunpack.c.h.b16 %v286
    %v1280 = vunpack.c.l.b16 %v287
    %v1281 = vunpack.c.h.b16 %v287
    %v1282 = vunpack.c.l.b16 %v288
    %v1283 = vunpack.c.h.b16 %v288
    %v1284 = vunpack.c.l.b16 %v289
    %v1285 = vunpack.c.h.b16 %v289
    %v1286 = vunpack.c.l.b16 %v290
    %v1287 = vunpack.c.h.b16 %v290
    %v1288 = vunpack.c.l.b16 %v291
    %v1289 = vunpack.c.h.b16 %v291
    %v1290 = vunpack.c.l.b16 %v292
    %v1291 = vunpack.c.h.b16 %v292
    %v1292 = vunpack.c.l.b16 %v293
    %v1293 = vunpack.c.h.b16 %v293
    %v1294 = vunpack.c.l.b16 %v294
    %v1295 = vunpack.c.h.b16 %v294
    %v1296 = vunpack.c.l.b16 %v295
    %v1297 = vunpack.c.h.b16 %v295
    %v1298 = vunpack.c.l.b16 %v296
    %v1299 = vunpack.c.h.b16 %v296
    %v1300 = vunpack.c.l.b16 %v297
    %v1301 = vunpack.c.h.b16 %v297
    %v1302 = vunpack.c.l.b16 %v298
    %v1303 = vunpack.c.h.b16 %v298
    %v1304 = vunpack.c.l.b16 %v299
    %v1305 = vunpack.c.h.b16 %v299
    %v1306 = vunpack.c.l.b16 %v300
    %v1307 = vunpack.c.h.b16 %v300
    %v1308 = vunpack.c.l.b16 %v301
    %v1309 = vunpack.c.h.b16 %v301
    %v1310 = vunpack.c.l.b16 %v302
    %v1311 = vunpack.c.h.b16 %v302
    %v1312 = vunpack.c.l.b16 %v303
    %v1313 = vunpack.c.h.b16 %v303
    %v1314 = vunpack.c.l.b16 %v304
    %v1315 = vunpack.c.h.b16 %v304
    %v1316 = vunpack.c.l.b16 %v305
    %v1317 = vunpack.c.h.b16 %v305
    %v1318 = vunpack.c.l.b16 %v306
    %v1319 = vunpack.c.h.b16 %v306
    %v1320 = vunpack.c.l.b16 %v307
    %v1321 = vunpack.c.h.b16 %v307
    %v1322 = vunpack.c.l.b16 %v308
    %v1323 = vunpack.c.h.b16 %v308
    %v1324 = vunpack.c.l.b16 %v309
    %v1325 = vunpack.c.h.b16 %v309
    %v1326 = vunpack.c.l.b16 %v310
    %v1327 = vunpack.c.h.b16 %v310
    %v1328 = vunpack.c.l.b16 %v311
    %v1329 = vunpack.c.h.b16 %v311
    %v1330 = vunpack.c.l.b16 %v312
    %v1331 = vunpack.c.h.b16 %v312
    %v1332 = vunpack.c.l.b16 %v313
    %v1333 = vunpack.c.h.b16 %v313
    %v1334 = vunpack.c.l.b16 %v314
    %v1335 = vunpack.c.h.b16 %v314
    %v1336 = vunpack.c.l.b16 %v315
    %v1337 = vunpack.c.h.b16 %v315
    %v1338 = vunpack.c.l.b16 %v316
    %v1339 = vunpack.c.h.b16 %v316
    %v1340 = vunpack.c.l.b16 %v317
    %v1341 = vunpack.c.h.b16 %v317
    %v1342 = vunpack.c.l.b16 %v318
    %v1343 = vunpack.c.h.b16 %v318
    %v1344 = vunpack.c.l.b16 %v319
    %v1345 = vunpack.c.h.b16 %v319
    %v1346 = vunpack.c.l.b16 %v320
    %v1347 = vunpack.c.h.b16 %v320
    %v1348 = vunpack.c.l.b16 %v321
    %v1349 = vunpack.c.h.b16 %v321
    %v1350 = vunpack.c.l.b16 %v322
    %v1351 = vunpack.c.h.b16 %v322
    %v1352 = vunpack.c.l.b16 %v323
    %v1353 = vunpack.c.h.b16 %v323
    %v1354 = vunpack.c.l.b16 %v324
    %v1355 = vunpack.c.h.b16 %v324
    %v1356 = vunpack.c.l.b16 %v325
    %v1357 = vunpack.c.h.b16 %v325
    %v1358 = vunpack.c.l.b16 %v326
    %v1359 = vunpack.c.h.b16 %v326
    %v1360 = vunpack.c.l.b16 %v327
    %v1361 = vunpack.c.h.b16 %v327
    %v1362 = vunpack.c.l.b16 %v328
    %v1363 = vunpack.c.h.b16 %v328
    %v1364 = vunpack.c.l.b16 %v329
    %v1365 = vunpack.c.h.b16 %v329
    %v1366 = vunpack.c.l.b16 %v330
    %v1367 = vunpack.c.h.b16 %v330
    %v1368 = vunpack.c.l.b16 %v331
    %v1369 = vunpack.c.h.b16 %v331
    %v1370 = vunpack.c.l.b16 %v332
    %v1371 = vunpack.c.h.b16 %v332
    %v1372 = vunpack.c.l.b16 %v333
    %v1373 = vunpack.c.h.b16 %v333
    %v1374 = vunpack.c.l.b16 %v334
    %v1375 = vunpack.c.h.b16 %v334
    %v1376 = vunpack.c.l.b16 %v335
    %v1377 = vunpack.c.h.b16 %v335
    %v1378 = vunpack.c.l.b16 %v336
    %v1379 = vunpack.c.h.b16 %v336
    %v1380 = vunpack.c.l.b16 %v337
    %v1381 = vunpack.c.h.b16 %v337
    %v1382 = vunpack.c.l.b16 %v338
    %v1383 = vunpack.c.h.b16 %v338
    %v1384 = vunpack.c.l.b16 %v339
    %v1385 = vunpack.c.h.b16 %v339
    %v1386 = vunpack.c.l.b16 %v340
    %v1387 = vunpack.c.h.b16 %v340
    %v1388 = vunpack.c.l.b16 %v341
    %v1389 = vunpack.c.h.b16 %v341
    %v1390 = vunpack.c.l.b16 %v342
    %v1391 = vunpack.c.h.b16 %v342
    %v1392 = vunpack.c.l.b16 %v343
    %v1393 = vunpack.c.h.b16 %v343
    %v1394 = vunpack.c.l.b16 %v344
    %v1395 = vunpack.c.h.b16 %v344
    %v1396 = vunpack.c.l.b16 %v345
    %v1397 = vunpack.c.h.b16 %v345
    %v1398 = vunpack.c.l.b16 %v346
    %v1399 = vunpack.c.h.b16 %v346
    %v1400 = vunpack.c.l.b16 %v347
    %v1401 = vunpack.c.h.b16 %v347
    %v1402 = vunpack.c.l.b16 %v348
    %v1403 = vunpack.c.h.b16 %v348
    %v1404 = vunpack.c.l.b16 %v349
    %v1405 = vunpack.c.h.b16 %v349
    %v1406 = vunpack.c.l.b16 %v350
    %v1407 = vunpack.c.h.b16 %v350
    %v1408 = vunpack.c.l.b16 %v351
    %v1409 = vunpack.c.h.b16 %v351
    %v1410 = vunpack.c.l.b16 %v352
    %v1411 = vunpack.c.h.b16 %v352
    %v1412 = vunpack.c.l.b16 %v353
    %v1413 = vunpack.c.h.b16 %v353
    %v1414 = vunpack.c.l.b16 %v354
    %v1415 = vunpack.c.h.b16 %v354
    %v1416 = vunpack.c.l.b16 %v355
    %v1417 = vunpack.c.h.b16 %v355
    %v1418 = vunpack.c.l.b16 %v356
    %v1419 = vunpack.c.h.b16 %v356
    %v1420 = vunpack.c.l.b16 %v357
    %v1421 = vunpack.c.h.b16 %v357
    %v1422 = vunpack.c.l.b16 %v358
    %v1423 = vunpack.c.h.b16 %v358
    %v1424 = vunpack.c.l.b16 %v359
    %v1425 = vunpack.c.h.b16 %v359
    %v1426 = vunpack.c.l.b16 %v360
    %v1427 = vunpack.c.h.b16 %v360
    %v1428 = vunpack.c.l.b16 %v361
    %v1429 = vunpack.c.h.b16 %v361
    %v1430 = vunpack.c.l.b16 %v362
    %v1431 = vunpack.c.h.b16 %v362
    %v1432 = vunpack.c.l.b16 %v363
    %v1433 = vunpack.c.h.b16 %v363
    %v1434 = vunpack.c.l.b16 %v364
    %v1435 = vunpack.c.h.b16 %v364
    %v1436 = vunpack.c.l.b16 %v365
    %v1437 = vunpack.c.h.b16 %v365
    %v1438 = vunpack.c.l.b16 %v366
    %v1439 = vunpack.c.h.b16 %v366
    %v1440 = vunpack.c.l.b16 %v367
    %v1441 = vunpack.c.h.b16 %v367
    %v1442 = vunpack.c.l.b16 %v368
    %v1443 = vunpack.c.h.b16 %v368
    %v1444 = vunpack.c.l.b16 %v369
    %v1445 = vunpack.c.h.b16 %v369
    %v1446 = vunpack.c.l.b16 %v370
    %v1447 = vunpack.c.h.b16 %v370
    %v1448 = vunpack.c.l.b16 %v371
    %v1449 = vunpack.c.h.b16 %v371
    %v1450 = vunpack.c.l.b16 %v372
    %v1451 = vunpack.c.h.b16 %v372
    %v1452 = vunpack.c.l.b16 %v373
    %v1453 = vunpack.c.h.b16 %v373
    %v1454 = vunpack.c.l.b16 %v374
    %v1455 = vunpack.c.h.b16 %v374
    %v1456 = vunpack.c.l.b16 %v375
    %v1457 = vunpack.c.h.b16 %v375
    %v1458 = vunpack.c.l.b16 %v376
    %v1459 = vunpack.c.h.b16 %v376
    %v1460 = vunpack.c.l.b16 %v377
    %v1461 = vunpack.c.h.b16 %v377
    %v1462 = vunpack.c.l.b16 %v378
    %v1463 = vunpack.c.h.b16 %v378
    %v1464 = vunpack.c.l.b16 %v379
    %v1465 = vunpack.c.h.b16 %v379
    %v1466 = vunpack.c.l.b16 %v380
    %v1467 = vunpack.c.h.b16 %v380
    %v1468 = vunpack.c.l.b16 %v381
    %v1469 = vunpack.c.h.b16 %v381
    %v1470 = vunpack.c.l.b16 %v382
    %v1471 = vunpack.c.h.b16 %v382
    %v1472 = vunpack.c.l.b16 %v383
    %v1473 = vunpack.c.h.b16 %v383
    %v1474 = vunpack.c.l.b16 %v384
    %v1475 = vunpack.c.h.b16 %v384
    %v1476 = vunpack.c.l.b16 %v385
    %v1477 = vunpack.c.h.b16 %v385
    %v1478 = vunpack.c.l.b16 %v386
    %v1479 = vunpack.c.h.b16 %v386
    %v1480 = vunpack.c.l.b16 %v387
    %v1481 = vunpack.c.h.b16 %v387
    %v1482 = vunpack.c.l.b16 %v388
    %v1483 = vunpack.c.h.b16 %v388
    %v1484 = vunpack.c.l.b16 %v389
    %v1485 = vunpack.c.h.b16 %v389
    %v1486 = vunpack.c.l.b16 %v390
    %v1487 = vunpack.c.h.b16 %v390
    %v1488 = vunpack.c.l.b16 %v391
    %v1489 = vunpack.c.h.b16 %v391
    %v1490 = vunpack.c.l.b16 %v392
    %v1491 = vunpack.c.h.b16 %v392
    %v1492 = vunpack.c.l.b16 %v393
    %v1493 = vunpack.c.h.b16 %v393
    %v1494 = vunpack.c.l.b16 %v394
    %v1495 = vunpack.c.h.b16 %v394
    %v1496 = vunpack.c.l.b16 %v395
    %v1497 = vunpack.c.h.b16 %v395
    %v1498 = vunpack.c.l.b16 %v396
    %v1499 = vunpack.c.h.b16 %v396
    %v1500 = vunpack.c.l.b16 %v397
    %v1501 = vunpack.c.h.b16 %v397
    %v1502 = vunpack.c.l.b16 %v398
    %v1503 = vunpack.c.h.b16 %v398
    %v1504 = vunpack.c.l.b16 %v399
    %v1505 = vunpack.c.h.b16 %v399
    %v1506 = vunpack.c.l.b16 %v400
    %v1507 = vunpack.c.h.b16 %v400
    %v1508 = vunpack.c.l.b16 %v401
    %v1509 = vunpack.c.h.b16 %v401
    %v1510 = vunpack.c.l.b16 %v402
    %v1511 = vunpack.c.h.b16 %v402
    %v1512 = vunpack.c.l.b16 %v403
    %v1513 = vunpack.c.h.b16 %v403
    %v1514 = vunpack.c.l.b16 %v404
    %v1515 = vunpack.c.h.b16 %v404
    %v1516 = vunpack.c.l.b16 %v405
    %v1517 = vunpack.c.h.b16 %v405
    %v1518 = vunpack.c.l.b16 %v406
    %v1519 = vunpack.c.h.b16 %v406
    %v1520 = vunpack.c.l.b16 %v407
    %v1521 = vunpack.c.h.b16 %v407
    %v1522 = vunpack.c.l.b16 %v408
    %v1523 = vunpack.c.h.b16 %v408
    %v1524 = vunpack.c.l.b16 %v409
    %v1525 = vunpack.c.h.b16 %v409
    %v1526 = vunpack.c.l.b16 %v410
    %v1527 = vunpack.c.h.b16 %v410
    %v1528 = vunpack.c.l.b16 %v411
    %v1529 = vunpack.c.h.b16 %v411
    %v1530 = vunpack.c.l.b16 %v412
    %v1531 = vunpack.c.h.b16 %v412
    %v1532 = vunpack.c.l.b16 %v413
    %v1533 = vunpack.c.h.b16 %v413
    %v1534 = vunpack.c.l.b16 %v414
    %v1535 = vunpack.c.h.b16 %v414
    %v1536 = vunpack.c.l.b16 %v415
    %v1537 = vunpack.c.h.b16 %v415
    %v1538 = vunpack.c.l.b16 %v416
    %v1539 = vunpack.c.h.b16 %v416
    %v1540 = vunpack.c.l.b16 %v417
    %v1541 = vunpack.c.h.b16 %v417
    %v1542 = vunpack.c.l.b16 %v418
    %v1543 = vunpack.c.h.b16 %v418
    %v1544 = vunpack.c.l.b16 %v419
    %v1545 = vunpack.c.h.b16 %v419
    %v1546 = vunpack.c.l.b16 %v420
    %v1547 = vunpack.c.h.b16 %v420
    %v1548 = vunpack.c.l.b16 %v421
    %v1549 = vunpack.c.h.b16 %v421
    %v1550 = vunpack.c.l.b16 %v422
    %v1551 = vunpack.c.h.b16 %v422
    %v1552 = vunpack.c.l.b16 %v423
    %v1553 = vunpack.c.h.b16 %v423
    %v1554 = vunpack.c.l.b16 %v424
    %v1555 = vunpack.c.h.b16 %v424
    %v1556 = vunpack.c.l.b16 %v425
    %v1557 = vunpack.c.h.b16 %v425
    %v1558 = vunpack.c.l.b16 %v426
    %v1559 = vunpack.c.h.b16 %v426
    %v1560 = vunpack.c.l.b16 %v427
    %v1561 = vunpack.c.h.b16 %v427
    %v1562 = vunpack.c.l.b16 %v428
    %v1563 = vunpack.c.h.b16 %v428
    %v1564 = vunpack.c.l.b16 %v429
    %v1565 = vunpack.c.h.b16 %v429
    %v1566 = vunpack.c.l.b16 %v430
    %v1567 = vunpack.c.h.b16 %v430
    %v1568 = vunpack.c.l.b16 %v431
    %v1569 = vunpack.c.h.b16 %v431
    %v1570 = vunpack.c.l.b16 %v432
    %v1571 = vunpack.c.h.b16 %v432
    %v1572 = vunpack.c.l.b16 %v433
    %v1573 = vunpack.c.h.b16 %v433
    %v1574 = vunpack.c.l.b16 %v434
    %v1575 = vunpack.c.h.b16 %v434
    %v1576 = vunpack.c.l.b16 %v435
    %v1577 = vunpack.c.h.b16 %v435
    %v1578 = vunpack.c.l.b16 %v436
    %v1579 = vunpack.c.h.b16 %v436
    %v1580 = vunpack.c.l.b16 %v437
    %v1581 = vunpack.c.h.b16 %v437
    %v1582 = vunpack.c.l.b16 %v438
    %v1583 = vunpack.c.h.b16 %v438
    %v1584 = vunpack.c.l.b16 %v439
    %v1585 = vunpack.c.h.b16 %v439
    %v1586 = vunpack.c.l.b16 %v440
    %v1587 = vunpack.c.h.b16 %v440
    %v1588 = vunpack.c.l.b16 %v441
    %v1589 = vunpack.c.h.b16 %v441
    %v1590 = vunpack.c.l.b16 %v442
    %v1591 = vunpack.c.h.b16 %v442
    %v1592 = vunpack.c.l.b16 %v443
    %v1593 = vunpack.c.h.b16 %v443
    %v1594 = vunpack.c.l.b16 %v444
    %v1595 = vunpack.c.h.b16 %v444
    %v1596 = vunpack.c.l.b16 %v445
    %v1597 = vunpack.c.h.b16 %v445
    %v1598 = vunpack.c.l.b16 %v446
    %v1599 = vunpack.c.h.b16 %v446
    %v1600 = vunpack.c.l.b16 %v447
    %v1601 = vunpack.c.h.b16 %v447
    %v1602 = vunpack.c.l.b16 %v448
    %v1603 = vunpack.c.h.b16 %v448
    %v1604 = vunpack.c.l.b16 %v449
    %v1605 = vunpack.c.h.b16 %v449
    %v1606 = vunpack.c.l.b16 %v450
    %v1607 = vunpack.c.h.b16 %v450
    %v1608 = vunpack.c.l.b16 %v451
    %v1609 = vunpack.c.h.b16 %v451
    %v1610 = vunpack.c.l.b16 %v452
    %v1611 = vunpack.c.h.b16 %v452
    %v1612 = vunpack.c.l.b16 %v453
    %v1613 = vunpack.c.h.b16 %v453
    %v1614 = vunpack.c.l.b16 %v454
    %v1615 = vunpack.c.h.b16 %v454
    %v1616 = vunpack.c.l.b16 %v455
    %v1617 = vunpack.c.h.b16 %v455
    %v1618 = vunpack.c.l.b16 %v456
    %v1619 = vunpack.c.h.b16 %v456
    %v1620 = vunpack.c.l.b16 %v457
    %v1621 = vunpack.c.h.b16 %v457
    %v1622 = vunpack.c.l.b16 %v458
    %v1623 = vunpack.c.h.b16 %v458
    %v1624 = vunpack.c.l.b16 %v459
    %v1625 = vunpack.c.h.b16 %v459
    %v1626 = vunpack.c.l.b16 %v460
    %v1627 = vunpack.c.h.b16 %v460
    %v1628 = vunpack.c.l.b16 %v461
    %v1629 = vunpack.c.h.b16 %v461
    %v1630 = vunpack.c.l.b16 %v462
    %v1631 = vunpack.c.h.b16 %v462
    %v1632 = vunpack.c.l.b16 %v463
    %v1633 = vunpack.c.h.b16 %v463
    %v1634 = vunpack.c.l.b16 %v464
    %v1635 = vunpack.c.h.b16 %v464
    %v1636 = vunpack.c.l.b16 %v465
    %v1637 = vunpack.c.h.b16 %v465
    %v1638 = vunpack.c.l.b16 %v466
    %v1639 = vunpack.c.h.b16 %v466
    %v1640 = vunpack.c.l.b16 %v467
    %v1641 = vunpack.c.h.b16 %v467
    %v1642 = vunpack.c.l.b16 %v468
    %v1643 = vunpack.c.h.b16 %v468
    %v1644 = vunpack.c.l.b16 %v469
    %v1645 = vunpack.c.h.b16 %v469
    %v1646 = vpack.c.b16 %v870, %v862
    %v1647 = vpack.c.b16 %v871, %v863
    %v1648 = vpack.c.b16 %v872, %v864
    %v1649 = vpack.c.b16 %v873, %v865
    %v1650 = vpack.c.b16 %v874, %v866
    %v1651 = vpack.c.b16 %v875, %v867
    %v1652 = vpack.c.b16 %v876, %v868
    %v1653 = vpack.c.b16 %v877, %v869
    %v1654 = vpack.c.b16 %v886, %v878
    %v1655 = vpack.c.b16 %v887, %v879
    %v1656 = vpack.c.b16 %v888, %v880
    %v1657 = vpack.c.b16 %v889, %v881
    %v1658 = vpack.c.b16 %v890, %v882
    %v1659 = vpack.c.b16 %v891, %v883
    %v1660 = vpack.c.b16 %v892, %v884
    %v1661 = vpack.c.b16 %v893, %v885
    %v1662 = vpack.c.b16 %v902, %v894
    %v1663 = vpack.c.b16 %v903, %v895
    %v1664 = vpack.c.b16 %v904, %v896
    %v1665 = vpack.c.b16 %v905, %v897
    %v1666 = vpack.c.b16 %v906, %v898
    %v1667 = vpack.c.b16 %v907, %v899
    %v1668 = vpack.c.b16 %v908, %v900
    %v1669 = vpack.c.b16 %v909, %v901
    %v1670 = vpack.c.b16 %v918, %v910
    %v1671 = vpack.c.b16 %v919, %v911
    %v1672 = vpack.c.b16 %v920, %v912
    %v1673 = vpack.c.b16 %v921, %v913
    %v1674 = vpack.c.b16 %v922, %v914
    %v1675 = vpack.c.b16 %v923, %v915
    %v1676 = vpack.c.b16 %v924, %v916
    %v1677 = vpack.c.b16 %v925, %v917
    %v1678 = vpack.c.b16 %v934, %v926
    %v1679 = vpack.c.b16 %v935, %v927
    %v1680 = vpack.c.b16 %v936, %v928
    %v1681 = vpack.c.b16 %v937, %v929
    %v1682 = vpack.c.b16 %v938, %v930
    %v1683 = vpack.c.b16 %v939, %v931
    %v1684 = vpack.c.b16 %v940, %v932
    %v1685 = vpack.c.b16 %v941, %v933
    %v1686 = vpack.c.b16 %v950, %v942
    %v1687 = vpack.c.b16 %v951, %v943
    %v1688 = vpack.c.b16 %v952, %v944
    %v1689 = vpack.c.b16 %v953, %v945
    %v1690 = vpack.c.b16 %v954, %v946
    %v1691 = vpack.c.b16 %v955, %v947
    %v1692 = vpack.c.b16 %v956, %v948
    %v1693 = vpack.c.b16 %v957, %v949
    %v1694 = vpack.c.b16 %v966, %v958
    %v1695 = vpack.c.b16 %v967, %v959
    %v1696 = vpack.c.b16 %v968, %v960
    %v1697 = vpack.c.b16 %v969, %v961
    %v1698 = vpack.c.b16 %v970, %v962
    %v1699 = vpack.c.b16 %v971, %v963
    %v1700 = vpack.c.b16 %v972, %v964
    %v1701 = vpack.c.b16 %v973, %v965
    %v1702 = vpack.c.b16 %v982, %v974
    %v1703 = vpack.c.b16 %v983, %v975
    %v1704 = vpack.c.b16 %v984, %v976
    %v1705 = vpack.c.b16 %v985, %v977
    %v1706 = vpack.c.b16 %v986, %v978
    %v1707 = vpack.c.b16 %v987, %v979
    %v1708 = vpack.c.b16 %v988, %v980
    %v1709 = vpack.c.b16 %v989, %v981
    %v1710 = vpack.c.b16 %v998, %v990
    %v1711 = vpack.c.b16 %v999, %v991
    %v1712 = vpack.c.b16 %v1000, %v992
    %v1713 = vpack.c.b16 %v1001, %v993
    %v1714 = vpack.c.b16 %v1002, %v994
    %v1715 = vpack.c.b16 %v1003, %v995
    %v1716 = vpack.c.b16 %v1004, %v996
    %v1717 = vpack.c.b16 %v1005, %v997
    %v1718 = vpack.c.b16 %v1014, %v1006
    %v1719 = vpack.c.b16 %v1015, %v1007
    %v1720 = vpack.c.b16 %v1016, %v1008
    %v1721 = vpack.c.b16 %v1017, %v1009
    %v1722 = vpack.c.b16 %v1018, %v1010
    %v1723 = vpack.c.b16 %v1019, %v1011
    %v1724 = vpack.c.b16 %v1020, %v1012
    %v1725 = vpack.c.b16 %v1021, %v1013
    %v1726 = vpack.c.b16 %v1030, %v1022
    %v1727 = vpack.c.b16 %v1031, %v1023
    %v1728 = vpack.c.b16 %v1032, %v1024
    %v1729 = vpack.c.b16 %v1033, %v1025
    %v1730 = vpack.c.b16 %v1034, %v1026
    %v1731 = vpack.c.b16 %v1035, %v1027
    %v1732 = vpack.c.b16 %v1036, %v1028
    %v1733 = vpack.c.b16 %v1037, %v1029
    %v1734 = vpack.c.b16 %v1046, %v1038
    %v1735 = vpack.c.b16 %v1047, %v1039
    %v1736 = vpack.c.b16 %v1048, %v1040
    %v1737 = vpack.c.b16 %v1049, %v1041
    %v1738 = vpack.c.b16 %v1050, %v1042
    %v1739 = vpack.c.b16 %v1051, %v1043
    %v1740 = vpack.c.b16 %v1052, %v1044
    %v1741 = vpack.c.b16 %v1053, %v1045
    %v1742 = vpack.c.b16 %v1062, %v1054
    %v1743 = vpack.c.b16 %v1063, %v1055
    %v1744 = vpack.c.b16 %v1064, %v1056
    %v1745 = vpack.c.b16 %v1065, %v1057
    %v1746 = vpack.c.b16 %v1066, %v1058
    %v1747 = vpack.c.b16 %v1067, %v1059
    %v1748 = vpack.c.b16 %v1068, %v1060
    %v1749 = vpack.c.b16 %v1069, %v1061
    %v1750 = vpack.c.b16 %v1078, %v1070
    %v1751 = vpack.c.b16 %v1079, %v1071
    %v1752 = vpack.c.b16 %v1080, %v1072
    %v1753 = vpack.c.b16 %v1081, %v1073
    %v1754 = vpack.c.b16 %v1082, %v1074
    %v1755 = vpack.c.b16 %v1083, %v1075
    %v1756 = vpack.c.b16 %v1084, %v1076
    %v1757 = vpack.c.b16 %v1085, %v1077
    %v1758 = vpack.c.b16 %v1094, %v1086
    %v1759 = vpack.c.b16 %v1095, %v1087
    %v1760 = vpack.c.b16 %v1096, %v1088
    %v1761 = vpack.c.b16 %v1097, %v1089
    %v1762 = vpack.c.b16 %v1098, %v1090
    %v1763 = vpack.c.b16 %v1099, %v1091
    %v1764 = vpack.c.b16 %v1100, %v1092
    %v1765 = vpack.c.b16 %v1101, %v1093
    %v1766 = vpack.c.b16 %v1110, %v1102
    %v1767 = vpack.c.b16 %v1111, %v1103
    %v1768 = vpack.c.b16 %v1112, %v1104
    %v1769 = vpack.c.b16 %v1113, %v1105
    %v1770 = vpack.c.b16 %v1114, %v1106
    %v1771 = vpack.c.b16 %v1115, %v1107
    %v1772 = vpack.c.b16 %v1116, %v1108
    %v1773 = vpack.c.b16 %v1117, %v1109
    %v1774 = vpack.c.b16 %v1126, %v1118
    %v1775 = vpack.c.b16 %v1127, %v1119
    %v1776 = vpack.c.b16 %v1128, %v1120
    %v1777 = vpack.c.b16 %v1129, %v1121
    %v1778 = vpack.c.b16 %v1130, %v1122
    %v1779 = vpack.c.b16 %v1131, %v1123
    %v1780 = vpack.c.b16 %v1132, %v1124
    %v1781 = vpack.c.b16 %v1133, %v1125
    %v1782 = vpack.c.b16 %v1142, %v1134
    %v1783 = vpack.c.b16 %v1143, %v1135
    %v1784 = vpack.c.b16 %v1144, %v1136
    %v1785 = vpack.c.b16 %v1145, %v1137
    %v1786 = vpack.c.b16 %v1146, %v1138
    %v1787 = vpack.c.b16 %v1147, %v1139
    %v1788 = vpack.c.b16 %v1148, %v1140
    %v1789 = vpack.c.b16 %v1149, %v1141
    %v1790 = vpack.c.b16 %v1158, %v1150
    %v1791 = vpack.c.b16 %v1159, %v1151
    %v1792 = vpack.c.b16 %v1160, %v1152
    %v1793 = vpack.c.b16 %v1161, %v1153
    %v1794 = vpack.c.b16 %v1162, %v1154
    %v1795 = vpack.c.b16 %v1163, %v1155
    %v1796 = vpack.c.b16 %v1164, %v1156
    %v1797 = vpack.c.b16 %v1165, %v1157
    %v1798 = vpack.c.b16 %v1174, %v1166
    %v1799 = vpack.c.b16 %v1175, %v1167
    %v1800 = vpack.c.b16 %v1176, %v1168
    %v1801 = vpack.c.b16 %v1177, %v1169
    %v1802 = vpack.c.b16 %v1178, %v1170
    %v1803 = vpack.c.b16 %v1179, %v1171
    %v1804 = vpack.c.b16 %v1180, %v1172
    %v1805 = vpack.c.b16 %v1181, %v1173
    %v1806 = vpack.c.b16 %v1190, %v1182
    %v1807 = vpack.c.b16 %v1191, %v1183
    %v1808 = vpack.c.b16 %v1192, %v1184
    %v1809 = vpack.c.b16 %v1193, %v1185
    %v1810 = vpack.c.b16 %v1194, %v1186
    %v1811 = vpack.c.b16 %v1195, %v1187
    %v1812 = vpack.c.b16 %v1196, %v1188
    %v1813 = vpack.c.b16 %v1197, %v1189
    %v1814 = vpack.c.b16 %v1206, %v1198
    %v1815 = vpack.c.b16 %v1207, %v1199
    %v1816 = vpack.c.b16 %v1208, %v1200
    %v1817 = vpack.c.b16 %v1209, %v1201
    %v1818 = vpack.c.b16 %v1210, %v1202
    %v1819 = vpack.c.b16 %v1211, %v1203
    %v1820 = vpack.c.b16 %v1212, %v1204
    %v1821 = vpack.c.b16 %v1213, %v1205
    %v1822 = vpack.c.b16 %v1222, %v1214
    %v1823 = vpack.c.b16 %v1223, %v1215
    %v1824 = vpack.c.b16 %v1224, %v1216
    %v1825 = vpack.c.b16 %v1225, %v1217
    %v1826 = vpack.c.b16 %v1226, %v1218
    %v1827 = vpack.c.b16 %v1227, %v1219
    %v1828 = vpack.c.b16 %v1228, %v1220
    %v1829 = vpack.c.b16 %v1229, %v1221
    %v1830 = vpack.c.b16 %v1238, %v1230
    %v1831 = vpack.c.b16 %v1239, %v1231
    %v1832 = vpack.c.b16 %v1240, %v1232
    %v1833 = vpack.c.b16 %v1241, %v1233
    %v1834 = vpack.c.b16 %v1242, %v1234
    %v1835 = vpack.c.b16 %v1243, %v1235
    %v1836 = vpack.c.b16 %v1244, %v1236
    %v1837 = vpack.c.b16 %v1245, %v1237
    %v1838 = vpack.c.b16 %v1254, %v1246
    %v1839 = vpack.c.b16 %v1255, %v1247
    %v1840 = vpack.c.b16 %v1256, %v1248
    %v1841 = vpack.c.b16 %v1257, %v1249
    %v1842 = vpack.c.b16 %v1258, %v1250
    %v1843 = vpack.c.b16 %v1259, %v1251
    %v1844 = vpack.c.b16 %v1260, %v1252
    %v1845 = vpack.c.b16 %v1261, %v1253
    %v1846 = vpack.c.b16 %v1270, %v1262
    %v1847 = vpack.c.b16 %v1271, %v1263
    %v1848 = vpack.c.b16 %v1272, %v1264
    %v1849 = vpack.c.b16 %v1273, %v1265
    %v1850 = vpack.c.b16 %v1274, %v1266
    %v1851 = vpack.c.b16 %v1275, %v1267
    %v1852 = vpack.c.b16 %v1276, %v1268
    %v1853 = vpack.c.b16 %v1277, %v1269
    %v1854 = vpack.c.b16 %v1286, %v1278
    %v1855 = vpack.c.b16 %v1287, %v1279
    %v1856 = vpack.c.b16 %v1288, %v1280
    %v1857 = vpack.c.b16 %v1289, %v1281
    %v1858 = vpack.c.b16 %v1290, %v1282
    %v1859 = vpack.c.b16 %v1291, %v1283
    %v1860 = vpack.c.b16 %v1292, %v1284
    %v1861 = vpack.c.b16 %v1293, %v1285
    %v1862 = vpack.c.b16 %v1302, %v1294
    %v1863 = vpack.c.b16 %v1303, %v1295
    %v1864 = vpack.c.b16 %v1304, %v1296
    %v1865 = vpack.c.b16 %v1305, %v1297
    %v1866 = vpack.c.b16 %v1306, %v1298
    %v1867 = vpack.c.b16 %v1307, %v1299
    %v1868 = vpack.c.b16 %v1308, %v1300
    %v1869 = vpack.c.b16 %v1309, %v1301
    %v1870 = vpack.c.b16 %v1318, %v1310
    %v1871 = vpack.c.b16 %v1319, %v1311
    %v1872 = vpack.c.b16 %v1320, %v1312
    %v1873 = vpack.c.b16 %v1321, %v1313
    %v1874 = vpack.c.b16 %v1322, %v1314
    %v1875 = vpack.c.b16 %v1323, %v1315
    %v1876 = vpack.c.b16 %v1324, %v1316
    %v1877 = vpack.c.b16 %v1325, %v1317
    %v1878 = vpack.c.b16 %v1334, %v1326
    %v1879 = vpack.c.b16 %v1335, %v1327
    %v1880 = vpack.c.b16 %v1336, %v1328
    %v1881 = vpack.c.b16 %v1337, %v1329
    %v1882 = vpack.c.b16 %v1338, %v1330
    %v1883 = vpack.c.b16 %v1339, %v1331
    %v1884 = vpack.c.b16 %v1340, %v1332
    %v1885 = vpack.c.b16 %v1341, %v1333
    %v1886 = vpack.c.b16 %v1350, %v1342
    %v1887 = vpack.c.b16 %v1351, %v1343
    %v1888 = vpack.c.b16 %v1352, %v1344
    %v1889 = vpack.c.b16 %v1353, %v1345
    %v1890 = vpack.c.b16 %v1354, %v1346
    %v1891 = vpack.c.b16 %v1355, %v1347
    %v1892 = vpack.c.b16 %v1356, %v1348
    %v1893 = vpack.c.b16 %v1357, %v1349
    %v1894 = vpack.c.b16 %v1366, %v1358
    %v1895 = vpack.c.b16 %v1367, %v1359
    %v1896 = vpack.c.b16 %v1368, %v1360
    %v1897 = vpack.c.b16 %v1369, %v1361
    %v1898 = vpack.c.b16 %v1370, %v1362
    %v1899 = vpack.c.b16 %v1371, %v1363
    %v1900 = vpack.c.b16 %v1372, %v1364
    %v1901 = vpack.c.b16 %v1373, %v1365
    %v1902 = vpack.c.b16 %v1382, %v1374
    %v1903 = vpack.c.b16 %v1383, %v1375
    %v1904 = vpack.c.b16 %v1384, %v1376
    %v1905 = vpack.c.b16 %v1385, %v1377
    %v1906 = vpack.c.b16 %v1386, %v1378
    %v1907 = vpack.c.b16 %v1387, %v1379
    %v1908 = vpack.c.b16 %v1388, %v1380
    %v1909 = vpack.c.b16 %v1389, %v1381
    %v1910 = vpack.c.b16 %v1398, %v1390
    %v1911 = vpack.c.b16 %v1399, %v1391
    %v1912 = vpack.c.b16 %v1400, %v1392
    %v1913 = vpack.c.b16 %v1401, %v1393
    %v1914 = vpack.c.b16 %v1402, %v1394
    %v1915 = vpack.c.b16 %v1403, %v1395
    %v1916 = vpack.c.b16 %v1404, %v1396
    %v1917 = vpack.c.b16 %v1405, %v1397
    %v1918 = vpack.c.b16 %v1414, %v1406
    %v1919 = vpack.c.b16 %v1415, %v1407
    %v1920 = vpack.c.b16 %v1416, %v1408
    %v1921 = vpack.c.b16 %v1417, %v1409
    %v1922 = vpack.c.b16 %v1418, %v1410
    %v1923 = vpack.c.b16 %v1419, %v1411
    %v1924 = vpack.c.b16 %v1420, %v1412
    %v1925 = vpack.c.b16 %v1421, %v1413
    %v1926 = vpack.c.b16 %v1430, %v1422
    %v1927 = vpack.c.b16 %v1431, %v1423
    %v1928 = vpack.c.b16 %v1432, %v1424
    %v1929 = vpack.c.b16 %v1433, %v1425
    %v1930 = vpack.c.b16 %v1434, %v1426
    %v1931 = vpack.c.b16 %v1435, %v1427
    %v1932 = vpack.c.b16 %v1436, %v1428
    %v1933 = vpack.c.b16 %v1437, %v1429
    %v1934 = vpack.c.b16 %v1446, %v1438
    %v1935 = vpack.c.b16 %v1447, %v1439
    %v1936 = vpack.c.b16 %v1448, %v1440
    %v1937 = vpack.c.b16 %v1449, %v1441
    %v1938 = vpack.c.b16 %v1450, %v1442
    %v1939 = vpack.c.b16 %v1451, %v1443
    %v1940 = vpack.c.b16 %v1452, %v1444
    %v1941 = vpack.c.b16 %v1453, %v1445
    %v1942 = vpack.c.b16 %v1462, %v1454
    %v1943 = vpack.c.b16 %v1463, %v1455
    %v1944 = vpack.c.b16 %v1464, %v1456
    %v1945 = vpack.c.b16 %v1465, %v1457
    %v1946 = vpack.c.b16 %v1466, %v1458
    %v1947 = vpack.c.b16 %v1467, %v1459
    %v1948 = vpack.c.b16 %v1468, %v1460
    %v1949 = vpack.c.b16 %v1469, %v1461
    %v1950 = vpack.c.b16 %v1478, %v1470
    %v1951 = vpack.c.b16 %v1479, %v1471
    %v1952 = vpack.c.b16 %v1480, %v1472
    %v1953 = vpack.c.b16 %v1481, %v1473
    %v1954 = vpack.c.b16 %v1482, %v1474
    %v1955 = vpack.c.b16 %v1483, %v1475
    %v1956 = vpack.c.b16 %v1484, %v1476
    %v1957 = vpack.c.b16 %v1485, %v1477
    %v1958 = vpack.c.b16 %v1494, %v1486
    %v1959 = vpack.c.b16 %v1495, %v1487
    %v1960 = vpack.c.b16 %v1496, %v1488
    %v1961 = vpack.c.b16 %v1497, %v1489
    %v1962 = vpack.c.b16 %v1498, %v1490
    %v1963 = vpack.c.b16 %v1499, %v1491
    %v1964 = vpack.c.b16 %v1500, %v1492
    %v1965 = vpack.c.b16 %v1501, %v1493
    %v1966 = vpack.c.b16 %v1510, %v1502
    %v1967 = vpack.c.b16 %v1511, %v1503
    %v1968 = vpack.c.b16 %v1512, %v1504
    %v1969 = vpack.c.b16 %v1513, %v1505
    %v1970 = vpack.c.b16 %v1514, %v1506
    %v1971 = vpack.c.b16 %v1515, %v1507
    %v1972 = vpack.c.b16 %v1516, %v1508
    %v1973 = vpack.c.b16 %v1517, %v1509
    %v1974 = vpack.c.b16 %v1526, %v1518
    %v1975 = vpack.c.b16 %v1527, %v1519
    %v1976 = vpack.c.b16 %v1528, %v1520
    %v1977 = vpack.c.b16 %v1529, %v1521
    %v1978 = vpack.c.b16 %v1530, %v1522
    %v1979 = vpack.c.b16 %v1531, %v1523
    %v1980 = vpack.c.b16 %v1532, %v1524
    %v1981 = vpack.c.b16 %v1533, %v1525
    %v1982 = vpack.c.b16 %v1542, %v1534
    %v1983 = vpack.c.b16 %v1543, %v1535
    %v1984 = vpack.c.b16 %v1544, %v1536
    %v1985 = vpack.c.b16 %v1545, %v1537
    %v1986 = vpack.c.b16 %v1546, %v1538
    %v1987 = vpack.c.b16 %v1547, %v1539
    %v1988 = vpack.c.b16 %v1548, %v1540
    %v1989 = vpack.c.b16 %v1549, %v1541
    %v1990 = vpack.c.b16 %v1558, %v1550
    %v1991 = vpack.c.b16 %v1559, %v1551
    %v1992 = vpack.c.b16 %v1560, %v1552
    %v1993 = vpack.c.b16 %v1561, %v1553
    %v1994 = vpack.c.b16 %v1562, %v1554
    %v1995 = vpack.c.b16 %v1563, %v1555
    %v1996 = vpack.c.b16 %v1564, %v1556
    %v1997 = vpack.c.b16 %v1565, %v1557
    %v1998 = vpack.c.b16 %v1574, %v1566
    %v1999 = vpack.c.b16 %v1575, %v1567
    %v2000 = vpack.c.b16 %v1576, %v1568
    %v2001 = vpack.c.b16 %v1577, %v1569
    %v2002 = vpack.c.b16 %v1578, %v1570
    %v2003 = vpack.c.b16 %v1579, %v1571
    %v2004 = vpack.c.b16 %v1580, %v1572
    %v2005 = vpack.c.b16 %v1581, %v1573
    %v2006 = vpack.c.b16 %v1590, %v1582
    %v2007 = vpack.c.b16 %v1591, %v1583
    %v2008 = vpack.c.b16 %v1592, %v1584
    %v2009 = vpack.c.b16 %v1593, %v1585
    %v2010 = vpack.c.b16 %v1594, %v1586
    %v2011 = vpack.c.b16 %v1595, %v1587
    %v2012 = vpack.c.b16 %v1596, %v1588
    %v2013 = vpack.c.b16 %v1597, %v1589
    %v2014 = vpack.c.b16 %v1606, %v1598
    %v2015 = vpack.c.b16 %v1607, %v1599
    %v2016 = vpack.c.b16 %v1608, %v1600
    %v2017 = vpack.c.b16 %v1609, %v1601
    %v2018 = vpack.c.b16 %v1610, %v1602
    %v2019 = vpack.c.b16 %v1611, %v1603
    %v2020 = vpack.c.b16 %v1612, %v1604
    %v2021 = vpack.c.b16 %v1613, %v1605
    %v2022 = vpack.c.b16 %v1622, %v1614
    %v2023 = vpack.c.b16 %v1623, %v1615
    %v2024 = vpack.c.b16 %v1624, %v1616
    %v2025 = vpack.c.b16 %v1625, %v1617
    %v2026 = vpack.c.b16 %v1626, %v1618
    %v2027 = vpack.c.b16 %v1627, %v1619
    %v2028 = vpack.c.b16 %v1628, %v1620
    %v2029 = vpack.c.b16 %v1629, %v1621
    %v2030 = vpack.c.b16 %v1638, %v1630
    %v2031 = vpack.c.b16 %v1639, %v1631
    %v2032 = vpack.c.b16 %v1640, %v1632
    %v2033 = vpack.c.b16 %v1641, %v1633
    %v2034 = vpack.c.b16 %v1642, %v1634
    %v2035 = vpack.c.b16 %v1643, %v1635
    %v2036 = vpack.c.b16 %v1644, %v1636
    %v2037 = vpack.c.b16 %v1645, %v1637
    %vm2430 = vcmask 130048
    %v2432 = vsel %vm2430, %v77, 0
    %2434 = vmatprep.subr.bf16.mxu0 %v1703
    %2435 = vmatpush1.bf16.msra.mxu0 %v1702
    %2436 = vmatprep.subr.bf16.mxu0 %v1695
    %2437 = vmatpush1.bf16.msra.mxu0 %v1694
    %2438 = vmatprep.subr.bf16.mxu0 %v1687
    %2439 = vmatpush1.bf16.msra.mxu0 %v1686
    %2440 = vmatprep.subr.bf16.mxu0 %v1679
    %2441 = vmatpush1.bf16.msra.mxu0 %v1678
    %2442 = vmatprep.subr.bf16.mxu0 %v1671
    %2443 = vmatpush1.bf16.msra.mxu0 %v1670
    %2444 = vmatprep.subr.bf16.mxu0 %v1663
    %2445 = vmatpush1.bf16.msra.mxu0 %v1662
    %2446 = vmatprep.subr.bf16.mxu0 %v1655
    %2447 = vmatpush1.bf16.msra.mxu0 %v1654
    %2448 = vmatprep.subr.bf16.mxu0 %v1647
    %2449 = vmatpush1.bf16.msra.mxu0 %v1646
    %2450 = vmatprep.subr.bf16.mxu0 %v1767
    %2451 = vmatpush2.bf16.msra.mxu0 %v1766
    %2452 = vmatprep.subr.bf16.mxu0 %v1759
    %2453 = vmatpush2.bf16.msra.mxu0 %v1758
    %2454 = vmatprep.subr.bf16.mxu0 %v1751
    %2455 = vmatpush2.bf16.msra.mxu0 %v1750
    %2456 = vmatprep.subr.bf16.mxu0 %v1743
    %2457 = vmatpush2.bf16.msra.mxu0 %v1742
    %2458 = vmatprep.subr.bf16.mxu0 %v1735
    %2459 = vmatpush2.bf16.msra.mxu0 %v1734
    %2460 = vmatprep.subr.bf16.mxu0 %v1727
    %2461 = vmatpush2.bf16.msra.mxu0 %v1726
    %2462 = vmatprep.subr.bf16.mxu0 %v1719
    %2463 = vmatpush2.bf16.msra.mxu0 %v1718
    %2464 = vmatprep.subr.bf16.mxu0 %v1711
    %2465 = vmatpush2.bf16.msra.mxu0 %v1710
    %2466 = vmatprep.mubr.bf16.mxu0 %v72
    %2467 = vmatmul.mubr.bf16.gmra.mxu0 %v71
    %v2468 = vpop.f32.mrf.mxu0
    %v2469 = vadd.f32 0.0, %v2468
    %v2470 = vpop.f32.mrf.mxu0
    %v2471 = vadd.f32 0.0, %v2470
    %v2472 = vpop.f32.mrf.mxu0
    %v2473 = vadd.f32 0.0, %v2472
    %v2474 = vpop.f32.mrf.mxu0
    %v2475 = vadd.f32 0.0, %v2474
    %2476 = vdwg.mxu0
    %2477 = vmatprep.subr.bf16.mxu0 %v1831
    %2478 = vmatpush1.bf16.msra.mxu0 %v1830
    %2479 = vmatprep.subr.bf16.mxu0 %v1823
    %2480 = vmatpush1.bf16.msra.mxu0 %v1822
    %2481 = vmatprep.subr.bf16.mxu0 %v1815
    %2482 = vmatpush1.bf16.msra.mxu0 %v1814
    %2483 = vmatprep.subr.bf16.mxu0 %v1807
    %2484 = vmatpush1.bf16.msra.mxu0 %v1806
    %2485 = vmatprep.subr.bf16.mxu0 %v1799
    %2486 = vmatpush1.bf16.msra.mxu0 %v1798
    %2487 = vmatprep.subr.bf16.mxu0 %v1791
    %2488 = vmatpush1.bf16.msra.mxu0 %v1790
    %2489 = vmatprep.subr.bf16.mxu0 %v1783
    %2490 = vmatpush1.bf16.msra.mxu0 %v1782
    %2491 = vmatprep.subr.bf16.mxu0 %v1775
    %2492 = vmatpush1.bf16.msra.mxu0 %v1774
    %2493 = vmatprep.subr.bf16.mxu0 %v1895
    %2494 = vmatpush2.bf16.msra.mxu0 %v1894
    %2495 = vmatprep.subr.bf16.mxu0 %v1887
    %2496 = vmatpush2.bf16.msra.mxu0 %v1886
    %2497 = vmatprep.subr.bf16.mxu0 %v1879
    %2498 = vmatpush2.bf16.msra.mxu0 %v1878
    %2499 = vmatprep.subr.bf16.mxu0 %v1871
    %2500 = vmatpush2.bf16.msra.mxu0 %v1870
    %2501 = vmatprep.subr.bf16.mxu0 %v1863
    %2502 = vmatpush2.bf16.msra.mxu0 %v1862
    %2503 = vmatprep.subr.bf16.mxu0 %v1855
    %2504 = vmatpush2.bf16.msra.mxu0 %v1854
    %2505 = vmatprep.subr.bf16.mxu0 %v1847
    %2506 = vmatpush2.bf16.msra.mxu0 %v1846
    %2507 = vmatprep.subr.bf16.mxu0 %v1839
    %2508 = vmatpush2.bf16.msra.mxu0 %v1838
    %2509 = vmatprep.mubr.bf16.mxu0 %v74
    %2510 = vmatmul.mubr.bf16.gmra.mxu0 %v73
    %v2511 = vpop.f32.mrf.mxu0
    %v2512 = vadd.f32 %v2469, %v2511
    %v2513 = vpop.f32.mrf.mxu0
    %v2514 = vadd.f32 %v2471, %v2513
    %v2515 = vpop.f32.mrf.mxu0
    %v2516 = vadd.f32 %v2473, %v2515
    %v2517 = vpop.f32.mrf.mxu0
    %v2518 = vadd.f32 %v2475, %v2517
    %2519 = vdwg.mxu0
    %2520 = vmatprep.subr.bf16.mxu0 %v1959
    %2521 = vmatpush1.bf16.msra.mxu0 %v1958
    %2522 = vmatprep.subr.bf16.mxu0 %v1951
    %2523 = vmatpush1.bf16.msra.mxu0 %v1950
    %2524 = vmatprep.subr.bf16.mxu0 %v1943
    %2525 = vmatpush1.bf16.msra.mxu0 %v1942
    %2526 = vmatprep.subr.bf16.mxu0 %v1935
    %2527 = vmatpush1.bf16.msra.mxu0 %v1934
    %2528 = vmatprep.subr.bf16.mxu0 %v1927
    %2529 = vmatpush1.bf16.msra.mxu0 %v1926
    %2530 = vmatprep.subr.bf16.mxu0 %v1919
    %2531 = vmatpush1.bf16.msra.mxu0 %v1918
    %2532 = vmatprep.subr.bf16.mxu0 %v1911
    %2533 = vmatpush1.bf16.msra.mxu0 %v1910
    %2534 = vmatprep.subr.bf16.mxu0 %v1903
    %2535 = vmatpush1.bf16.msra.mxu0 %v1902
    %2536 = vmatprep.subr.bf16.mxu0 %v2023
    %2537 = vmatpush2.bf16.msra.mxu0 %v2022
    %2538 = vmatprep.subr.bf16.mxu0 %v2015
    %2539 = vmatpush2.bf16.msra.mxu0 %v2014
    %2540 = vmatprep.subr.bf16.mxu0 %v2007
    %2541 = vmatpush2.bf16.msra.mxu0 %v2006
    %2542 = vmatprep.subr.bf16.mxu0 %v1999
    %2543 = vmatpush2.bf16.msra.mxu0 %v1998
    %2544 = vmatprep.subr.bf16.mxu0 %v1991
    %2545 = vmatpush2.bf16.msra.mxu0 %v1990
    %2546 = vmatprep.subr.bf16.mxu0 %v1983
    %2547 = vmatpush2.bf16.msra.mxu0 %v1982
    %2548 = vmatprep.subr.bf16.mxu0 %v1975
    %2549 = vmatpush2.bf16.msra.mxu0 %v1974
    %2550 = vmatprep.subr.bf16.mxu0 %v1967
    %2551 = vmatpush2.bf16.msra.mxu0 %v1966
    %2552 = vmatprep.mubr.bf16.mxu0 %v76
    %2553 = vmatmul.mubr.bf16.gmra.mxu0 %v75
    %v2554 = vpop.f32.mrf.mxu0
    %v2555 = vadd.f32 %v2512, %v2554
    %v2556 = vpop.f32.mrf.mxu0
    %v2557 = vadd.f32 %v2514, %v2556
    %v2558 = vpop.f32.mrf.mxu0
    %v2559 = vadd.f32 %v2516, %v2558
    %v2560 = vpop.f32.mrf.mxu0
    %v2561 = vadd.f32 %v2518, %v2560
    %2562 = vdwg.mxu0
    %2563 = vmatprep.subr.bf16.mxu0 0
    %2564 = vmatpush1.bf16.msra.mxu0 0
    %2565 = vmatprep.subr.bf16.mxu0 0
    %2566 = vmatpush1.bf16.msra.mxu0 0
    %2567 = vmatprep.subr.bf16.mxu0 0
    %2568 = vmatpush1.bf16.msra.mxu0 0
    %2569 = vmatprep.subr.bf16.mxu0 0
    %2570 = vmatpush1.bf16.msra.mxu0 0
    %2571 = vmatprep.subr.bf16.mxu0 0
    %2572 = vmatpush1.bf16.msra.mxu0 0
    %2573 = vmatprep.subr.bf16.mxu0 0
    %2574 = vmatpush1.bf16.msra.mxu0 0
    %2575 = vmatprep.subr.bf16.mxu0 0
    %2576 = vmatpush1.bf16.msra.mxu0 0
    %2577 = vmatprep.subr.bf16.mxu0 %v2031
    %2578 = vmatpush1.bf16.msra.mxu0 %v2030
    %2579 = vmatprep.subr.bf16.mxu0 0
    %2580 = vmatpush2.bf16.msra.mxu0 0
    %2581 = vmatprep.subr.bf16.mxu0 0
    %2582 = vmatpush2.bf16.msra.mxu0 0
    %2583 = vmatprep.subr.bf16.mxu0 0
    %2584 = vmatpush2.bf16.msra.mxu0 0
    %2585 = vmatprep.subr.bf16.mxu0 0
    %2586 = vmatpush2.bf16.msra.mxu0 0
    %2587 = vmatprep.subr.bf16.mxu0 0
    %2588 = vmatpush2.bf16.msra.mxu0 0
    %2589 = vmatprep.subr.bf16.mxu0 0
    %2590 = vmatpush2.bf16.msra.mxu0 0
    %2591 = vmatprep.subr.bf16.mxu0 0
    %2592 = vmatpush2.bf16.msra.mxu0 0
    %2593 = vmatprep.subr.bf16.mxu0 0
    %2594 = vmatpush2.bf16.msra.mxu0 0
    %2595 = vmatprep.mubr.bf16.mxu0 0
    %2596 = vmatmul.mubr.bf16.gmra.mxu0 %v2432
    %v2597 = vpop.f32.mrf.mxu0
    %v2598 = vadd.f32 %v2555, %v2597
    %v2599 = vpop.f32.mrf.mxu0
    %v2600 = vadd.f32 %v2557, %v2599
    %v2601 = vpop.f32.mrf.mxu0
    %v2602 = vadd.f32 %v2559, %v2601
    %v2603 = vpop.f32.mrf.mxu0
    %v2604 = vadd.f32 %v2561, %v2603
    %2605 = vdwg.mxu0
    %2606 = vmatprep.subr.bf16.mxu0 %v1705
    %2607 = vmatpush1.bf16.msra.mxu0 %v1704
    %2608 = vmatprep.subr.bf16.mxu0 %v1697
    %2609 = vmatpush1.bf16.msra.mxu0 %v1696
    %2610 = vmatprep.subr.bf16.mxu0 %v1689
    %2611 = vmatpush1.bf16.msra.mxu0 %v1688
    %2612 = vmatprep.subr.bf16.mxu0 %v1681
    %2613 = vmatpush1.bf16.msra.mxu0 %v1680
    %2614 = vmatprep.subr.bf16.mxu0 %v1673
    %2615 = vmatpush1.bf16.msra.mxu0 %v1672
    %2616 = vmatprep.subr.bf16.mxu0 %v1665
    %2617 = vmatpush1.bf16.msra.mxu0 %v1664
    %2618 = vmatprep.subr.bf16.mxu0 %v1657
    %2619 = vmatpush1.bf16.msra.mxu0 %v1656
    %2620 = vmatprep.subr.bf16.mxu0 %v1649
    %2621 = vmatpush1.bf16.msra.mxu0 %v1648
    %2622 = vmatprep.subr.bf16.mxu0 %v1769
    %2623 = vmatpush2.bf16.msra.mxu0 %v1768
    %2624 = vmatprep.subr.bf16.mxu0 %v1761
    %2625 = vmatpush2.bf16.msra.mxu0 %v1760
    %2626 = vmatprep.subr.bf16.mxu0 %v1753
    %2627 = vmatpush2.bf16.msra.mxu0 %v1752
    %2628 = vmatprep.subr.bf16.mxu0 %v1745
    %2629 = vmatpush2.bf16.msra.mxu0 %v1744
    %2630 = vmatprep.subr.bf16.mxu0 %v1737
    %2631 = vmatpush2.bf16.msra.mxu0 %v1736
    %2632 = vmatprep.subr.bf16.mxu0 %v1729
    %2633 = vmatpush2.bf16.msra.mxu0 %v1728
    %2634 = vmatprep.subr.bf16.mxu0 %v1721
    %2635 = vmatpush2.bf16.msra.mxu0 %v1720
    %2636 = vmatprep.subr.bf16.mxu0 %v1713
    %2637 = vmatpush2.bf16.msra.mxu0 %v1712
    %2638 = vmatprep.mubr.bf16.mxu0 %v72
    %2639 = vmatmul.mubr.bf16.gmra.mxu0 %v71
    %v2640 = vpop.f32.mrf.mxu0
    %v2641 = vadd.f32 0.0, %v2640
    %v2642 = vpop.f32.mrf.mxu0
    %v2643 = vadd.f32 0.0, %v2642
    %v2644 = vpop.f32.mrf.mxu0
    %v2645 = vadd.f32 0.0, %v2644
    %v2646 = vpop.f32.mrf.mxu0
    %v2647 = vadd.f32 0.0, %v2646
    %2648 = vdwg.mxu0
    %2649 = vmatprep.subr.bf16.mxu0 %v1833
    %2650 = vmatpush1.bf16.msra.mxu0 %v1832
    %2651 = vmatprep.subr.bf16.mxu0 %v1825
    %2652 = vmatpush1.bf16.msra.mxu0 %v1824
    %2653 = vmatprep.subr.bf16.mxu0 %v1817
    %2654 = vmatpush1.bf16.msra.mxu0 %v1816
    %2655 = vmatprep.subr.bf16.mxu0 %v1809
    %2656 = vmatpush1.bf16.msra.mxu0 %v1808
    %2657 = vmatprep.subr.bf16.mxu0 %v1801
    %2658 = vmatpush1.bf16.msra.mxu0 %v1800
    %2659 = vmatprep.subr.bf16.mxu0 %v1793
    %2660 = vmatpush1.bf16.msra.mxu0 %v1792
    %2661 = vmatprep.subr.bf16.mxu0 %v1785
    %2662 = vmatpush1.bf16.msra.mxu0 %v1784
    %2663 = vmatprep.subr.bf16.mxu0 %v1777
    %2664 = vmatpush1.bf16.msra.mxu0 %v1776
    %2665 = vmatprep.subr.bf16.mxu0 %v1897
    %2666 = vmatpush2.bf16.msra.mxu0 %v1896
    %2667 = vmatprep.subr.bf16.mxu0 %v1889
    %2668 = vmatpush2.bf16.msra.mxu0 %v1888
    %2669 = vmatprep.subr.bf16.mxu0 %v1881
    %2670 = vmatpush2.bf16.msra.mxu0 %v1880
    %2671 = vmatprep.subr.bf16.mxu0 %v1873
    %2672 = vmatpush2.bf16.msra.mxu0 %v1872
    %2673 = vmatprep.subr.bf16.mxu0 %v1865
    %2674 = vmatpush2.bf16.msra.mxu0 %v1864
    %2675 = vmatprep.subr.bf16.mxu0 %v1857
    %2676 = vmatpush2.bf16.msra.mxu0 %v1856
    %2677 = vmatprep.subr.bf16.mxu0 %v1849
    %2678 = vmatpush2.bf16.msra.mxu0 %v1848
    %2679 = vmatprep.subr.bf16.mxu0 %v1841
    %2680 = vmatpush2.bf16.msra.mxu0 %v1840
    %2681 = vmatprep.mubr.bf16.mxu0 %v74
    %2682 = vmatmul.mubr.bf16.gmra.mxu0 %v73
    %v2683 = vpop.f32.mrf.mxu0
    %v2684 = vadd.f32 %v2641, %v2683
    %v2685 = vpop.f32.mrf.mxu0
    %v2686 = vadd.f32 %v2643, %v2685
    %v2687 = vpop.f32.mrf.mxu0
    %v2688 = vadd.f32 %v2645, %v2687
    %v2689 = vpop.f32.mrf.mxu0
    %v2690 = vadd.f32 %v2647, %v2689
    %2691 = vdwg.mxu0
    %2692 = vmatprep.subr.bf16.mxu0 %v1961
    %2693 = vmatpush1.bf16.msra.mxu0 %v1960
    %2694 = vmatprep.subr.bf16.mxu0 %v1953
    %2695 = vmatpush1.bf16.msra.mxu0 %v1952
    %2696 = vmatprep.subr.bf16.mxu0 %v1945
    %2697 = vmatpush1.bf16.msra.mxu0 %v1944
    %2698 = vmatprep.subr.bf16.mxu0 %v1937
    %2699 = vmatpush1.bf16.msra.mxu0 %v1936
    %2700 = vmatprep.subr.bf16.mxu0 %v1929
    %2701 = vmatpush1.bf16.msra.mxu0 %v1928
    %2702 = vmatprep.subr.bf16.mxu0 %v1921
    %2703 = vmatpush1.bf16.msra.mxu0 %v1920
    %2704 = vmatprep.subr.bf16.mxu0 %v1913
    %2705 = vmatpush1.bf16.msra.mxu0 %v1912
    %2706 = vmatprep.subr.bf16.mxu0 %v1905
    %2707 = vmatpush1.bf16.msra.mxu0 %v1904
    %2708 = vmatprep.subr.bf16.mxu0 %v2025
    %2709 = vmatpush2.bf16.msra.mxu0 %v2024
    %2710 = vmatprep.subr.bf16.mxu0 %v2017
    %2711 = vmatpush2.bf16.msra.mxu0 %v2016
    %2712 = vmatprep.subr.bf16.mxu0 %v2009
    %2713 = vmatpush2.bf16.msra.mxu0 %v2008
    %2714 = vmatprep.subr.bf16.mxu0 %v2001
    %2715 = vmatpush2.bf16.msra.mxu0 %v2000
    %2716 = vmatprep.subr.bf16.mxu0 %v1993
    %2717 = vmatpush2.bf16.msra.mxu0 %v1992
    %2718 = vmatprep.subr.bf16.mxu0 %v1985
    %2719 = vmatpush2.bf16.msra.mxu0 %v1984
    %2720 = vmatprep.subr.bf16.mxu0 %v1977
    %2721 = vmatpush2.bf16.msra.mxu0 %v1976
    %2722 = vmatprep.subr.bf16.mxu0 %v1969
    %2723 = vmatpush2.bf16.msra.mxu0 %v1968
    %2724 = vmatprep.mubr.bf16.mxu0 %v76
    %2725 = vmatmul.mubr.bf16.gmra.mxu0 %v75
    %v2726 = vpop.f32.mrf.mxu0
    %v2727 = vadd.f32 %v2684, %v2726
    %v2728 = vpop.f32.mrf.mxu0
    %v2729 = vadd.f32 %v2686, %v2728
    %v2730 = vpop.f32.mrf.mxu0
    %v2731 = vadd.f32 %v2688, %v2730
    %v2732 = vpop.f32.mrf.mxu0
    %v2733 = vadd.f32 %v2690, %v2732
    %2734 = vdwg.mxu0
    %2735 = vmatprep.subr.bf16.mxu0 0
    %2736 = vmatpush1.bf16.msra.mxu0 0
    %2737 = vmatprep.subr.bf16.mxu0 0
    %2738 = vmatpush1.bf16.msra.mxu0 0
    %2739 = vmatprep.subr.bf16.mxu0 0
    %2740 = vmatpush1.bf16.msra.mxu0 0
    %2741 = vmatprep.subr.bf16.mxu0 0
    %2742 = vmatpush1.bf16.msra.mxu0 0
    %2743 = vmatprep.subr.bf16.mxu0 0
    %2744 = vmatpush1.bf16.msra.mxu0 0
    %2745 = vmatprep.subr.bf16.mxu0 0
    %2746 = vmatpush1.bf16.msra.mxu0 0
    %2747 = vmatprep.subr.bf16.mxu0 0
    %2748 = vmatpush1.bf16.msra.mxu0 0
    %2749 = vmatprep.subr.bf16.mxu0 %v2033
    %2750 = vmatpush1.bf16.msra.mxu0 %v2032
    %2751 = vmatprep.subr.bf16.mxu0 0
    %2752 = vmatpush2.bf16.msra.mxu0 0
    %2753 = vmatprep.subr.bf16.mxu0 0
    %2754 = vmatpush2.bf16.msra.mxu0 0
    %2755 = vmatprep.subr.bf16.mxu0 0
    %2756 = vmatpush2.bf16.msra.mxu0 0
    %2757 = vmatprep.subr.bf16.mxu0 0
    %2758 = vmatpush2.bf16.msra.mxu0 0
    %2759 = vmatprep.subr.bf16.mxu0 0
    %2760 = vmatpush2.bf16.msra.mxu0 0
    %2761 = vmatprep.subr.bf16.mxu0 0
    %2762 = vmatpush2.bf16.msra.mxu0 0
    %2763 = vmatprep.subr.bf16.mxu0 0
    %2764 = vmatpush2.bf16.msra.mxu0 0
    %2765 = vmatprep.subr.bf16.mxu0 0
    %2766 = vmatpush2.bf16.msra.mxu0 0
    %2767 = vmatprep.mubr.bf16.mxu0 0
    %2768 = vmatmul.mubr.bf16.gmra.mxu0 %v2432
    %v2769 = vpop.f32.mrf.mxu0
    %v2770 = vadd.f32 %v2727, %v2769
    %v2771 = vpop.f32.mrf.mxu0
    %v2772 = vadd.f32 %v2729, %v2771
    %v2773 = vpop.f32.mrf.mxu0
    %v2774 = vadd.f32 %v2731, %v2773
    %v2775 = vpop.f32.mrf.mxu0
    %v2776 = vadd.f32 %v2733, %v2775
    %2777 = vdwg.mxu0
    %2778 = vmatprep.subr.bf16.mxu0 %v1707
    %2779 = vmatpush1.bf16.msra.mxu0 %v1706
    %2780 = vmatprep.subr.bf16.mxu0 %v1699
    %2781 = vmatpush1.bf16.msra.mxu0 %v1698
    %2782 = vmatprep.subr.bf16.mxu0 %v1691
    %2783 = vmatpush1.bf16.msra.mxu0 %v1690
    %2784 = vmatprep.subr.bf16.mxu0 %v1683
    %2785 = vmatpush1.bf16.msra.mxu0 %v1682
    %2786 = vmatprep.subr.bf16.mxu0 %v1675
    %2787 = vmatpush1.bf16.msra.mxu0 %v1674
    %2788 = vmatprep.subr.bf16.mxu0 %v1667
    %2789 = vmatpush1.bf16.msra.mxu0 %v1666
    %2790 = vmatprep.subr.bf16.mxu0 %v1659
    %2791 = vmatpush1.bf16.msra.mxu0 %v1658
    %2792 = vmatprep.subr.bf16.mxu0 %v1651
    %2793 = vmatpush1.bf16.msra.mxu0 %v1650
    %2794 = vmatprep.subr.bf16.mxu0 %v1771
    %2795 = vmatpush2.bf16.msra.mxu0 %v1770
    %2796 = vmatprep.subr.bf16.mxu0 %v1763
    %2797 = vmatpush2.bf16.msra.mxu0 %v1762
    %2798 = vmatprep.subr.bf16.mxu0 %v1755
    %2799 = vmatpush2.bf16.msra.mxu0 %v1754
    %2800 = vmatprep.subr.bf16.mxu0 %v1747
    %2801 = vmatpush2.bf16.msra.mxu0 %v1746
    %2802 = vmatprep.subr.bf16.mxu0 %v1739
    %2803 = vmatpush2.bf16.msra.mxu0 %v1738
    %2804 = vmatprep.subr.bf16.mxu0 %v1731
    %2805 = vmatpush2.bf16.msra.mxu0 %v1730
    %2806 = vmatprep.subr.bf16.mxu0 %v1723
    %2807 = vmatpush2.bf16.msra.mxu0 %v1722
    %2808 = vmatprep.subr.bf16.mxu0 %v1715
    %2809 = vmatpush2.bf16.msra.mxu0 %v1714
    %2810 = vmatprep.mubr.bf16.mxu0 %v72
    %2811 = vmatmul.mubr.bf16.gmra.mxu0 %v71
    %v2812 = vpop.f32.mrf.mxu0
    %v2813 = vadd.f32 0.0, %v2812
    %v2814 = vpop.f32.mrf.mxu0
    %v2815 = vadd.f32 0.0, %v2814
    %v2816 = vpop.f32.mrf.mxu0
    %v2817 = vadd.f32 0.0, %v2816
    %v2818 = vpop.f32.mrf.mxu0
    %v2819 = vadd.f32 0.0, %v2818
    %2820 = vdwg.mxu0
    %2821 = vmatprep.subr.bf16.mxu0 %v1835
    %2822 = vmatpush1.bf16.msra.mxu0 %v1834
    %2823 = vmatprep.subr.bf16.mxu0 %v1827
    %2824 = vmatpush1.bf16.msra.mxu0 %v1826
    %2825 = vmatprep.subr.bf16.mxu0 %v1819
    %2826 = vmatpush1.bf16.msra.mxu0 %v1818
    %2827 = vmatprep.subr.bf16.mxu0 %v1811
    %2828 = vmatpush1.bf16.msra.mxu0 %v1810
    %2829 = vmatprep.subr.bf16.mxu0 %v1803
    %2830 = vmatpush1.bf16.msra.mxu0 %v1802
    %2831 = vmatprep.subr.bf16.mxu0 %v1795
    %2832 = vmatpush1.bf16.msra.mxu0 %v1794
    %2833 = vmatprep.subr.bf16.mxu0 %v1787
    %2834 = vmatpush1.bf16.msra.mxu0 %v1786
    %2835 = vmatprep.subr.bf16.mxu0 %v1779
    %2836 = vmatpush1.bf16.msra.mxu0 %v1778
    %2837 = vmatprep.subr.bf16.mxu0 %v1899
    %2838 = vmatpush2.bf16.msra.mxu0 %v1898
    %2839 = vmatprep.subr.bf16.mxu0 %v1891
    %2840 = vmatpush2.bf16.msra.mxu0 %v1890
    %2841 = vmatprep.subr.bf16.mxu0 %v1883
    %2842 = vmatpush2.bf16.msra.mxu0 %v1882
    %2843 = vmatprep.subr.bf16.mxu0 %v1875
    %2844 = vmatpush2.bf16.msra.mxu0 %v1874
    %2845 = vmatprep.subr.bf16.mxu0 %v1867
    %2846 = vmatpush2.bf16.msra.mxu0 %v1866
    %2847 = vmatprep.subr.bf16.mxu0 %v1859
    %2848 = vmatpush2.bf16.msra.mxu0 %v1858
    %2849 = vmatprep.subr.bf16.mxu0 %v1851
    %2850 = vmatpush2.bf16.msra.mxu0 %v1850
    %2851 = vmatprep.subr.bf16.mxu0 %v1843
    %2852 = vmatpush2.bf16.msra.mxu0 %v1842
    %2853 = vmatprep.mubr.bf16.mxu0 %v74
    %2854 = vmatmul.mubr.bf16.gmra.mxu0 %v73
    %v2855 = vpop.f32.mrf.mxu0
    %v2856 = vadd.f32 %v2813, %v2855
    %v2857 = vpop.f32.mrf.mxu0
    %v2858 = vadd.f32 %v2815, %v2857
    %v2859 = vpop.f32.mrf.mxu0
    %v2860 = vadd.f32 %v2817, %v2859
    %v2861 = vpop.f32.mrf.mxu0
    %v2862 = vadd.f32 %v2819, %v2861
    %2863 = vdwg.mxu0
    %2864 = vmatprep.subr.bf16.mxu0 %v1963
    %2865 = vmatpush1.bf16.msra.mxu0 %v1962
    %2866 = vmatprep.subr.bf16.mxu0 %v1955
    %2867 = vmatpush1.bf16.msra.mxu0 %v1954
    %2868 = vmatprep.subr.bf16.mxu0 %v1947
    %2869 = vmatpush1.bf16.msra.mxu0 %v1946
    %2870 = vmatprep.subr.bf16.mxu0 %v1939
    %2871 = vmatpush1.bf16.msra.mxu0 %v1938
    %2872 = vmatprep.subr.bf16.mxu0 %v1931
    %2873 = vmatpush1.bf16.msra.mxu0 %v1930
    %2874 = vmatprep.subr.bf16.mxu0 %v1923
    %2875 = vmatpush1.bf16.msra.mxu0 %v1922
    %2876 = vmatprep.subr.bf16.mxu0 %v1915
    %2877 = vmatpush1.bf16.msra.mxu0 %v1914
    %2878 = vmatprep.subr.bf16.mxu0 %v1907
    %2879 = vmatpush1.bf16.msra.mxu0 %v1906
    %2880 = vmatprep.subr.bf16.mxu0 %v2027
    %2881 = vmatpush2.bf16.msra.mxu0 %v2026
    %2882 = vmatprep.subr.bf16.mxu0 %v2019
    %2883 = vmatpush2.bf16.msra.mxu0 %v2018
    %2884 = vmatprep.subr.bf16.mxu0 %v2011
    %2885 = vmatpush2.bf16.msra.mxu0 %v2010
    %2886 = vmatprep.subr.bf16.mxu0 %v2003
    %2887 = vmatpush2.bf16.msra.mxu0 %v2002
    %2888 = vmatprep.subr.bf16.mxu0 %v1995
    %2889 = vmatpush2.bf16.msra.mxu0 %v1994
    %2890 = vmatprep.subr.bf16.mxu0 %v1987
    %2891 = vmatpush2.bf16.msra.mxu0 %v1986
    %2892 = vmatprep.subr.bf16.mxu0 %v1979
    %2893 = vmatpush2.bf16.msra.mxu0 %v1978
    %2894 = vmatprep.subr.bf16.mxu0 %v1971
    %2895 = vmatpush2.bf16.msra.mxu0 %v1970
    %2896 = vmatprep.mubr.bf16.mxu0 %v76
    %2897 = vmatmul.mubr.bf16.gmra.mxu0 %v75
    %v2898 = vpop.f32.mrf.mxu0
    %v2899 = vadd.f32 %v2856, %v2898
    %v2900 = vpop.f32.mrf.mxu0
    %v2901 = vadd.f32 %v2858, %v2900
    %v2902 = vpop.f32.mrf.mxu0
    %v2903 = vadd.f32 %v2860, %v2902
    %v2904 = vpop.f32.mrf.mxu0
    %v2905 = vadd.f32 %v2862, %v2904
    %2906 = vdwg.mxu0
    %2907 = vmatprep.subr.bf16.mxu0 0
    %2908 = vmatpush1.bf16.msra.mxu0 0
    %2909 = vmatprep.subr.bf16.mxu0 0
    %2910 = vmatpush1.bf16.msra.mxu0 0
    %2911 = vmatprep.subr.bf16.mxu0 0
    %2912 = vmatpush1.bf16.msra.mxu0 0
    %2913 = vmatprep.subr.bf16.mxu0 0
    %2914 = vmatpush1.bf16.msra.mxu0 0
    %2915 = vmatprep.subr.bf16.mxu0 0
    %2916 = vmatpush1.bf16.msra.mxu0 0
    %2917 = vmatprep.subr.bf16.mxu0 0
    %2918 = vmatpush1.bf16.msra.mxu0 0
    %2919 = vmatprep.subr.bf16.mxu0 0
    %2920 = vmatpush1.bf16.msra.mxu0 0
    %2921 = vmatprep.subr.bf16.mxu0 %v2035
    %2922 = vmatpush1.bf16.msra.mxu0 %v2034
    %2923 = vmatprep.subr.bf16.mxu0 0
    %2924 = vmatpush2.bf16.msra.mxu0 0
    %2925 = vmatprep.subr.bf16.mxu0 0
    %2926 = vmatpush2.bf16.msra.mxu0 0
    %2927 = vmatprep.subr.bf16.mxu0 0
    %2928 = vmatpush2.bf16.msra.mxu0 0
    %2929 = vmatprep.subr.bf16.mxu0 0
    %2930 = vmatpush2.bf16.msra.mxu0 0
    %2931 = vmatprep.subr.bf16.mxu0 0
    %2932 = vmatpush2.bf16.msra.mxu0 0
    %2933 = vmatprep.subr.bf16.mxu0 0
    %2934 = vmatpush2.bf16.msra.mxu0 0
    %2935 = vmatprep.subr.bf16.mxu0 0
    %2936 = vmatpush2.bf16.msra.mxu0 0
    %2937 = vmatprep.subr.bf16.mxu0 0
    %2938 = vmatpush2.bf16.msra.mxu0 0
    %2939 = vmatprep.mubr.bf16.mxu0 0
    %2940 = vmatmul.mubr.bf16.gmra.mxu0 %v2432
    %v2941 = vpop.f32.mrf.mxu0
    %v2942 = vadd.f32 %v2899, %v2941
    %v2943 = vpop.f32.mrf.mxu0
    %v2944 = vadd.f32 %v2901, %v2943
    %v2945 = vpop.f32.mrf.mxu0
    %v2946 = vadd.f32 %v2903, %v2945
    %v2947 = vpop.f32.mrf.mxu0
    %v2948 = vadd.f32 %v2905, %v2947
    %2949 = vdwg.mxu0
    %2950 = vmatprep.subr.bf16.mxu0 %v1709
    %2951 = vmatpush1.bf16.msra.mxu0 %v1708
    %2952 = vmatprep.subr.bf16.mxu0 %v1701
    %2953 = vmatpush1.bf16.msra.mxu0 %v1700
    %2954 = vmatprep.subr.bf16.mxu0 %v1693
    %2955 = vmatpush1.bf16.msra.mxu0 %v1692
    %2956 = vmatprep.subr.bf16.mxu0 %v1685
    %2957 = vmatpush1.bf16.msra.mxu0 %v1684
    %2958 = vmatprep.subr.bf16.mxu0 %v1677
    %2959 = vmatpush1.bf16.msra.mxu0 %v1676
    %2960 = vmatprep.subr.bf16.mxu0 %v1669
    %2961 = vmatpush1.bf16.msra.mxu0 %v1668
    %2962 = vmatprep.subr.bf16.mxu0 %v1661
    %2963 = vmatpush1.bf16.msra.mxu0 %v1660
    %2964 = vmatprep.subr.bf16.mxu0 %v1653
    %2965 = vmatpush1.bf16.msra.mxu0 %v1652
    %2966 = vmatprep.subr.bf16.mxu0 %v1773
    %2967 = vmatpush2.bf16.msra.mxu0 %v1772
    %2968 = vmatprep.subr.bf16.mxu0 %v1765
    %2969 = vmatpush2.bf16.msra.mxu0 %v1764
    %2970 = vmatprep.subr.bf16.mxu0 %v1757
    %2971 = vmatpush2.bf16.msra.mxu0 %v1756
    %2972 = vmatprep.subr.bf16.mxu0 %v1749
    %2973 = vmatpush2.bf16.msra.mxu0 %v1748
    %2974 = vmatprep.subr.bf16.mxu0 %v1741
    %2975 = vmatpush2.bf16.msra.mxu0 %v1740
    %2976 = vmatprep.subr.bf16.mxu0 %v1733
    %2977 = vmatpush2.bf16.msra.mxu0 %v1732
    %2978 = vmatprep.subr.bf16.mxu0 %v1725
    %2979 = vmatpush2.bf16.msra.mxu0 %v1724
    %2980 = vmatprep.subr.bf16.mxu0 %v1717
    %2981 = vmatpush2.bf16.msra.mxu0 %v1716
    %2982 = vmatprep.mubr.bf16.mxu0 %v72
    %2983 = vmatmul.mubr.bf16.gmra.mxu0 %v71
    %v2984 = vpop.f32.mrf.mxu0
    %v2985 = vadd.f32 0.0, %v2984
    %v2986 = vpop.f32.mrf.mxu0
    %v2987 = vadd.f32 0.0, %v2986
    %v2988 = vpop.f32.mrf.mxu0
    %v2989 = vadd.f32 0.0, %v2988
    %v2990 = vpop.f32.mrf.mxu0
    %v2991 = vadd.f32 0.0, %v2990
    %2992 = vdwg.mxu0
    %2993 = vmatprep.subr.bf16.mxu0 %v1837
    %2994 = vmatpush1.bf16.msra.mxu0 %v1836
    %2995 = vmatprep.subr.bf16.mxu0 %v1829
    %2996 = vmatpush1.bf16.msra.mxu0 %v1828
    %2997 = vmatprep.subr.bf16.mxu0 %v1821
    %2998 = vmatpush1.bf16.msra.mxu0 %v1820
    %2999 = vmatprep.subr.bf16.mxu0 %v1813
    %3000 = vmatpush1.bf16.msra.mxu0 %v1812
    %3001 = vmatprep.subr.bf16.mxu0 %v1805
    %3002 = vmatpush1.bf16.msra.mxu0 %v1804
    %3003 = vmatprep.subr.bf16.mxu0 %v1797
    %3004 = vmatpush1.bf16.msra.mxu0 %v1796
    %3005 = vmatprep.subr.bf16.mxu0 %v1789
    %3006 = vmatpush1.bf16.msra.mxu0 %v1788
    %3007 = vmatprep.subr.bf16.mxu0 %v1781
    %3008 = vmatpush1.bf16.msra.mxu0 %v1780
    %3009 = vmatprep.subr.bf16.mxu0 %v1901
    %3010 = vmatpush2.bf16.msra.mxu0 %v1900
    %3011 = vmatprep.subr.bf16.mxu0 %v1893
    %3012 = vmatpush2.bf16.msra.mxu0 %v1892
    %3013 = vmatprep.subr.bf16.mxu0 %v1885
    %3014 = vmatpush2.bf16.msra.mxu0 %v1884
    %3015 = vmatprep.subr.bf16.mxu0 %v1877
    %3016 = vmatpush2.bf16.msra.mxu0 %v1876
    %3017 = vmatprep.subr.bf16.mxu0 %v1869
    %3018 = vmatpush2.bf16.msra.mxu0 %v1868
    %3019 = vmatprep.subr.bf16.mxu0 %v1861
    %3020 = vmatpush2.bf16.msra.mxu0 %v1860
    %3021 = vmatprep.subr.bf16.mxu0 %v1853
    %3022 = vmatpush2.bf16.msra.mxu0 %v1852
    %3023 = vmatprep.subr.bf16.mxu0 %v1845
    %3024 = vmatpush2.bf16.msra.mxu0 %v1844
    %3025 = vmatprep.mubr.bf16.mxu0 %v74
    %3026 = vmatmul.mubr.bf16.gmra.mxu0 %v73
    %v3027 = vpop.f32.mrf.mxu0
    %v3028 = vadd.f32 %v2985, %v3027
    %v3029 = vpop.f32.mrf.mxu0
    %v3030 = vadd.f32 %v2987, %v3029
    %v3031 = vpop.f32.mrf.mxu0
    %v3032 = vadd.f32 %v2989, %v3031
    %v3033 = vpop.f32.mrf.mxu0
    %v3034 = vadd.f32 %v2991, %v3033
    %3035 = vdwg.mxu0
    %3036 = vmatprep.subr.bf16.mxu0 %v1965
    %3037 = vmatpush1.bf16.msra.mxu0 %v1964
    %3038 = vmatprep.subr.bf16.mxu0 %v1957
    %3039 = vmatpush1.bf16.msra.mxu0 %v1956
    %3040 = vmatprep.subr.bf16.mxu0 %v1949
    %3041 = vmatpush1.bf16.msra.mxu0 %v1948
    %3042 = vmatprep.subr.bf16.mxu0 %v1941
    %3043 = vmatpush1.bf16.msra.mxu0 %v1940
    %3044 = vmatprep.subr.bf16.mxu0 %v1933
    %3045 = vmatpush1.bf16.msra.mxu0 %v1932
    %3046 = vmatprep.subr.bf16.mxu0 %v1925
    %3047 = vmatpush1.bf16.msra.mxu0 %v1924
    %3048 = vmatprep.subr.bf16.mxu0 %v1917
    %3049 = vmatpush1.bf16.msra.mxu0 %v1916
    %3050 = vmatprep.subr.bf16.mxu0 %v1909
    %3051 = vmatpush1.bf16.msra.mxu0 %v1908
    %3052 = vmatprep.subr.bf16.mxu0 %v2029
    %3053 = vmatpush2.bf16.msra.mxu0 %v2028
    %3054 = vmatprep.subr.bf16.mxu0 %v2021
    %3055 = vmatpush2.bf16.msra.mxu0 %v2020
    %3056 = vmatprep.subr.bf16.mxu0 %v2013
    %3057 = vmatpush2.bf16.msra.mxu0 %v2012
    %3058 = vmatprep.subr.bf16.mxu0 %v2005
    %3059 = vmatpush2.bf16.msra.mxu0 %v2004
    %3060 = vmatprep.subr.bf16.mxu0 %v1997
    %3061 = vmatpush2.bf16.msra.mxu0 %v1996
    %3062 = vmatprep.subr.bf16.mxu0 %v1989
    %3063 = vmatpush2.bf16.msra.mxu0 %v1988
    %3064 = vmatprep.subr.bf16.mxu0 %v1981
    %3065 = vmatpush2.bf16.msra.mxu0 %v1980
    %3066 = vmatprep.subr.bf16.mxu0 %v1973
    %3067 = vmatpush2.bf16.msra.mxu0 %v1972
    %3068 = vmatprep.mubr.bf16.mxu0 %v76
    %3069 = vmatmul.mubr.bf16.gmra.mxu0 %v75
    %v3070 = vpop.f32.mrf.mxu0
    %v3071 = vadd.f32 %v3028, %v3070
    %v3072 = vpop.f32.mrf.mxu0
    %v3073 = vadd.f32 %v3030, %v3072
    %v3074 = vpop.f32.mrf.mxu0
    %v3075 = vadd.f32 %v3032, %v3074
    %v3076 = vpop.f32.mrf.mxu0
    %v3077 = vadd.f32 %v3034, %v3076
    %3078 = vdwg.mxu0
    %3079 = vmatprep.subr.bf16.mxu0 0
    %3080 = vmatpush1.bf16.msra.mxu0 0
    %3081 = vmatprep.subr.bf16.mxu0 0
    %3082 = vmatpush1.bf16.msra.mxu0 0
    %3083 = vmatprep.subr.bf16.mxu0 0
    %3084 = vmatpush1.bf16.msra.mxu0 0
    %3085 = vmatprep.subr.bf16.mxu0 0
    %3086 = vmatpush1.bf16.msra.mxu0 0
    %3087 = vmatprep.subr.bf16.mxu0 0
    %3088 = vmatpush1.bf16.msra.mxu0 0
    %3089 = vmatprep.subr.bf16.mxu0 0
    %3090 = vmatpush1.bf16.msra.mxu0 0
    %3091 = vmatprep.subr.bf16.mxu0 0
    %3092 = vmatpush1.bf16.msra.mxu0 0
    %3093 = vmatprep.subr.bf16.mxu0 %v2037
    %3094 = vmatpush1.bf16.msra.mxu0 %v2036
    %3095 = vmatprep.subr.bf16.mxu0 0
    %3096 = vmatpush2.bf16.msra.mxu0 0
    %3097 = vmatprep.subr.bf16.mxu0 0
    %3098 = vmatpush2.bf16.msra.mxu0 0
    %3099 = vmatprep.subr.bf16.mxu0 0
    %3100 = vmatpush2.bf16.msra.mxu0 0
    %3101 = vmatprep.subr.bf16.mxu0 0
    %3102 = vmatpush2.bf16.msra.mxu0 0
    %3103 = vmatprep.subr.bf16.mxu0 0
    %3104 = vmatpush2.bf16.msra.mxu0 0
    %3105 = vmatprep.subr.bf16.mxu0 0
    %3106 = vmatpush2.bf16.msra.mxu0 0
    %3107 = vmatprep.subr.bf16.mxu0 0
    %3108 = vmatpush2.bf16.msra.mxu0 0
    %3109 = vmatprep.subr.bf16.mxu0 0
    %3110 = vmatpush2.bf16.msra.mxu0 0
    %3111 = vmatprep.mubr.bf16.mxu0 0
    %3112 = vmatmul.mubr.bf16.gmra.mxu0 %v2432
    %v3113 = vpop.f32.mrf.mxu0
    %v3114 = vadd.f32 %v3071, %v3113
    %v3115 = vpop.f32.mrf.mxu0
    %v3116 = vadd.f32 %v3073, %v3115
    %v3117 = vpop.f32.mrf.mxu0
    %v3118 = vadd.f32 %v3075, %v3117
    %v3119 = vpop.f32.mrf.mxu0
    %v3120 = vadd.f32 %v3077, %v3119
    %3121 = vdwg.mxu0
    %v3122 = vmax.f32 %v2598, 0.0
    %v3123 = vmax.f32 %v2600, 0.0
    %v3124 = vmax.f32 %v2770, 0.0
    %v3125 = vmax.f32 %v2772, 0.0
    %v3126 = vmax.f32 %v2942, 0.0
    %v3127 = vmax.f32 %v2944, 0.0
    %v3128 = vmax.f32 %v3114, 0.0
    %v3129 = vmax.f32 %v3116, 0.0
    %v3130 = vmax.f32 %v2602, 0.0
    %v3131 = vmax.f32 %v2604, 0.0
    %v3132 = vmax.f32 %v2774, 0.0
    %v3133 = vmax.f32 %v2776, 0.0
    %v3134 = vmax.f32 %v2946, 0.0
    %v3135 = vmax.f32 %v2948, 0.0
    %v3136 = vmax.f32 %v3118, 0.0
    %v3137 = vmax.f32 %v3120, 0.0
    %v3138 = vpack.c.bf16 %v3130, %v3122
    %v3139 = vpack.c.bf16 %v3131, %v3123
    %v3140 = vpack.c.bf16 %v3132, %v3124
    %v3141 = vpack.c.bf16 %v3133, %v3125
    %v3142 = vpack.c.bf16 %v3134, %v3126
    %v3143 = vpack.c.bf16 %v3135, %v3127
    %v3144 = vpack.c.bf16 %v3136, %v3128
    %v3145 = vpack.c.bf16 %v3137, %v3129
    %v3146 = vld [vmem:[#allocation4] sm:$0xf]
    %v3147 = vld [vmem:[#allocation4 + $0x4] sm:$0xf]
    %v3148 = vld [vmem:[#allocation4 + $0x8] sm:$0xf]
    %v3149 = vld [vmem:[#allocation4 + $0xc] sm:$0xf]
    %v3150 = vld [vmem:[#allocation4 + $0x10] sm:$0xf]
    %v3151 = vld [vmem:[#allocation4 + $0x14] sm:$0xf]
    %v3152 = vld [vmem:[#allocation4 + $0x18] sm:$0xf]
    %v3153 = vld [vmem:[#allocation4 + $0x1c] sm:$0xf]
    %v3154 = vld [vmem:[#allocation4 + $0x20] sm:$0xf]
    %v3155 = vld [vmem:[#allocation4 + $0x24] sm:$0xf]
    %v3156 = vld [vmem:[#allocation4 + $0x28] sm:$0xf]
    %v3157 = vld [vmem:[#allocation4 + $0x2c] sm:$0xf]
    %v3158 = vld [vmem:[#allocation4 + $0x30] sm:$0xf]
    %v3159 = vld [vmem:[#allocation4 + $0x34] sm:$0xf]
    %v3160 = vld [vmem:[#allocation4 + $0x38] sm:$0xf]
    %v3161 = vld [vmem:[#allocation4 + $0x3c] sm:$0xf]
    %v3162 = vld [vmem:[#allocation4 + $0x40] sm:$0xf]
    %v3163 = vld [vmem:[#allocation4 + $0x44] sm:$0xf]
    %v3164 = vld [vmem:[#allocation4 + $0x48] sm:$0xf]
    %v3165 = vld [vmem:[#allocation4 + $0x4c] sm:$0xf]
    %v3166 = vld [vmem:[#allocation4 + $0x50] sm:$0xf]
    %v3167 = vld [vmem:[#allocation4 + $0x54] sm:$0xf]
    %v3168 = vld [vmem:[#allocation4 + $0x58] sm:$0xf]
    %v3169 = vld [vmem:[#allocation4 + $0x5c] sm:$0xf]
    %v3170 = vld [vmem:[#allocation4 + $0x60] sm:$0xf]
    %v3171 = vld [vmem:[#allocation4 + $0x64] sm:$0xf]
    %v3172 = vld [vmem:[#allocation4 + $0x68] sm:$0xf]
    %v3173 = vld [vmem:[#allocation4 + $0x6c] sm:$0xf]
    %v3174 = vld [vmem:[#allocation4 + $0x70] sm:$0xf]
    %v3175 = vld [vmem:[#allocation4 + $0x74] sm:$0xf]
    %v3176 = vld [vmem:[#allocation4 + $0x78] sm:$0xf]
    %v3177 = vld [vmem:[#allocation4 + $0x7c] sm:$0xf]
    %v3178 = vld [vmem:[#allocation4 + $0x80] sm:$0xf]
    %v3179 = vld [vmem:[#allocation4 + $0x84] sm:$0xf]
    %v3180 = vld [vmem:[#allocation4 + $0x88] sm:$0xf]
    %v3181 = vld [vmem:[#allocation4 + $0x8c] sm:$0xf]
    %v3182 = vld [vmem:[#allocation4 + $0x90] sm:$0xf]
    %v3183 = vld [vmem:[#allocation4 + $0x94] sm:$0xf]
    %v3184 = vld [vmem:[#allocation4 + $0x98] sm:$0xf]
    %v3185 = vld [vmem:[#allocation4 + $0x9c] sm:$0xf]
    %v3186 = vld [vmem:[#allocation4 + $0xa0] sm:$0xf]
    %v3187 = vld [vmem:[#allocation4 + $0xa4] sm:$0xf]
    %v3188 = vld [vmem:[#allocation4 + $0xa8] sm:$0xf]
    %v3189 = vld [vmem:[#allocation4 + $0xac] sm:$0xf]
    %v3190 = vld [vmem:[#allocation4 + $0xb0] sm:$0xf]
    %v3191 = vld [vmem:[#allocation4 + $0xb4] sm:$0xf]
    %v3192 = vld [vmem:[#allocation4 + $0xb8] sm:$0xf]
    %v3193 = vld [vmem:[#allocation4 + $0xbc] sm:$0xf]
    %v3194 = vld [vmem:[#allocation4 + $0xc0] sm:$0xf]
    %v3195 = vld [vmem:[#allocation4 + $0xc4] sm:$0xf]
    %v3196 = vld [vmem:[#allocation4 + $0xc8] sm:$0xf]
    %v3197 = vld [vmem:[#allocation4 + $0xcc] sm:$0xf]
    %v3198 = vld [vmem:[#allocation4 + $0xd0] sm:$0xf]
    %v3199 = vld [vmem:[#allocation4 + $0xd4] sm:$0xf]
    %v3200 = vld [vmem:[#allocation4 + $0xd8] sm:$0xf]
    %v3201 = vld [vmem:[#allocation4 + $0xdc] sm:$0xf]
    %v3202 = vld [vmem:[#allocation4 + $0xe0] sm:$0xf]
    %v3203 = vld [vmem:[#allocation4 + $0xe4] sm:$0xf]
    %v3204 = vld [vmem:[#allocation4 + $0xe8] sm:$0xf]
    %v3205 = vld [vmem:[#allocation4 + $0xec] sm:$0xf]
    %v3206 = vld [vmem:[#allocation4 + $0xf0] sm:$0xf]
    %v3207 = vld [vmem:[#allocation4 + $0xf4] sm:$0xf]
    %v3208 = vld [vmem:[#allocation4 + $0xf8] sm:$0xf]
    %v3209 = vld [vmem:[#allocation4 + $0xfc] sm:$0xf]
    %v3210 = vld [vmem:[#allocation4 + $0x100] sm:$0xf]
    %v3211 = vld [vmem:[#allocation4 + $0x104] sm:$0xf]
    %v3212 = vld [vmem:[#allocation4 + $0x108] sm:$0xf]
    %v3213 = vld [vmem:[#allocation4 + $0x10c] sm:$0xf]
    %v3214 = vld [vmem:[#allocation4 + $0x110] sm:$0xf]
    %v3215 = vld [vmem:[#allocation4 + $0x114] sm:$0xf]
    %v3216 = vld [vmem:[#allocation4 + $0x118] sm:$0xf]
    %v3217 = vld [vmem:[#allocation4 + $0x11c] sm:$0xf]
    %v3218 = vld [vmem:[#allocation4 + $0x120] sm:$0xf]
    %v3219 = vld [vmem:[#allocation4 + $0x124] sm:$0xf]
    %v3220 = vld [vmem:[#allocation4 + $0x128] sm:$0xf]
    %v3221 = vld [vmem:[#allocation4 + $0x12c] sm:$0xf]
    %v3222 = vld [vmem:[#allocation4 + $0x130] sm:$0xf]
    %v3223 = vld [vmem:[#allocation4 + $0x134] sm:$0xf]
    %v3224 = vld [vmem:[#allocation4 + $0x138] sm:$0xf]
    %v3225 = vld [vmem:[#allocation4 + $0x13c] sm:$0xf]
    %v3226 = vld [vmem:[#allocation4 + $0x140] sm:$0xf]
    %v3227 = vld [vmem:[#allocation4 + $0x144] sm:$0xf]
    %v3228 = vld [vmem:[#allocation4 + $0x148] sm:$0xf]
    %v3229 = vld [vmem:[#allocation4 + $0x14c] sm:$0xf]
    %v3230 = vld [vmem:[#allocation4 + $0x150] sm:$0xf]
    %v3231 = vld [vmem:[#allocation4 + $0x154] sm:$0xf]
    %v3232 = vld [vmem:[#allocation4 + $0x158] sm:$0xf]
    %v3233 = vld [vmem:[#allocation4 + $0x15c] sm:$0xf]
    %v3234 = vld [vmem:[#allocation4 + $0x160] sm:$0xf]
    %v3235 = vld [vmem:[#allocation4 + $0x164] sm:$0xf]
    %v3236 = vld [vmem:[#allocation4 + $0x168] sm:$0xf]
    %v3237 = vld [vmem:[#allocation4 + $0x16c] sm:$0xf]
    %v3238 = vld [vmem:[#allocation4 + $0x170] sm:$0xf]
    %v3239 = vld [vmem:[#allocation4 + $0x174] sm:$0xf]
    %v3240 = vld [vmem:[#allocation4 + $0x178] sm:$0xf]
    %v3241 = vld [vmem:[#allocation4 + $0x17c] sm:$0xf]
    %v3242 = vld [vmem:[#allocation4 + $0x180] sm:$0xf]
    %v3243 = vld [vmem:[#allocation4 + $0x184] sm:$0xf]
    %v3244 = vld [vmem:[#allocation4 + $0x188] sm:$0xf]
    %v3245 = vld [vmem:[#allocation4 + $0x18c] sm:$0xf]
    %v3246 = vld [vmem:[#allocation4 + $0x190] sm:$0xf]
    %v3247 = vld [vmem:[#allocation4 + $0x194] sm:$0xf]
    %v3248 = vld [vmem:[#allocation4 + $0x198] sm:$0xf]
    %v3249 = vld [vmem:[#allocation4 + $0x19c] sm:$0xf]
    %v3250 = vld [vmem:[#allocation4 + $0x1a0] sm:$0xf]
    %v3251 = vld [vmem:[#allocation4 + $0x1a4] sm:$0xf]
    %v3252 = vld [vmem:[#allocation4 + $0x1a8] sm:$0xf]
    %v3253 = vld [vmem:[#allocation4 + $0x1ac] sm:$0xf]
    %v3254 = vld [vmem:[#allocation4 + $0x1b0] sm:$0xf]
    %v3255 = vld [vmem:[#allocation4 + $0x1b4] sm:$0xf]
    %v3256 = vld [vmem:[#allocation4 + $0x1b8] sm:$0xf]
    %v3257 = vld [vmem:[#allocation4 + $0x1bc] sm:$0xf]
    %v3258 = vld [vmem:[#allocation4 + $0x1c0] sm:$0xf]
    %v3259 = vld [vmem:[#allocation4 + $0x1c4] sm:$0xf]
    %v3260 = vld [vmem:[#allocation4 + $0x1c8] sm:$0xf]
    %v3261 = vld [vmem:[#allocation4 + $0x1cc] sm:$0xf]
    %v3262 = vld [vmem:[#allocation4 + $0x1d0] sm:$0xf]
    %v3263 = vld [vmem:[#allocation4 + $0x1d4] sm:$0xf]
    %v3264 = vld [vmem:[#allocation4 + $0x1d8] sm:$0xf]
    %v3265 = vld [vmem:[#allocation4 + $0x1dc] sm:$0xf]
    %v3266 = vld [vmem:[#allocation4 + $0x1e0] sm:$0xf]
    %v3267 = vld [vmem:[#allocation4 + $0x1e4] sm:$0xf]
    %v3268 = vld [vmem:[#allocation4 + $0x1e8] sm:$0xf]
    %v3269 = vld [vmem:[#allocation4 + $0x1ec] sm:$0xf]
    %v3270 = vld [vmem:[#allocation4 + $0x1f0] sm:$0xf]
    %v3271 = vld [vmem:[#allocation4 + $0x1f4] sm:$0xf]
    %v3272 = vld [vmem:[#allocation4 + $0x1f8] sm:$0xf]
    %v3273 = vld [vmem:[#allocation4 + $0x1fc] sm:$0xf]
    %v3274 = vld [vmem:[#allocation6] sm:$0x1]
    %v3276 = vlaneseq
    %v3277 = vshrl.u32 %v3276, 7
    %v3278 = vsub.s32 0, %v3277
    %v3279 = vrot.slane %v3274, %v3278
    %v3409 = vunpack.c.l.b16 %v3146
    %v3410 = vunpack.c.l.b16 %v3147
    %v3411 = vunpack.c.l.b16 %v3148
    %v3412 = vunpack.c.l.b16 %v3149
    %v3413 = vunpack.c.l.b16 %v3150
    %v3414 = vunpack.c.l.b16 %v3151
    %v3415 = vunpack.c.l.b16 %v3152
    %v3416 = vunpack.c.l.b16 %v3153
    %v3417 = vunpack.c.l.b16 %v3154
    %v3418 = vunpack.c.l.b16 %v3155
    %v3419 = vunpack.c.l.b16 %v3156
    %v3420 = vunpack.c.l.b16 %v3157
    %v3421 = vunpack.c.l.b16 %v3158
    %v3422 = vunpack.c.l.b16 %v3159
    %v3423 = vunpack.c.l.b16 %v3160
    %v3424 = vunpack.c.l.b16 %v3161
    %v3425 = vunpack.c.l.b16 %v3162
    %v3426 = vunpack.c.l.b16 %v3163
    %v3427 = vunpack.c.l.b16 %v3164
    %v3428 = vunpack.c.l.b16 %v3165
    %v3429 = vunpack.c.l.b16 %v3166
    %v3430 = vunpack.c.l.b16 %v3167
    %v3431 = vunpack.c.l.b16 %v3168
    %v3432 = vunpack.c.l.b16 %v3169
    %v3433 = vunpack.c.l.b16 %v3170
    %v3434 = vunpack.c.l.b16 %v3171
    %v3435 = vunpack.c.l.b16 %v3172
    %v3436 = vunpack.c.l.b16 %v3173
    %v3437 = vunpack.c.l.b16 %v3174
    %v3438 = vunpack.c.l.b16 %v3175
    %v3439 = vunpack.c.l.b16 %v3176
    %v3440 = vunpack.c.l.b16 %v3177
    %v3441 = vunpack.c.l.b16 %v3178
    %v3442 = vunpack.c.l.b16 %v3179
    %v3443 = vunpack.c.l.b16 %v3180
    %v3444 = vunpack.c.l.b16 %v3181
    %v3445 = vunpack.c.l.b16 %v3182
    %v3446 = vunpack.c.l.b16 %v3183
    %v3447 = vunpack.c.l.b16 %v3184
    %v3448 = vunpack.c.l.b16 %v3185
    %v3449 = vunpack.c.l.b16 %v3186
    %v3450 = vunpack.c.l.b16 %v3187
    %v3451 = vunpack.c.l.b16 %v3188
    %v3452 = vunpack.c.l.b16 %v3189
    %v3453 = vunpack.c.l.b16 %v3190
    %v3454 = vunpack.c.l.b16 %v3191
    %v3455 = vunpack.c.l.b16 %v3192
    %v3456 = vunpack.c.l.b16 %v3193
    %v3457 = vunpack.c.l.b16 %v3194
    %v3458 = vunpack.c.l.b16 %v3195
    %v3459 = vunpack.c.l.b16 %v3196
    %v3460 = vunpack.c.l.b16 %v3197
    %v3461 = vunpack.c.l.b16 %v3198
    %v3462 = vunpack.c.l.b16 %v3199
    %v3463 = vunpack.c.l.b16 %v3200
    %v3464 = vunpack.c.l.b16 %v3201
    %v3465 = vunpack.c.l.b16 %v3202
    %v3466 = vunpack.c.l.b16 %v3203
    %v3467 = vunpack.c.l.b16 %v3204
    %v3468 = vunpack.c.l.b16 %v3205
    %v3469 = vunpack.c.l.b16 %v3206
    %v3470 = vunpack.c.l.b16 %v3207
    %v3471 = vunpack.c.l.b16 %v3208
    %v3472 = vunpack.c.l.b16 %v3209
    %v3473 = vunpack.c.l.b16 %v3210
    %v3474 = vunpack.c.l.b16 %v3211
    %v3475 = vunpack.c.l.b16 %v3212
    %v3476 = vunpack.c.l.b16 %v3213
    %v3477 = vunpack.c.l.b16 %v3214
    %v3478 = vunpack.c.l.b16 %v3215
    %v3479 = vunpack.c.l.b16 %v3216
    %v3480 = vunpack.c.l.b16 %v3217
    %v3481 = vunpack.c.l.b16 %v3218
    %v3482 = vunpack.c.l.b16 %v3219
    %v3483 = vunpack.c.l.b16 %v3220
    %v3484 = vunpack.c.l.b16 %v3221
    %v3485 = vunpack.c.l.b16 %v3222
    %v3486 = vunpack.c.l.b16 %v3223
    %v3487 = vunpack.c.l.b16 %v3224
    %v3488 = vunpack.c.l.b16 %v3225
    %v3489 = vunpack.c.l.b16 %v3226
    %v3490 = vunpack.c.l.b16 %v3227
    %v3491 = vunpack.c.l.b16 %v3228
    %v3492 = vunpack.c.l.b16 %v3229
    %v3493 = vunpack.c.l.b16 %v3230
    %v3494 = vunpack.c.l.b16 %v3231
    %v3495 = vunpack.c.l.b16 %v3232
    %v3496 = vunpack.c.l.b16 %v3233
    %v3497 = vunpack.c.l.b16 %v3234
    %v3498 = vunpack.c.l.b16 %v3235
    %v3499 = vunpack.c.l.b16 %v3236
    %v3500 = vunpack.c.l.b16 %v3237
    %v3501 = vunpack.c.l.b16 %v3238
    %v3502 = vunpack.c.l.b16 %v3239
    %v3503 = vunpack.c.l.b16 %v3240
    %v3504 = vunpack.c.l.b16 %v3241
    %v3505 = vunpack.c.l.b16 %v3242
    %v3506 = vunpack.c.l.b16 %v3243
    %v3507 = vunpack.c.l.b16 %v3244
    %v3508 = vunpack.c.l.b16 %v3245
    %v3509 = vunpack.c.l.b16 %v3246
    %v3510 = vunpack.c.l.b16 %v3247
    %v3511 = vunpack.c.l.b16 %v3248
    %v3512 = vunpack.c.l.b16 %v3249
    %v3513 = vunpack.c.l.b16 %v3250
    %v3514 = vunpack.c.l.b16 %v3251
    %v3515 = vunpack.c.l.b16 %v3252
    %v3516 = vunpack.c.l.b16 %v3253
    %v3517 = vunpack.c.l.b16 %v3254
    %v3518 = vunpack.c.l.b16 %v3255
    %v3519 = vunpack.c.l.b16 %v3256
    %v3520 = vunpack.c.l.b16 %v3257
    %v3521 = vunpack.c.l.b16 %v3258
    %v3522 = vunpack.c.l.b16 %v3259
    %v3523 = vunpack.c.l.b16 %v3260
    %v3524 = vunpack.c.l.b16 %v3261
    %v3525 = vunpack.c.l.b16 %v3262
    %v3526 = vunpack.c.l.b16 %v3263
    %v3527 = vunpack.c.l.b16 %v3264
    %v3528 = vunpack.c.l.b16 %v3265
    %v3529 = vunpack.c.l.b16 %v3266
    %v3530 = vunpack.c.l.b16 %v3267
    %v3531 = vunpack.c.l.b16 %v3268
    %v3532 = vunpack.c.l.b16 %v3269
    %v3533 = vunpack.c.l.b16 %v3270
    %v3534 = vunpack.c.l.b16 %v3271
    %v3535 = vunpack.c.l.b16 %v3272
    %v3536 = vunpack.c.l.b16 %v3273
    %v3537 = vpack.c.b16 %v3410, %v3409
    %v3538 = vpack.c.b16 %v3412, %v3411
    %v3539 = vpack.c.b16 %v3414, %v3413
    %v3540 = vpack.c.b16 %v3416, %v3415
    %v3541 = vpack.c.b16 %v3418, %v3417
    %v3542 = vpack.c.b16 %v3420, %v3419
    %v3543 = vpack.c.b16 %v3422, %v3421
    %v3544 = vpack.c.b16 %v3424, %v3423
    %v3545 = vpack.c.b16 %v3426, %v3425
    %v3546 = vpack.c.b16 %v3428, %v3427
    %v3547 = vpack.c.b16 %v3430, %v3429
    %v3548 = vpack.c.b16 %v3432, %v3431
    %v3549 = vpack.c.b16 %v3434, %v3433
    %v3550 = vpack.c.b16 %v3436, %v3435
    %v3551 = vpack.c.b16 %v3438, %v3437
    %v3552 = vpack.c.b16 %v3440, %v3439
    %v3553 = vpack.c.b16 %v3442, %v3441
    %v3554 = vpack.c.b16 %v3444, %v3443
    %v3555 = vpack.c.b16 %v3446, %v3445
    %v3556 = vpack.c.b16 %v3448, %v3447
    %v3557 = vpack.c.b16 %v3450, %v3449
    %v3558 = vpack.c.b16 %v3452, %v3451
    %v3559 = vpack.c.b16 %v3454, %v3453
    %v3560 = vpack.c.b16 %v3456, %v3455
    %v3561 = vpack.c.b16 %v3458, %v3457
    %v3562 = vpack.c.b16 %v3460, %v3459
    %v3563 = vpack.c.b16 %v3462, %v3461
    %v3564 = vpack.c.b16 %v3464, %v3463
    %v3565 = vpack.c.b16 %v3466, %v3465
    %v3566 = vpack.c.b16 %v3468, %v3467
    %v3567 = vpack.c.b16 %v3470, %v3469
    %v3568 = vpack.c.b16 %v3472, %v3471
    %v3569 = vpack.c.b16 %v3474, %v3473
    %v3570 = vpack.c.b16 %v3476, %v3475
    %v3571 = vpack.c.b16 %v3478, %v3477
    %v3572 = vpack.c.b16 %v3480, %v3479
    %v3573 = vpack.c.b16 %v3482, %v3481
    %v3574 = vpack.c.b16 %v3484, %v3483
    %v3575 = vpack.c.b16 %v3486, %v3485
    %v3576 = vpack.c.b16 %v3488, %v3487
    %v3577 = vpack.c.b16 %v3490, %v3489
    %v3578 = vpack.c.b16 %v3492, %v3491
    %v3579 = vpack.c.b16 %v3494, %v3493
    %v3580 = vpack.c.b16 %v3496, %v3495
    %v3581 = vpack.c.b16 %v3498, %v3497
    %v3582 = vpack.c.b16 %v3500, %v3499
    %v3583 = vpack.c.b16 %v3502, %v3501
    %v3584 = vpack.c.b16 %v3504, %v3503
    %v3585 = vpack.c.b16 %v3506, %v3505
    %v3586 = vpack.c.b16 %v3508, %v3507
    %v3587 = vpack.c.b16 %v3510, %v3509
    %v3588 = vpack.c.b16 %v3512, %v3511
    %v3589 = vpack.c.b16 %v3514, %v3513
    %v3590 = vpack.c.b16 %v3516, %v3515
    %v3591 = vpack.c.b16 %v3518, %v3517
    %v3592 = vpack.c.b16 %v3520, %v3519
    %v3593 = vpack.c.b16 %v3522, %v3521
    %v3594 = vpack.c.b16 %v3524, %v3523
    %v3595 = vpack.c.b16 %v3526, %v3525
    %v3596 = vpack.c.b16 %v3528, %v3527
    %v3597 = vpack.c.b16 %v3530, %v3529
    %v3598 = vpack.c.b16 %v3532, %v3531
    %v3599 = vpack.c.b16 %v3534, %v3533
    %v3600 = vpack.c.b16 %v3536, %v3535
    %3665 = vmatprep.subr.bf16.mxu0 0
    %3666 = vmatpush1.bf16.msra.mxu0 %v3544
    %3667 = vmatprep.subr.bf16.mxu0 0
    %3668 = vmatpush1.bf16.msra.mxu0 %v3543
    %3669 = vmatprep.subr.bf16.mxu0 0
    %3670 = vmatpush1.bf16.msra.mxu0 %v3542
    %3671 = vmatprep.subr.bf16.mxu0 0
    %3672 = vmatpush1.bf16.msra.mxu0 %v3541
    %3673 = vmatprep.subr.bf16.mxu0 0
    %3674 = vmatpush1.bf16.msra.mxu0 %v3540
    %3675 = vmatprep.subr.bf16.mxu0 0
    %3676 = vmatpush1.bf16.msra.mxu0 %v3539
    %3677 = vmatprep.subr.bf16.mxu0 0
    %3678 = vmatpush1.bf16.msra.mxu0 %v3538
    %3679 = vmatprep.subr.bf16.mxu0 0
    %3680 = vmatpush1.bf16.msra.mxu0 %v3537
    %3681 = vmatprep.subr.bf16.mxu0 0
    %3682 = vmatpush2.bf16.msra.mxu0 %v3552
    %3683 = vmatprep.subr.bf16.mxu0 0
    %3684 = vmatpush2.bf16.msra.mxu0 %v3551
    %3685 = vmatprep.subr.bf16.mxu0 0
    %3686 = vmatpush2.bf16.msra.mxu0 %v3550
    %3687 = vmatprep.subr.bf16.mxu0 0
    %3688 = vmatpush2.bf16.msra.mxu0 %v3549
    %3689 = vmatprep.subr.bf16.mxu0 0
    %3690 = vmatpush2.bf16.msra.mxu0 %v3548
    %3691 = vmatprep.subr.bf16.mxu0 0
    %3692 = vmatpush2.bf16.msra.mxu0 %v3547
    %3693 = vmatprep.subr.bf16.mxu0 0
    %3694 = vmatpush2.bf16.msra.mxu0 %v3546
    %3695 = vmatprep.subr.bf16.mxu0 0
    %3696 = vmatpush2.bf16.msra.mxu0 %v3545
    %3697 = vmatprep.mubr.bf16.mxu0 %v3139
    %3698 = vmatmul.mubr.bf16.gmra.mxu0 %v3138
    %v3699 = vpop.f32.mrf.mxu0
    %v3700 = vadd.f32 %v3279, %v3699
    %v3701 = vpop.f32.mrf.mxu0
    %v3702 = vpop.f32.mrf.mxu0
    %v3703 = vadd.f32 %v3279, %v3702
    %v3704 = vpop.f32.mrf.mxu0
    %3705 = vdwg.mxu0
    %3706 = vmatprep.subr.bf16.mxu0 0
    %3707 = vmatpush1.bf16.msra.mxu0 %v3560
    %3708 = vmatprep.subr.bf16.mxu0 0
    %3709 = vmatpush1.bf16.msra.mxu0 %v3559
    %3710 = vmatprep.subr.bf16.mxu0 0
    %3711 = vmatpush1.bf16.msra.mxu0 %v3558
    %3712 = vmatprep.subr.bf16.mxu0 0
    %3713 = vmatpush1.bf16.msra.mxu0 %v3557
    %3714 = vmatprep.subr.bf16.mxu0 0
    %3715 = vmatpush1.bf16.msra.mxu0 %v3556
    %3716 = vmatprep.subr.bf16.mxu0 0
    %3717 = vmatpush1.bf16.msra.mxu0 %v3555
    %3718 = vmatprep.subr.bf16.mxu0 0
    %3719 = vmatpush1.bf16.msra.mxu0 %v3554
    %3720 = vmatprep.subr.bf16.mxu0 0
    %3721 = vmatpush1.bf16.msra.mxu0 %v3553
    %3722 = vmatprep.subr.bf16.mxu0 0
    %3723 = vmatpush2.bf16.msra.mxu0 %v3568
    %3724 = vmatprep.subr.bf16.mxu0 0
    %3725 = vmatpush2.bf16.msra.mxu0 %v3567
    %3726 = vmatprep.subr.bf16.mxu0 0
    %3727 = vmatpush2.bf16.msra.mxu0 %v3566
    %3728 = vmatprep.subr.bf16.mxu0 0
    %3729 = vmatpush2.bf16.msra.mxu0 %v3565
    %3730 = vmatprep.subr.bf16.mxu0 0
    %3731 = vmatpush2.bf16.msra.mxu0 %v3564
    %3732 = vmatprep.subr.bf16.mxu0 0
    %3733 = vmatpush2.bf16.msra.mxu0 %v3563
    %3734 = vmatprep.subr.bf16.mxu0 0
    %3735 = vmatpush2.bf16.msra.mxu0 %v3562
    %3736 = vmatprep.subr.bf16.mxu0 0
    %3737 = vmatpush2.bf16.msra.mxu0 %v3561
    %3738 = vmatprep.mubr.bf16.mxu0 %v3141
    %3739 = vmatmul.mubr.bf16.gmra.mxu0 %v3140
    %v3740 = vpop.f32.mrf.mxu0
    %v3741 = vadd.f32 %v3700, %v3740
    %v3742 = vpop.f32.mrf.mxu0
    %v3743 = vpop.f32.mrf.mxu0
    %v3744 = vadd.f32 %v3703, %v3743
    %v3745 = vpop.f32.mrf.mxu0
    %3746 = vdwg.mxu0
    %3747 = vmatprep.subr.bf16.mxu0 0
    %3748 = vmatpush1.bf16.msra.mxu0 %v3576
    %3749 = vmatprep.subr.bf16.mxu0 0
    %3750 = vmatpush1.bf16.msra.mxu0 %v3575
    %3751 = vmatprep.subr.bf16.mxu0 0
    %3752 = vmatpush1.bf16.msra.mxu0 %v3574
    %3753 = vmatprep.subr.bf16.mxu0 0
    %3754 = vmatpush1.bf16.msra.mxu0 %v3573
    %3755 = vmatprep.subr.bf16.mxu0 0
    %3756 = vmatpush1.bf16.msra.mxu0 %v3572
    %3757 = vmatprep.subr.bf16.mxu0 0
    %3758 = vmatpush1.bf16.msra.mxu0 %v3571
    %3759 = vmatprep.subr.bf16.mxu0 0
    %3760 = vmatpush1.bf16.msra.mxu0 %v3570
    %3761 = vmatprep.subr.bf16.mxu0 0
    %3762 = vmatpush1.bf16.msra.mxu0 %v3569
    %3763 = vmatprep.subr.bf16.mxu0 0
    %3764 = vmatpush2.bf16.msra.mxu0 %v3584
    %3765 = vmatprep.subr.bf16.mxu0 0
    %3766 = vmatpush2.bf16.msra.mxu0 %v3583
    %3767 = vmatprep.subr.bf16.mxu0 0
    %3768 = vmatpush2.bf16.msra.mxu0 %v3582
    %3769 = vmatprep.subr.bf16.mxu0 0
    %3770 = vmatpush2.bf16.msra.mxu0 %v3581
    %3771 = vmatprep.subr.bf16.mxu0 0
    %3772 = vmatpush2.bf16.msra.mxu0 %v3580
    %3773 = vmatprep.subr.bf16.mxu0 0
    %3774 = vmatpush2.bf16.msra.mxu0 %v3579
    %3775 = vmatprep.subr.bf16.mxu0 0
    %3776 = vmatpush2.bf16.msra.mxu0 %v3578
    %3777 = vmatprep.subr.bf16.mxu0 0
    %3778 = vmatpush2.bf16.msra.mxu0 %v3577
    %3779 = vmatprep.mubr.bf16.mxu0 %v3143
    %3780 = vmatmul.mubr.bf16.gmra.mxu0 %v3142
    %v3781 = vpop.f32.mrf.mxu0
    %v3782 = vadd.f32 %v3741, %v3781
    %v3783 = vpop.f32.mrf.mxu0
    %v3784 = vpop.f32.mrf.mxu0
    %v3785 = vadd.f32 %v3744, %v3784
    %v3786 = vpop.f32.mrf.mxu0
    %3787 = vdwg.mxu0
    %3788 = vmatprep.subr.bf16.mxu0 0
    %3789 = vmatpush1.bf16.msra.mxu0 %v3592
    %3790 = vmatprep.subr.bf16.mxu0 0
    %3791 = vmatpush1.bf16.msra.mxu0 %v3591
    %3792 = vmatprep.subr.bf16.mxu0 0
    %3793 = vmatpush1.bf16.msra.mxu0 %v3590
    %3794 = vmatprep.subr.bf16.mxu0 0
    %3795 = vmatpush1.bf16.msra.mxu0 %v3589
    %3796 = vmatprep.subr.bf16.mxu0 0
    %3797 = vmatpush1.bf16.msra.mxu0 %v3588
    %3798 = vmatprep.subr.bf16.mxu0 0
    %3799 = vmatpush1.bf16.msra.mxu0 %v3587
    %3800 = vmatprep.subr.bf16.mxu0 0
    %3801 = vmatpush1.bf16.msra.mxu0 %v3586
    %3802 = vmatprep.subr.bf16.mxu0 0
    %3803 = vmatpush1.bf16.msra.mxu0 %v3585
    %3804 = vmatprep.subr.bf16.mxu0 0
    %3805 = vmatpush2.bf16.msra.mxu0 %v3600
    %3806 = vmatprep.subr.bf16.mxu0 0
    %3807 = vmatpush2.bf16.msra.mxu0 %v3599
    %3808 = vmatprep.subr.bf16.mxu0 0
    %3809 = vmatpush2.bf16.msra.mxu0 %v3598
    %3810 = vmatprep.subr.bf16.mxu0 0
    %3811 = vmatpush2.bf16.msra.mxu0 %v3597
    %3812 = vmatprep.subr.bf16.mxu0 0
    %3813 = vmatpush2.bf16.msra.mxu0 %v3596
    %3814 = vmatprep.subr.bf16.mxu0 0
    %3815 = vmatpush2.bf16.msra.mxu0 %v3595
    %3816 = vmatprep.subr.bf16.mxu0 0
    %3817 = vmatpush2.bf16.msra.mxu0 %v3594
    %3818 = vmatprep.subr.bf16.mxu0 0
    %3819 = vmatpush2.bf16.msra.mxu0 %v3593
    %3820 = vmatprep.mubr.bf16.mxu0 %v3145
    %3821 = vmatmul.mubr.bf16.gmra.mxu0 %v3144
    %v3822 = vpop.f32.mrf.mxu0
    %v3823 = vadd.f32 %v3782, %v3822
    %v3824 = vpop.f32.mrf.mxu0
    %v3825 = vpop.f32.mrf.mxu0
    %v3826 = vadd.f32 %v3785, %v3825
    %v3827 = vpop.f32.mrf.mxu0
    %3828 = vdwg.mxu0
    %3829 = vmax.xlane.f32.xlu0 %v3823
    %v3830 = vpop.xlane.xlu0 %3829
    %3831 = vmax.xlane.f32.xlu0 %v3826
    %v3832 = vpop.xlane.xlu0 %3831
    %v3833 = vsub.f32 %v3823, %v3830
    %v3834 = vsub.f32 %v3826, %v3832
    %v3835 = vmul.f32 %v3833, 1.442695
    %v3836 = vpow.pop %v3835
    %v3837 = vmul.f32 %v3834, 1.442695
    %v3838 = vpow.pop %v3837
    %3839 = vadd.xlane.f32.xlu0 %v3836
    %v3840 = vpop.xlane.xlu0 %3839
    %3841 = vadd.xlane.f32.xlu0 %v3838
    %v3842 = vpop.xlane.xlu0 %3841
    %v3843 = vlog2.pop %v3840
    %v3844 = vmul.f32 %v3843, 0.6931472
    %v3845 = vlog2.pop %v3842
    %v3846 = vmul.f32 %v3845, 0.6931472
    %v3847 = vsub.f32 %v3833, %v3844
    %v3848 = vsub.f32 %v3834, %v3846
    %3849 = vst [vmem:[%s4] sm:$0xff] %v3847
    %3850 = vst [vmem:[%s4 + $0x8] sm:$0xff] %v3848
    // Predicated region
    $region30: #{ortho_tonn_forward.1} parent=1 // pred_check
      _
    $region31: #{ortho_tonn_forward.1} parent=1 // pred_check_branch
      %3852 = sbr.rel (0) target = $region33
    $region32: #{ortho_tonn_forward.1} parent=1 // pred_region
      _
    $region33: #{ortho_tonn_forward.1} parent=1 // pred_fallthru
      _
    // Predicated region
    $region34: #{ortho_tonn_forward.1} parent=1 // pred_check
      _
    $region35: #{ortho_tonn_forward.1} parent=1 // pred_check_branch
      %3854 = sbr.rel (0) target = $region37
    $region36: #{ortho_tonn_forward.1} parent=1 // pred_region
      _
    $region37: #{ortho_tonn_forward.1} parent=1 // pred_fallthru
      _
    %3855 = vsyncpa [#allocation3], 1
    %3856 = vsyncpa [#allocation5], 1

</llo_original>
